<compile_context>
chip_gen: v6e
topology: v6e:2x2x1
jax: 0.10.0
libtpu: 0.0.40
codegen_flags: <defaults>
</compile_context>

<pallas_src>
import functools

import jax
import jax.numpy as jnp
from jax import lax
from jax.experimental import pallas as pl
from jax.experimental.pallas import tpu as pltpu

BN_EPS = 1e-5
LEAKY_SLOPE = 0.01

# Set True on v6e/v7x to feed the one real matmul (stage 2, K=160) to the MXU in bf16
# with f32 accumulation (~2-3x MXU throughput, half the patch-matrix VMEM). Kept False
# here so the f32 reference check below stays within its 5e-3 tolerance.
STAGE2_BF16 = False


# ----------------------------- in-kernel helpers -----------------------------

def _shift_mask(y, d, pos, l_img):
    """y: (C, N*l_img) with N images concatenated on the lane axis; pos[0, l] = l % l_img.
    Returns z[c, l] = y[c, l + d] when lane l+d lies inside the same image as lane l,
    else 0 ('same' conv zero padding). One XLU roll + one VPU mask, independent of N."""
    nl = y.shape[1]
    s = (-d) % nl
    r = pltpu.roll(y, shift=s, axis=1) if s else y
    valid = jnp.logical_and(pos + d >= 0, pos + d < l_img)
    return jnp.where(valid, r, 0.0)


def _bn_act(y, gamma, beta, slope):
    """Training-mode BatchNorm1d over the (N*L) lane axis, then ReLU / LeakyReLU."""
    cnt = float(y.shape[1])
    mean = jnp.sum(y, axis=1, keepdims=True) / cnt
    cen = y - mean
    var = jnp.sum(cen * cen, axis=1, keepdims=True) / cnt    # centered: no cancellation
    z = cen * (gamma * lax.rsqrt(var + BN_EPS)) + beta
    if slope == 0.0:
        return jnp.maximum(z, 0.0)
    return jnp.where(z > 0, z, slope * z)


def _maxpool2(y, sel):
    """MaxPool1d(kernel=2, stride=2) along lanes: roll+max of neighbour lanes, then ONE
    even-lane compaction matmul with a precomputed 0/1 matrix (sel[2i, i] = 1)."""
    nl = y.shape[1]
    m = jnp.maximum(y, pltpu.roll(y, shift=nl - 1, axis=1))   # m[:, 2i] = max(y[2i], y[2i+1])
    return jnp.dot(m, sel, preferred_element_type=jnp.float32)


# --------------------------------- the kernel --------------------------------

def _cnn1_kernel(x_ref, pos1_ref, pos2_ref, pos4_ref, sel1_ref, sel2_ref,
                 w1_ref, g1_ref, be1_ref,
                 w2_ref, g2_ref, be2_ref,
                 w3_ref, g3_ref, be3_ref,
                 w4_ref, g4_ref, be4_ref,
                 out_ref, *, L):
    L2, L4 = L // 2, L // 4

    # ---- stage 1: 4 conv branches (k=3/5/7/9, C_in=1) folded into 9 VPU FMAs ----
    x_row = x_ref[...]                                       # (1, N*L)
    pos1 = pos1_ref[...]
    w1 = w1_ref[...]                                         # (32, 9), column t = tap t
    y = w1[:, 0:1] * _shift_mask(x_row, -4, pos1, L)
    for t in range(1, 9):
        y = y + w1[:, t:t + 1] * _shift_mask(x_row, t - 4, pos1, L)
    y = _bn_act(y, g1_ref[...], be1_ref[...], 0.0)           # (32, N*L)
    y = _maxpool2(y, sel1_ref[...])                          # (32, N*L2)

    # ---- stage 2: 2 conv branches (k=3/5, C_in=32) as ONE MXU matmul (K=160) ----
    pos2 = pos2_ref[...]
    patches = jnp.concatenate(
        [_shift_mask(y, t - 2, pos2, L2) for t in range(5)], axis=0)   # (160, N*L2)
    w2 = w2_ref[...]
    if STAGE2_BF16:
        y = jnp.dot(w2.astype(jnp.bfloat16), patches.astype(jnp.bfloat16),
                    preferred_element_type=jnp.float32)
    else:
        y = jnp.dot(w2, patches, preferred_element_type=jnp.float32)   # (32, N*L2)
    y = _bn_act(y, g2_ref[...], be2_ref[...], 0.0)
    y = _maxpool2(y, sel2_ref[...])                          # (32, N*L4)

    # ---- stage 3: Singleconv1d(32 -> 16), k=3, small MXU matmul (K=96) ----
    pos4 = pos4_ref[...]
    patches = jnp.concatenate(
        [_shift_mask(y, t - 1, pos4, L4) for t in range(3)], axis=0)   # (96, N*L4)
    y = jnp.dot(w3_ref[...], patches, preferred_element_type=jnp.float32)  # (16, N*L4)
    y = _bn_act(y, g3_ref[...], be3_ref[...], LEAKY_SLOPE)

    # ---- stage 4: Singleconv1d(16 -> 1), k=3: VPU FMAs + XLU sublane reduction ----
    w4 = w4_ref[...]                                         # (16, 3), column t = tap t
    acc = w4[:, 0:1] * _shift_mask(y, -1, pos4, L4)
    for t in range(1, 3):
        acc = acc + w4[:, t:t + 1] * _shift_mask(y, t - 1, pos4, L4)
    z = jnp.sum(acc, axis=0, keepdims=True)                  # (1, N*L4)
    z = _bn_act(z, g4_ref[...], be4_ref[...], LEAKY_SLOPE)

    out_ref[...] = z                                         # single lane-dense store


# --------------------------------- wrapper -----------------------------------

def _fold_branches(branches, c_in, k_max):
    """branches: list of (w (C_o, c_in, k_b), pad_b).  Returns (sum C_o, k_max*c_in):
    each branch's taps centered in the common k_max window, zero elsewhere, flattened so
    that row block t (size c_in) of the patch matrix multiplies tap t (tap-major,
    channel-minor), matching the in-kernel patch build."""
    p_max = (k_max - 1) // 2
    rows = []
    for w, pad in branches:
        c_o, _, k_b = w.shape
        wt = jnp.transpose(w, (0, 2, 1)).astype(jnp.float32)     # (C_o, k_b, c_in)
        full = jnp.zeros((c_o, k_max, c_in), jnp.float32)
        start = p_max - pad
        full = full.at[:, start:start + k_b, :].set(wt)
        rows.append(full)
    w_all = jnp.concatenate(rows, axis=0)                        # (sum C_o, k_max, c_in)
    return w_all.reshape(w_all.shape[0], k_max * c_in)


def _even_sel(n_in):
    """(n_in, n_in//2) f32 0/1 matrix selecting even lanes: sel[2i, i] = 1."""
    r = jnp.arange(n_in)[:, None]
    c = jnp.arange(n_in // 2)[None, :]
    return (r == 2 * c).astype(jnp.float32)


def _pos(n, l_img):
    """(1, n*l_img) int32 position-within-image of every lane."""
    return (jnp.arange(n * l_img, dtype=jnp.int32) % l_img).reshape(1, -1)


def _full_spec(shape):
    zeros = (0,) * len(shape)
    return pl.BlockSpec(tuple(shape), lambda i, _z=zeros: _z)


def cnn_1_forward(x, p):
    """x: (N, 1, L) f32, L divisible by 4.  p: dict of PyTorch-layout parameters.
    Returns (N, 1, L//4) f32, matching CNN_1.forward (training-mode BatchNorm)."""
    N, c_in, L = x.shape
    assert c_in == 1 and L % 4 == 0
    NL, L2, L4 = N * L, L // 2, L // 4

    w1 = _fold_branches([(p["w11"], 1), (p["w12"], 2), (p["w13"], 3), (p["w14"], 4)],
                        c_in=1, k_max=9)                          # (32, 9)
    w2 = _fold_branches([(p["w21"], 1), (p["w22"], 2)], c_in=32, k_max=5)  # (32, 160)
    w3 = _fold_branches([(p["wf1"], 1)], c_in=32, k_max=3)        # (16, 96)
    w4 = p["wf2"][0].astype(jnp.float32)                          # (16, 3): channel x tap

    def col(v):
        return v.reshape(-1, 1).astype(jnp.float32)

    # Conv biases are intentionally not passed: the training-mode BN that follows every
    # conv subtracts the batch mean, which cancels a per-channel bias exactly.
    args = [x.astype(jnp.float32).reshape(1, NL),                 # lane-dense input slab
            _pos(N, L), _pos(N, L2), _pos(N, L4),                 # image-boundary tables
            _even_sel(NL), _even_sel(NL // 2),                    # hoisted pool selectors
            w1, col(p["g1"]), col(p["be1"]),
            w2, col(p["g2"]), col(p["be2"]),
            w3, col(p["gf1"]), col(p["bef1"]),
            w4, col(p["gf2"]), col(p["bef2"])]

    kernel = functools.partial(_cnn1_kernel, L=L)

    out_flat = pl.pallas_call(
        kernel,
        out_shape=jax.ShapeDtypeStruct((1, N * L4), jnp.float32),
        grid_spec=pltpu.PrefetchScalarGridSpec(
            num_scalar_prefetch=0,
            grid=(1,),
            in_specs=[_full_spec(a.shape) for a in args],
            out_specs=pl.BlockSpec((1, N * L4), lambda i: (0, 0)),
        ),
        compiler_params=pltpu.CompilerParams(
            dimension_semantics=("arbitrary",),
            vmem_limit_bytes=32 * 1024 * 1024),
    )(*args)
    return out_flat.reshape(N, 1, L4)                             # free layout plumbing


# ------------------------------ pure-JAX reference ---------------------------

def _reference(x, p):
    def conv(a, w, b, pad):
        out = lax.conv_general_dilated(
            a, w, window_strides=(1,), padding=((pad, pad),),
            dimension_numbers=("NCH", "OIH", "NCH"))
        return out + b.reshape(1, -1, 1)

    def bn(a, g, be):
        mean = jnp.mean(a, axis=(0, 2), keepdims=True)
        var = jnp.mean((a - mean) ** 2, axis=(0, 2), keepdims=True)
        return (a - mean) * lax.rsqrt(var + BN_EPS) * g.reshape(1, -1, 1) + be.reshape(1, -1, 1)

    def pool(a):
        n, c, l = a.shape
        return jnp.max(a.reshape(n, c, l // 2, 2), axis=-1)

    def leaky(a):
        return jnp.where(a > 0, a, LEAKY_SLOPE * a)

    e = jnp.concatenate([conv(x, p["w11"], p["b11"], 1),
                         conv(x, p["w12"], p["b12"], 2),
                         conv(x, p["w13"], p["b13"], 3),
                         conv(x, p["w14"], p["b14"], 4)], axis=1)
    e = pool(jnp.maximum(bn(e, p["g1"], p["be1"]), 0.0))
    e = jnp.concatenate([conv(e, p["w21"], p["b21"], 1),
                         conv(e, p["w22"], p["b22"], 2)], axis=1)
    e = pool(jnp.maximum(bn(e, p["g2"], p["be2"]), 0.0))
    e = leaky(bn(conv(e, p["wf1"], p["bf1"], 1), p["gf1"], p["bef1"]))
    e = leaky(bn(conv(e, p["wf2"], p["bf2"], 1), p["gf2"], p["bef2"]))
    return e


# ----------------------------------- main ------------------------------------

if __name__ == "__main__":
    N, L = 4, 128    # N*L/4 = 128 lanes -> unmasked lane-dense output store

    keys = jax.random.split(jax.random.PRNGKey(0), 32)
    kit = iter(keys)

    def nrm(shape, scale=0.2):
        return scale * jax.random.normal(next(kit), shape, jnp.float32)

    p = dict(
        w11=nrm((8, 1, 3)), b11=nrm((8,), 0.1),
        w12=nrm((8, 1, 5)), b12=nrm((8,), 0.1),
        w13=nrm((8, 1, 7)), b13=nrm((8,), 0.1),
        w14=nrm((8, 1, 9)), b14=nrm((8,), 0.1),
        g1=1.0 + nrm((32,), 0.1), be1=nrm((32,), 0.1),
        w21=nrm((16, 32, 3)), b21=nrm((16,), 0.1),
        w22=nrm((16, 32, 5)), b22=nrm((16,), 0.1),
        g2=1.0 + nrm((32,), 0.1), be2=nrm((32,), 0.1),
        wf1=nrm((16, 32, 3)), bf1=nrm((16,), 0.1),
        gf1=1.0 + nrm((16,), 0.1), bef1=nrm((16,), 0.1),
        wf2=nrm((1, 16, 3)), bf2=nrm((1,), 0.1),
        gf2=1.0 + nrm((1,), 0.1), bef2=nrm((1,), 0.1),
    )
    x = jax.random.normal(keys[-1], (N, 1, L), jnp.float32)

    out = cnn_1_forward(x, p)
    out = jax.block_until_ready(out)

    ref = _reference(x, p)
    assert out.shape == (N, 1, L // 4)
    assert jnp.allclose(out, ref, atol=5e-3, rtol=5e-3), "mismatch vs reference"

    print("KERNEL_OK")
</pallas_src>

<mosaic_0001>
module attributes {stable_mosaic.version = 11 : i64} {
  func.func @_cnn1_kernel(%arg0: i32, %arg1: memref<1x512xf32, #tpu.memory_space<vmem>>, %arg2: memref<1x512xi32, #tpu.memory_space<vmem>>, %arg3: memref<1x256xi32, #tpu.memory_space<vmem>>, %arg4: memref<1x128xi32, #tpu.memory_space<vmem>>, %arg5: memref<512x256xf32, #tpu.memory_space<vmem>>, %arg6: memref<256x128xf32, #tpu.memory_space<vmem>>, %arg7: memref<32x9xf32, #tpu.memory_space<vmem>>, %arg8: memref<32x1xf32, #tpu.memory_space<vmem>>, %arg9: memref<32x1xf32, #tpu.memory_space<vmem>>, %arg10: memref<32x160xf32, #tpu.memory_space<vmem>>, %arg11: memref<32x1xf32, #tpu.memory_space<vmem>>, %arg12: memref<32x1xf32, #tpu.memory_space<vmem>>, %arg13: memref<16x96xf32, #tpu.memory_space<vmem>>, %arg14: memref<16x1xf32, #tpu.memory_space<vmem>>, %arg15: memref<16x1xf32, #tpu.memory_space<vmem>>, %arg16: memref<16x3xf32, #tpu.memory_space<vmem>>, %arg17: memref<1x1xf32, #tpu.memory_space<vmem>>, %arg18: memref<1x1xf32, #tpu.memory_space<vmem>>, %arg19: memref<1x128xf32, #tpu.memory_space<vmem>>) attributes {dimension_semantics = [#tpu.dimension_semantics<arbitrary>], iteration_bounds = array<i64: 1>, scalar_prefetch = 0 : i64, scratch_operands = 0 : i64, tpu.core_type = #tpu.core_type<tc>, window_params = [{pipeline_mode = #tpu.pipeline_mode<synchronous>, transform_indices = @transform_0, window_bounds = array<i64: 1, 512>}, {pipeline_mode = #tpu.pipeline_mode<synchronous>, transform_indices = @transform_1, window_bounds = array<i64: 1, 512>}, {pipeline_mode = #tpu.pipeline_mode<synchronous>, transform_indices = @transform_2, window_bounds = array<i64: 1, 256>}, {pipeline_mode = #tpu.pipeline_mode<synchronous>, transform_indices = @transform_3, window_bounds = array<i64: 1, 128>}, {pipeline_mode = #tpu.pipeline_mode<synchronous>, transform_indices = @transform_4, window_bounds = array<i64: 512, 256>}, {pipeline_mode = #tpu.pipeline_mode<synchronous>, transform_indices = @transform_5, window_bounds = array<i64: 256, 128>}, {pipeline_mode = #tpu.pipeline_mode<synchronous>, transform_indices = @transform_6, window_bounds = array<i64: 32, 9>}, {pipeline_mode = #tpu.pipeline_mode<synchronous>, transform_indices = @transform_7, window_bounds = array<i64: 32, 1>}, {pipeline_mode = #tpu.pipeline_mode<synchronous>, transform_indices = @transform_8, window_bounds = array<i64: 32, 1>}, {pipeline_mode = #tpu.pipeline_mode<synchronous>, transform_indices = @transform_9, window_bounds = array<i64: 32, 160>}, {pipeline_mode = #tpu.pipeline_mode<synchronous>, transform_indices = @transform_10, window_bounds = array<i64: 32, 1>}, {pipeline_mode = #tpu.pipeline_mode<synchronous>, transform_indices = @transform_11, window_bounds = array<i64: 32, 1>}, {pipeline_mode = #tpu.pipeline_mode<synchronous>, transform_indices = @transform_12, window_bounds = array<i64: 16, 96>}, {pipeline_mode = #tpu.pipeline_mode<synchronous>, transform_indices = @transform_13, window_bounds = array<i64: 16, 1>}, {pipeline_mode = #tpu.pipeline_mode<synchronous>, transform_indices = @transform_14, window_bounds = array<i64: 16, 1>}, {pipeline_mode = #tpu.pipeline_mode<synchronous>, transform_indices = @transform_15, window_bounds = array<i64: 16, 3>}, {pipeline_mode = #tpu.pipeline_mode<synchronous>, transform_indices = @transform_16, window_bounds = array<i64: 1, 1>}, {pipeline_mode = #tpu.pipeline_mode<synchronous>, transform_indices = @transform_17, window_bounds = array<i64: 1, 1>}, {pipeline_mode = #tpu.pipeline_mode<synchronous>, transform_indices = @transform_18, window_bounds = array<i64: 1, 128>}]} {
    %c0 = arith.constant 0 : index
    %c0_0 = arith.constant 0 : index
    %0 = vector.load %arg1[%c0, %c0_0] : memref<1x512xf32, #tpu.memory_space<vmem>>, vector<1x512xf32>
    %c0_1 = arith.constant 0 : index
    %c0_2 = arith.constant 0 : index
    %1 = vector.load %arg2[%c0_1, %c0_2] : memref<1x512xi32, #tpu.memory_space<vmem>>, vector<1x512xi32>
    %c0_3 = arith.constant 0 : index
    %c0_4 = arith.constant 0 : index
    %2 = vector.load %arg7[%c0_3, %c0_4] : memref<32x9xf32, #tpu.memory_space<vmem>>, vector<32x9xf32>
    %3 = vector.extract_strided_slice %2 {offsets = [0, 0], sizes = [32, 1], strides = [1, 1]} : vector<32x9xf32> to vector<32x1xf32>
    %c4_i32 = arith.constant 4 : i32
    %4 = tpu.dynamic_rotate %0 by %c4_i32 dim 1 : vector<1x512xf32>, i32 -> vector<1x512xf32>
    %c-4_i32 = arith.constant -4 : i32
    %5 = vector.broadcast %c-4_i32 : i32 to vector<1x512xi32>
    %6 = arith.addi %1, %5 : vector<1x512xi32>
    %c0_i32 = arith.constant 0 : i32
    %7 = vector.broadcast %c0_i32 : i32 to vector<1x512xi32>
    %8 = arith.cmpi sge, %6, %7 : vector<1x512xi32>
    %c-4_i32_5 = arith.constant -4 : i32
    %9 = vector.broadcast %c-4_i32_5 : i32 to vector<1x512xi32>
    %10 = arith.addi %1, %9 : vector<1x512xi32>
    %c128_i32 = arith.constant 128 : i32
    %11 = vector.broadcast %c128_i32 : i32 to vector<1x512xi32>
    %12 = arith.cmpi slt, %10, %11 : vector<1x512xi32>
    %13 = arith.andi %8, %12 : vector<1x512xi1>
    %cst = arith.constant 0.000000e+00 : f32
    %14 = vector.broadcast %cst : f32 to vector<1x512xf32>
    %15 = arith.select %13, %4, %14 : vector<1x512xi1>, vector<1x512xf32>
    %16 = vector.broadcast %3 : vector<32x1xf32> to vector<32x512xf32>
    %17 = vector.broadcast %15 : vector<1x512xf32> to vector<32x512xf32>
    %18 = arith.mulf %16, %17 : vector<32x512xf32>
    %19 = vector.extract_strided_slice %2 {offsets = [0, 1], sizes = [32, 1], strides = [1, 1]} : vector<32x9xf32> to vector<32x1xf32>
    %c3_i32 = arith.constant 3 : i32
    %20 = tpu.dynamic_rotate %0 by %c3_i32 dim 1 : vector<1x512xf32>, i32 -> vector<1x512xf32>
    %c-3_i32 = arith.constant -3 : i32
    %21 = vector.broadcast %c-3_i32 : i32 to vector<1x512xi32>
    %22 = arith.addi %1, %21 : vector<1x512xi32>
    %c0_i32_6 = arith.constant 0 : i32
    %23 = vector.broadcast %c0_i32_6 : i32 to vector<1x512xi32>
    %24 = arith.cmpi sge, %22, %23 : vector<1x512xi32>
    %c-3_i32_7 = arith.constant -3 : i32
    %25 = vector.broadcast %c-3_i32_7 : i32 to vector<1x512xi32>
    %26 = arith.addi %1, %25 : vector<1x512xi32>
    %c128_i32_8 = arith.constant 128 : i32
    %27 = vector.broadcast %c128_i32_8 : i32 to vector<1x512xi32>
    %28 = arith.cmpi slt, %26, %27 : vector<1x512xi32>
    %29 = arith.andi %24, %28 : vector<1x512xi1>
    %cst_9 = arith.constant 0.000000e+00 : f32
    %30 = vector.broadcast %cst_9 : f32 to vector<1x512xf32>
    %31 = arith.select %29, %20, %30 : vector<1x512xi1>, vector<1x512xf32>
    %32 = vector.broadcast %19 : vector<32x1xf32> to vector<32x512xf32>
    %33 = vector.broadcast %31 : vector<1x512xf32> to vector<32x512xf32>
    %34 = arith.mulf %32, %33 : vector<32x512xf32>
    %35 = arith.addf %18, %34 : vector<32x512xf32>
    %36 = vector.extract_strided_slice %2 {offsets = [0, 2], sizes = [32, 1], strides = [1, 1]} : vector<32x9xf32> to vector<32x1xf32>
    %c2_i32 = arith.constant 2 : i32
    %37 = tpu.dynamic_rotate %0 by %c2_i32 dim 1 : vector<1x512xf32>, i32 -> vector<1x512xf32>
    %c-2_i32 = arith.constant -2 : i32
    %38 = vector.broadcast %c-2_i32 : i32 to vector<1x512xi32>
    %39 = arith.addi %1, %38 : vector<1x512xi32>
    %c0_i32_10 = arith.constant 0 : i32
    %40 = vector.broadcast %c0_i32_10 : i32 to vector<1x512xi32>
    %41 = arith.cmpi sge, %39, %40 : vector<1x512xi32>
    %c-2_i32_11 = arith.constant -2 : i32
    %42 = vector.broadcast %c-2_i32_11 : i32 to vector<1x512xi32>
    %43 = arith.addi %1, %42 : vector<1x512xi32>
    %c128_i32_12 = arith.constant 128 : i32
    %44 = vector.broadcast %c128_i32_12 : i32 to vector<1x512xi32>
    %45 = arith.cmpi slt, %43, %44 : vector<1x512xi32>
    %46 = arith.andi %41, %45 : vector<1x512xi1>
    %cst_13 = arith.constant 0.000000e+00 : f32
    %47 = vector.broadcast %cst_13 : f32 to vector<1x512xf32>
    %48 = arith.select %46, %37, %47 : vector<1x512xi1>, vector<1x512xf32>
    %49 = vector.broadcast %36 : vector<32x1xf32> to vector<32x512xf32>
    %50 = vector.broadcast %48 : vector<1x512xf32> to vector<32x512xf32>
    %51 = arith.mulf %49, %50 : vector<32x512xf32>
    %52 = arith.addf %35, %51 : vector<32x512xf32>
    %53 = vector.extract_strided_slice %2 {offsets = [0, 3], sizes = [32, 1], strides = [1, 1]} : vector<32x9xf32> to vector<32x1xf32>
    %c1_i32 = arith.constant 1 : i32
    %54 = tpu.dynamic_rotate %0 by %c1_i32 dim 1 : vector<1x512xf32>, i32 -> vector<1x512xf32>
    %c-1_i32 = arith.constant -1 : i32
    %55 = vector.broadcast %c-1_i32 : i32 to vector<1x512xi32>
    %56 = arith.addi %1, %55 : vector<1x512xi32>
    %c0_i32_14 = arith.constant 0 : i32
    %57 = vector.broadcast %c0_i32_14 : i32 to vector<1x512xi32>
    %58 = arith.cmpi sge, %56, %57 : vector<1x512xi32>
    %c-1_i32_15 = arith.constant -1 : i32
    %59 = vector.broadcast %c-1_i32_15 : i32 to vector<1x512xi32>
    %60 = arith.addi %1, %59 : vector<1x512xi32>
    %c128_i32_16 = arith.constant 128 : i32
    %61 = vector.broadcast %c128_i32_16 : i32 to vector<1x512xi32>
    %62 = arith.cmpi slt, %60, %61 : vector<1x512xi32>
    %63 = arith.andi %58, %62 : vector<1x512xi1>
    %cst_17 = arith.constant 0.000000e+00 : f32
    %64 = vector.broadcast %cst_17 : f32 to vector<1x512xf32>
    %65 = arith.select %63, %54, %64 : vector<1x512xi1>, vector<1x512xf32>
    %66 = vector.broadcast %53 : vector<32x1xf32> to vector<32x512xf32>
    %67 = vector.broadcast %65 : vector<1x512xf32> to vector<32x512xf32>
    %68 = arith.mulf %66, %67 : vector<32x512xf32>
    %69 = arith.addf %52, %68 : vector<32x512xf32>
    %70 = vector.extract_strided_slice %2 {offsets = [0, 4], sizes = [32, 1], strides = [1, 1]} : vector<32x9xf32> to vector<32x1xf32>
    %c0_i32_18 = arith.constant 0 : i32
    %71 = vector.broadcast %c0_i32_18 : i32 to vector<1x512xi32>
    %72 = arith.addi %1, %71 : vector<1x512xi32>
    %c0_i32_19 = arith.constant 0 : i32
    %73 = vector.broadcast %c0_i32_19 : i32 to vector<1x512xi32>
    %74 = arith.cmpi sge, %72, %73 : vector<1x512xi32>
    %c0_i32_20 = arith.constant 0 : i32
    %75 = vector.broadcast %c0_i32_20 : i32 to vector<1x512xi32>
    %76 = arith.addi %1, %75 : vector<1x512xi32>
    %c128_i32_21 = arith.constant 128 : i32
    %77 = vector.broadcast %c128_i32_21 : i32 to vector<1x512xi32>
    %78 = arith.cmpi slt, %76, %77 : vector<1x512xi32>
    %79 = arith.andi %74, %78 : vector<1x512xi1>
    %cst_22 = arith.constant 0.000000e+00 : f32
    %80 = vector.broadcast %cst_22 : f32 to vector<1x512xf32>
    %81 = arith.select %79, %0, %80 : vector<1x512xi1>, vector<1x512xf32>
    %82 = vector.broadcast %70 : vector<32x1xf32> to vector<32x512xf32>
    %83 = vector.broadcast %81 : vector<1x512xf32> to vector<32x512xf32>
    %84 = arith.mulf %82, %83 : vector<32x512xf32>
    %85 = arith.addf %69, %84 : vector<32x512xf32>
    %86 = vector.extract_strided_slice %2 {offsets = [0, 5], sizes = [32, 1], strides = [1, 1]} : vector<32x9xf32> to vector<32x1xf32>
    %c511_i32 = arith.constant 511 : i32
    %87 = tpu.dynamic_rotate %0 by %c511_i32 dim 1 : vector<1x512xf32>, i32 -> vector<1x512xf32>
    %c1_i32_23 = arith.constant 1 : i32
    %88 = vector.broadcast %c1_i32_23 : i32 to vector<1x512xi32>
    %89 = arith.addi %1, %88 : vector<1x512xi32>
    %c0_i32_24 = arith.constant 0 : i32
    %90 = vector.broadcast %c0_i32_24 : i32 to vector<1x512xi32>
    %91 = arith.cmpi sge, %89, %90 : vector<1x512xi32>
    %c1_i32_25 = arith.constant 1 : i32
    %92 = vector.broadcast %c1_i32_25 : i32 to vector<1x512xi32>
    %93 = arith.addi %1, %92 : vector<1x512xi32>
    %c128_i32_26 = arith.constant 128 : i32
    %94 = vector.broadcast %c128_i32_26 : i32 to vector<1x512xi32>
    %95 = arith.cmpi slt, %93, %94 : vector<1x512xi32>
    %96 = arith.andi %91, %95 : vector<1x512xi1>
    %cst_27 = arith.constant 0.000000e+00 : f32
    %97 = vector.broadcast %cst_27 : f32 to vector<1x512xf32>
    %98 = arith.select %96, %87, %97 : vector<1x512xi1>, vector<1x512xf32>
    %99 = vector.broadcast %86 : vector<32x1xf32> to vector<32x512xf32>
    %100 = vector.broadcast %98 : vector<1x512xf32> to vector<32x512xf32>
    %101 = arith.mulf %99, %100 : vector<32x512xf32>
    %102 = arith.addf %85, %101 : vector<32x512xf32>
    %103 = vector.extract_strided_slice %2 {offsets = [0, 6], sizes = [32, 1], strides = [1, 1]} : vector<32x9xf32> to vector<32x1xf32>
    %c510_i32 = arith.constant 510 : i32
    %104 = tpu.dynamic_rotate %0 by %c510_i32 dim 1 : vector<1x512xf32>, i32 -> vector<1x512xf32>
    %c2_i32_28 = arith.constant 2 : i32
    %105 = vector.broadcast %c2_i32_28 : i32 to vector<1x512xi32>
    %106 = arith.addi %1, %105 : vector<1x512xi32>
    %c0_i32_29 = arith.constant 0 : i32
    %107 = vector.broadcast %c0_i32_29 : i32 to vector<1x512xi32>
    %108 = arith.cmpi sge, %106, %107 : vector<1x512xi32>
    %c2_i32_30 = arith.constant 2 : i32
    %109 = vector.broadcast %c2_i32_30 : i32 to vector<1x512xi32>
    %110 = arith.addi %1, %109 : vector<1x512xi32>
    %c128_i32_31 = arith.constant 128 : i32
    %111 = vector.broadcast %c128_i32_31 : i32 to vector<1x512xi32>
    %112 = arith.cmpi slt, %110, %111 : vector<1x512xi32>
    %113 = arith.andi %108, %112 : vector<1x512xi1>
    %cst_32 = arith.constant 0.000000e+00 : f32
    %114 = vector.broadcast %cst_32 : f32 to vector<1x512xf32>
    %115 = arith.select %113, %104, %114 : vector<1x512xi1>, vector<1x512xf32>
    %116 = vector.broadcast %103 : vector<32x1xf32> to vector<32x512xf32>
    %117 = vector.broadcast %115 : vector<1x512xf32> to vector<32x512xf32>
    %118 = arith.mulf %116, %117 : vector<32x512xf32>
    %119 = arith.addf %102, %118 : vector<32x512xf32>
    %120 = vector.extract_strided_slice %2 {offsets = [0, 7], sizes = [32, 1], strides = [1, 1]} : vector<32x9xf32> to vector<32x1xf32>
    %c509_i32 = arith.constant 509 : i32
    %121 = tpu.dynamic_rotate %0 by %c509_i32 dim 1 : vector<1x512xf32>, i32 -> vector<1x512xf32>
    %c3_i32_33 = arith.constant 3 : i32
    %122 = vector.broadcast %c3_i32_33 : i32 to vector<1x512xi32>
    %123 = arith.addi %1, %122 : vector<1x512xi32>
    %c0_i32_34 = arith.constant 0 : i32
    %124 = vector.broadcast %c0_i32_34 : i32 to vector<1x512xi32>
    %125 = arith.cmpi sge, %123, %124 : vector<1x512xi32>
    %c3_i32_35 = arith.constant 3 : i32
    %126 = vector.broadcast %c3_i32_35 : i32 to vector<1x512xi32>
    %127 = arith.addi %1, %126 : vector<1x512xi32>
    %c128_i32_36 = arith.constant 128 : i32
    %128 = vector.broadcast %c128_i32_36 : i32 to vector<1x512xi32>
    %129 = arith.cmpi slt, %127, %128 : vector<1x512xi32>
    %130 = arith.andi %125, %129 : vector<1x512xi1>
    %cst_37 = arith.constant 0.000000e+00 : f32
    %131 = vector.broadcast %cst_37 : f32 to vector<1x512xf32>
    %132 = arith.select %130, %121, %131 : vector<1x512xi1>, vector<1x512xf32>
    %133 = vector.broadcast %120 : vector<32x1xf32> to vector<32x512xf32>
    %134 = vector.broadcast %132 : vector<1x512xf32> to vector<32x512xf32>
    %135 = arith.mulf %133, %134 : vector<32x512xf32>
    %136 = arith.addf %119, %135 : vector<32x512xf32>
    %137 = vector.extract_strided_slice %2 {offsets = [0, 8], sizes = [32, 1], strides = [1, 1]} : vector<32x9xf32> to vector<32x1xf32>
    %c508_i32 = arith.constant 508 : i32
    %138 = tpu.dynamic_rotate %0 by %c508_i32 dim 1 : vector<1x512xf32>, i32 -> vector<1x512xf32>
    %c4_i32_38 = arith.constant 4 : i32
    %139 = vector.broadcast %c4_i32_38 : i32 to vector<1x512xi32>
    %140 = arith.addi %1, %139 : vector<1x512xi32>
    %c0_i32_39 = arith.constant 0 : i32
    %141 = vector.broadcast %c0_i32_39 : i32 to vector<1x512xi32>
    %142 = arith.cmpi sge, %140, %141 : vector<1x512xi32>
    %c4_i32_40 = arith.constant 4 : i32
    %143 = vector.broadcast %c4_i32_40 : i32 to vector<1x512xi32>
    %144 = arith.addi %1, %143 : vector<1x512xi32>
    %c128_i32_41 = arith.constant 128 : i32
    %145 = vector.broadcast %c128_i32_41 : i32 to vector<1x512xi32>
    %146 = arith.cmpi slt, %144, %145 : vector<1x512xi32>
    %147 = arith.andi %142, %146 : vector<1x512xi1>
    %cst_42 = arith.constant 0.000000e+00 : f32
    %148 = vector.broadcast %cst_42 : f32 to vector<1x512xf32>
    %149 = arith.select %147, %138, %148 : vector<1x512xi1>, vector<1x512xf32>
    %150 = vector.broadcast %137 : vector<32x1xf32> to vector<32x512xf32>
    %151 = vector.broadcast %149 : vector<1x512xf32> to vector<32x512xf32>
    %152 = arith.mulf %150, %151 : vector<32x512xf32>
    %153 = arith.addf %136, %152 : vector<32x512xf32>
    %c0_43 = arith.constant 0 : index
    %c0_44 = arith.constant 0 : index
    %154 = vector.load %arg8[%c0_43, %c0_44] : memref<32x1xf32, #tpu.memory_space<vmem>>, vector<32x1xf32>
    %c0_45 = arith.constant 0 : index
    %c0_46 = arith.constant 0 : index
    %155 = vector.load %arg9[%c0_45, %c0_46] : memref<32x1xf32, #tpu.memory_space<vmem>>, vector<32x1xf32>
    %cst_47 = arith.constant dense<0.000000e+00> : vector<32xf32>
    %156 = vector.multi_reduction <add>, %153, %cst_47 [1] : vector<32x512xf32> to vector<32xf32>
    %157 = vector.shape_cast %156 : vector<32xf32> to vector<32x1xf32>
    %cst_48 = arith.constant 5.120000e+02 : f32
    %158 = vector.broadcast %cst_48 : f32 to vector<32x1xf32>
    %159 = arith.divf %157, %158 : vector<32x1xf32>
    %160 = vector.broadcast %159 : vector<32x1xf32> to vector<32x512xf32>
    %161 = arith.subf %153, %160 : vector<32x512xf32>
    %162 = arith.mulf %161, %161 : vector<32x512xf32>
    %cst_49 = arith.constant dense<0.000000e+00> : vector<32xf32>
    %163 = vector.multi_reduction <add>, %162, %cst_49 [1] : vector<32x512xf32> to vector<32xf32>
    %164 = vector.shape_cast %163 : vector<32xf32> to vector<32x1xf32>
    %cst_50 = arith.constant 5.120000e+02 : f32
    %165 = vector.broadcast %cst_50 : f32 to vector<32x1xf32>
    %166 = arith.divf %164, %165 : vector<32x1xf32>
    %cst_51 = arith.constant 9.99999974E-6 : f32
    %167 = vector.broadcast %cst_51 : f32 to vector<32x1xf32>
    %168 = arith.addf %166, %167 : vector<32x1xf32>
    %169 = math.rsqrt %168 : vector<32x1xf32>
    %170 = arith.mulf %154, %169 : vector<32x1xf32>
    %171 = vector.broadcast %170 : vector<32x1xf32> to vector<32x512xf32>
    %172 = arith.mulf %161, %171 : vector<32x512xf32>
    %173 = vector.broadcast %155 : vector<32x1xf32> to vector<32x512xf32>
    %174 = arith.addf %172, %173 : vector<32x512xf32>
    %cst_52 = arith.constant 0.000000e+00 : f32
    %175 = vector.broadcast %cst_52 : f32 to vector<32x512xf32>
    %176 = arith.maximumf %174, %175 : vector<32x512xf32>
    %c0_53 = arith.constant 0 : index
    %c0_54 = arith.constant 0 : index
    %177 = vector.load %arg5[%c0_53, %c0_54] : memref<512x256xf32, #tpu.memory_space<vmem>>, vector<512x256xf32>
    %c511_i32_55 = arith.constant 511 : i32
    %178 = tpu.dynamic_rotate %176 by %c511_i32_55 dim 1 : vector<32x512xf32>, i32 -> vector<32x512xf32>
    %179 = arith.maximumf %176, %178 : vector<32x512xf32>
    %cst_56 = arith.constant dense<0.000000e+00> : vector<32x256xf32>
    %180 = tpu.matmul %179, %177, %cst_56 {dimension_numbers = #tpu.dot_dimension_numbers<[1], [0], [0], [1], [0, 0, 1, 1], [], []>} : vector<32x512xf32>, vector<512x256xf32>, vector<32x256xf32> -> vector<32x256xf32>
    %c0_57 = arith.constant 0 : index
    %c0_58 = arith.constant 0 : index
    %181 = vector.load %arg3[%c0_57, %c0_58] : memref<1x256xi32, #tpu.memory_space<vmem>>, vector<1x256xi32>
    %c2_i32_59 = arith.constant 2 : i32
    %182 = tpu.dynamic_rotate %180 by %c2_i32_59 dim 1 : vector<32x256xf32>, i32 -> vector<32x256xf32>
    %c-2_i32_60 = arith.constant -2 : i32
    %183 = vector.broadcast %c-2_i32_60 : i32 to vector<1x256xi32>
    %184 = arith.addi %181, %183 : vector<1x256xi32>
    %c0_i32_61 = arith.constant 0 : i32
    %185 = vector.broadcast %c0_i32_61 : i32 to vector<1x256xi32>
    %186 = arith.cmpi sge, %184, %185 : vector<1x256xi32>
    %c-2_i32_62 = arith.constant -2 : i32
    %187 = vector.broadcast %c-2_i32_62 : i32 to vector<1x256xi32>
    %188 = arith.addi %181, %187 : vector<1x256xi32>
    %c64_i32 = arith.constant 64 : i32
    %189 = vector.broadcast %c64_i32 : i32 to vector<1x256xi32>
    %190 = arith.cmpi slt, %188, %189 : vector<1x256xi32>
    %191 = arith.andi %186, %190 : vector<1x256xi1>
    %cst_63 = arith.constant 0.000000e+00 : f32
    %192 = vector.shape_cast %191 : vector<1x256xi1> to vector<1x256xi1>
    %193 = vector.broadcast %192 : vector<1x256xi1> to vector<32x256xi1>
    %194 = vector.broadcast %cst_63 : f32 to vector<32x256xf32>
    %195 = arith.select %193, %182, %194 : vector<32x256xi1>, vector<32x256xf32>
    %c1_i32_64 = arith.constant 1 : i32
    %196 = tpu.dynamic_rotate %180 by %c1_i32_64 dim 1 : vector<32x256xf32>, i32 -> vector<32x256xf32>
    %c-1_i32_65 = arith.constant -1 : i32
    %197 = vector.broadcast %c-1_i32_65 : i32 to vector<1x256xi32>
    %198 = arith.addi %181, %197 : vector<1x256xi32>
    %c0_i32_66 = arith.constant 0 : i32
    %199 = vector.broadcast %c0_i32_66 : i32 to vector<1x256xi32>
    %200 = arith.cmpi sge, %198, %199 : vector<1x256xi32>
    %c-1_i32_67 = arith.constant -1 : i32
    %201 = vector.broadcast %c-1_i32_67 : i32 to vector<1x256xi32>
    %202 = arith.addi %181, %201 : vector<1x256xi32>
    %c64_i32_68 = arith.constant 64 : i32
    %203 = vector.broadcast %c64_i32_68 : i32 to vector<1x256xi32>
    %204 = arith.cmpi slt, %202, %203 : vector<1x256xi32>
    %205 = arith.andi %200, %204 : vector<1x256xi1>
    %cst_69 = arith.constant 0.000000e+00 : f32
    %206 = vector.shape_cast %205 : vector<1x256xi1> to vector<1x256xi1>
    %207 = vector.broadcast %206 : vector<1x256xi1> to vector<32x256xi1>
    %208 = vector.broadcast %cst_69 : f32 to vector<32x256xf32>
    %209 = arith.select %207, %196, %208 : vector<32x256xi1>, vector<32x256xf32>
    %c0_i32_70 = arith.constant 0 : i32
    %210 = vector.broadcast %c0_i32_70 : i32 to vector<1x256xi32>
    %211 = arith.addi %181, %210 : vector<1x256xi32>
    %c0_i32_71 = arith.constant 0 : i32
    %212 = vector.broadcast %c0_i32_71 : i32 to vector<1x256xi32>
    %213 = arith.cmpi sge, %211, %212 : vector<1x256xi32>
    %c0_i32_72 = arith.constant 0 : i32
    %214 = vector.broadcast %c0_i32_72 : i32 to vector<1x256xi32>
    %215 = arith.addi %181, %214 : vector<1x256xi32>
    %c64_i32_73 = arith.constant 64 : i32
    %216 = vector.broadcast %c64_i32_73 : i32 to vector<1x256xi32>
    %217 = arith.cmpi slt, %215, %216 : vector<1x256xi32>
    %218 = arith.andi %213, %217 : vector<1x256xi1>
    %cst_74 = arith.constant 0.000000e+00 : f32
    %219 = vector.shape_cast %218 : vector<1x256xi1> to vector<1x256xi1>
    %220 = vector.broadcast %219 : vector<1x256xi1> to vector<32x256xi1>
    %221 = vector.broadcast %cst_74 : f32 to vector<32x256xf32>
    %222 = arith.select %220, %180, %221 : vector<32x256xi1>, vector<32x256xf32>
    %c255_i32 = arith.constant 255 : i32
    %223 = tpu.dynamic_rotate %180 by %c255_i32 dim 1 : vector<32x256xf32>, i32 -> vector<32x256xf32>
    %c1_i32_75 = arith.constant 1 : i32
    %224 = vector.broadcast %c1_i32_75 : i32 to vector<1x256xi32>
    %225 = arith.addi %181, %224 : vector<1x256xi32>
    %c0_i32_76 = arith.constant 0 : i32
    %226 = vector.broadcast %c0_i32_76 : i32 to vector<1x256xi32>
    %227 = arith.cmpi sge, %225, %226 : vector<1x256xi32>
    %c1_i32_77 = arith.constant 1 : i32
    %228 = vector.broadcast %c1_i32_77 : i32 to vector<1x256xi32>
    %229 = arith.addi %181, %228 : vector<1x256xi32>
    %c64_i32_78 = arith.constant 64 : i32
    %230 = vector.broadcast %c64_i32_78 : i32 to vector<1x256xi32>
    %231 = arith.cmpi slt, %229, %230 : vector<1x256xi32>
    %232 = arith.andi %227, %231 : vector<1x256xi1>
    %cst_79 = arith.constant 0.000000e+00 : f32
    %233 = vector.shape_cast %232 : vector<1x256xi1> to vector<1x256xi1>
    %234 = vector.broadcast %233 : vector<1x256xi1> to vector<32x256xi1>
    %235 = vector.broadcast %cst_79 : f32 to vector<32x256xf32>
    %236 = arith.select %234, %223, %235 : vector<32x256xi1>, vector<32x256xf32>
    %c254_i32 = arith.constant 254 : i32
    %237 = tpu.dynamic_rotate %180 by %c254_i32 dim 1 : vector<32x256xf32>, i32 -> vector<32x256xf32>
    %c2_i32_80 = arith.constant 2 : i32
    %238 = vector.broadcast %c2_i32_80 : i32 to vector<1x256xi32>
    %239 = arith.addi %181, %238 : vector<1x256xi32>
    %c0_i32_81 = arith.constant 0 : i32
    %240 = vector.broadcast %c0_i32_81 : i32 to vector<1x256xi32>
    %241 = arith.cmpi sge, %239, %240 : vector<1x256xi32>
    %c2_i32_82 = arith.constant 2 : i32
    %242 = vector.broadcast %c2_i32_82 : i32 to vector<1x256xi32>
    %243 = arith.addi %181, %242 : vector<1x256xi32>
    %c64_i32_83 = arith.constant 64 : i32
    %244 = vector.broadcast %c64_i32_83 : i32 to vector<1x256xi32>
    %245 = arith.cmpi slt, %243, %244 : vector<1x256xi32>
    %246 = arith.andi %241, %245 : vector<1x256xi1>
    %cst_84 = arith.constant 0.000000e+00 : f32
    %247 = vector.shape_cast %246 : vector<1x256xi1> to vector<1x256xi1>
    %248 = vector.broadcast %247 : vector<1x256xi1> to vector<32x256xi1>
    %249 = vector.broadcast %cst_84 : f32 to vector<32x256xf32>
    %250 = arith.select %248, %237, %249 : vector<32x256xi1>, vector<32x256xf32>
    %251 = tpu.concatenate %195, %209, %222, %236, %250 in 0 : vector<32x256xf32>, vector<32x256xf32>, vector<32x256xf32>, vector<32x256xf32>, vector<32x256xf32> -> vector<160x256xf32>
    %c0_85 = arith.constant 0 : index
    %c0_86 = arith.constant 0 : index
    %252 = vector.load %arg10[%c0_85, %c0_86] : memref<32x160xf32, #tpu.memory_space<vmem>>, vector<32x160xf32>
    %cst_87 = arith.constant dense<0.000000e+00> : vector<32x256xf32>
    %253 = tpu.matmul %252, %251, %cst_87 {dimension_numbers = #tpu.dot_dimension_numbers<[1], [0], [0], [1], [0, 0, 1, 1], [], []>} : vector<32x160xf32>, vector<160x256xf32>, vector<32x256xf32> -> vector<32x256xf32>
    %c0_88 = arith.constant 0 : index
    %c0_89 = arith.constant 0 : index
    %254 = vector.load %arg11[%c0_88, %c0_89] : memref<32x1xf32, #tpu.memory_space<vmem>>, vector<32x1xf32>
    %c0_90 = arith.constant 0 : index
    %c0_91 = arith.constant 0 : index
    %255 = vector.load %arg12[%c0_90, %c0_91] : memref<32x1xf32, #tpu.memory_space<vmem>>, vector<32x1xf32>
    %cst_92 = arith.constant dense<0.000000e+00> : vector<32xf32>
    %256 = vector.multi_reduction <add>, %253, %cst_92 [1] : vector<32x256xf32> to vector<32xf32>
    %257 = vector.shape_cast %256 : vector<32xf32> to vector<32x1xf32>
    %cst_93 = arith.constant 2.560000e+02 : f32
    %258 = vector.broadcast %cst_93 : f32 to vector<32x1xf32>
    %259 = arith.divf %257, %258 : vector<32x1xf32>
    %260 = vector.broadcast %259 : vector<32x1xf32> to vector<32x256xf32>
    %261 = arith.subf %253, %260 : vector<32x256xf32>
    %262 = arith.mulf %261, %261 : vector<32x256xf32>
    %cst_94 = arith.constant dense<0.000000e+00> : vector<32xf32>
    %263 = vector.multi_reduction <add>, %262, %cst_94 [1] : vector<32x256xf32> to vector<32xf32>
    %264 = vector.shape_cast %263 : vector<32xf32> to vector<32x1xf32>
    %cst_95 = arith.constant 2.560000e+02 : f32
    %265 = vector.broadcast %cst_95 : f32 to vector<32x1xf32>
    %266 = arith.divf %264, %265 : vector<32x1xf32>
    %cst_96 = arith.constant 9.99999974E-6 : f32
    %267 = vector.broadcast %cst_96 : f32 to vector<32x1xf32>
    %268 = arith.addf %266, %267 : vector<32x1xf32>
    %269 = math.rsqrt %268 : vector<32x1xf32>
    %270 = arith.mulf %254, %269 : vector<32x1xf32>
    %271 = vector.broadcast %270 : vector<32x1xf32> to vector<32x256xf32>
    %272 = arith.mulf %261, %271 : vector<32x256xf32>
    %273 = vector.broadcast %255 : vector<32x1xf32> to vector<32x256xf32>
    %274 = arith.addf %272, %273 : vector<32x256xf32>
    %cst_97 = arith.constant 0.000000e+00 : f32
    %275 = vector.broadcast %cst_97 : f32 to vector<32x256xf32>
    %276 = arith.maximumf %274, %275 : vector<32x256xf32>
    %c0_98 = arith.constant 0 : index
    %c0_99 = arith.constant 0 : index
    %277 = vector.load %arg6[%c0_98, %c0_99] : memref<256x128xf32, #tpu.memory_space<vmem>>, vector<256x128xf32>
    %c255_i32_100 = arith.constant 255 : i32
    %278 = tpu.dynamic_rotate %276 by %c255_i32_100 dim 1 : vector<32x256xf32>, i32 -> vector<32x256xf32>
    %279 = arith.maximumf %276, %278 : vector<32x256xf32>
    %cst_101 = arith.constant dense<0.000000e+00> : vector<32x128xf32>
    %280 = tpu.matmul %279, %277, %cst_101 {dimension_numbers = #tpu.dot_dimension_numbers<[1], [0], [0], [1], [0, 0, 1, 1], [], []>} : vector<32x256xf32>, vector<256x128xf32>, vector<32x128xf32> -> vector<32x128xf32>
    %c0_102 = arith.constant 0 : index
    %c0_103 = arith.constant 0 : index
    %281 = vector.load %arg4[%c0_102, %c0_103] : memref<1x128xi32, #tpu.memory_space<vmem>>, vector<1x128xi32>
    %c1_i32_104 = arith.constant 1 : i32
    %282 = tpu.dynamic_rotate %280 by %c1_i32_104 dim 1 : vector<32x128xf32>, i32 -> vector<32x128xf32>
    %c-1_i32_105 = arith.constant -1 : i32
    %283 = vector.broadcast %c-1_i32_105 : i32 to vector<1x128xi32>
    %284 = arith.addi %281, %283 : vector<1x128xi32>
    %c0_i32_106 = arith.constant 0 : i32
    %285 = vector.broadcast %c0_i32_106 : i32 to vector<1x128xi32>
    %286 = arith.cmpi sge, %284, %285 : vector<1x128xi32>
    %c-1_i32_107 = arith.constant -1 : i32
    %287 = vector.broadcast %c-1_i32_107 : i32 to vector<1x128xi32>
    %288 = arith.addi %281, %287 : vector<1x128xi32>
    %c32_i32 = arith.constant 32 : i32
    %289 = vector.broadcast %c32_i32 : i32 to vector<1x128xi32>
    %290 = arith.cmpi slt, %288, %289 : vector<1x128xi32>
    %291 = arith.andi %286, %290 : vector<1x128xi1>
    %cst_108 = arith.constant 0.000000e+00 : f32
    %292 = vector.shape_cast %291 : vector<1x128xi1> to vector<1x128xi1>
    %293 = vector.broadcast %292 : vector<1x128xi1> to vector<32x128xi1>
    %294 = vector.broadcast %cst_108 : f32 to vector<32x128xf32>
    %295 = arith.select %293, %282, %294 : vector<32x128xi1>, vector<32x128xf32>
    %c0_i32_109 = arith.constant 0 : i32
    %296 = vector.broadcast %c0_i32_109 : i32 to vector<1x128xi32>
    %297 = arith.addi %281, %296 : vector<1x128xi32>
    %c0_i32_110 = arith.constant 0 : i32
    %298 = vector.broadcast %c0_i32_110 : i32 to vector<1x128xi32>
    %299 = arith.cmpi sge, %297, %298 : vector<1x128xi32>
    %c0_i32_111 = arith.constant 0 : i32
    %300 = vector.broadcast %c0_i32_111 : i32 to vector<1x128xi32>
    %301 = arith.addi %281, %300 : vector<1x128xi32>
    %c32_i32_112 = arith.constant 32 : i32
    %302 = vector.broadcast %c32_i32_112 : i32 to vector<1x128xi32>
    %303 = arith.cmpi slt, %301, %302 : vector<1x128xi32>
    %304 = arith.andi %299, %303 : vector<1x128xi1>
    %cst_113 = arith.constant 0.000000e+00 : f32
    %305 = vector.shape_cast %304 : vector<1x128xi1> to vector<1x128xi1>
    %306 = vector.broadcast %305 : vector<1x128xi1> to vector<32x128xi1>
    %307 = vector.broadcast %cst_113 : f32 to vector<32x128xf32>
    %308 = arith.select %306, %280, %307 : vector<32x128xi1>, vector<32x128xf32>
    %c127_i32 = arith.constant 127 : i32
    %309 = tpu.dynamic_rotate %280 by %c127_i32 dim 1 : vector<32x128xf32>, i32 -> vector<32x128xf32>
    %c1_i32_114 = arith.constant 1 : i32
    %310 = vector.broadcast %c1_i32_114 : i32 to vector<1x128xi32>
    %311 = arith.addi %281, %310 : vector<1x128xi32>
    %c0_i32_115 = arith.constant 0 : i32
    %312 = vector.broadcast %c0_i32_115 : i32 to vector<1x128xi32>
    %313 = arith.cmpi sge, %311, %312 : vector<1x128xi32>
    %c1_i32_116 = arith.constant 1 : i32
    %314 = vector.broadcast %c1_i32_116 : i32 to vector<1x128xi32>
    %315 = arith.addi %281, %314 : vector<1x128xi32>
    %c32_i32_117 = arith.constant 32 : i32
    %316 = vector.broadcast %c32_i32_117 : i32 to vector<1x128xi32>
    %317 = arith.cmpi slt, %315, %316 : vector<1x128xi32>
    %318 = arith.andi %313, %317 : vector<1x128xi1>
    %cst_118 = arith.constant 0.000000e+00 : f32
    %319 = vector.shape_cast %318 : vector<1x128xi1> to vector<1x128xi1>
    %320 = vector.broadcast %319 : vector<1x128xi1> to vector<32x128xi1>
    %321 = vector.broadcast %cst_118 : f32 to vector<32x128xf32>
    %322 = arith.select %320, %309, %321 : vector<32x128xi1>, vector<32x128xf32>
    %323 = tpu.concatenate %295, %308, %322 in 0 : vector<32x128xf32>, vector<32x128xf32>, vector<32x128xf32> -> vector<96x128xf32>
    %c0_119 = arith.constant 0 : index
    %c0_120 = arith.constant 0 : index
    %324 = vector.load %arg13[%c0_119, %c0_120] : memref<16x96xf32, #tpu.memory_space<vmem>>, vector<16x96xf32>
    %cst_121 = arith.constant dense<0.000000e+00> : vector<16x128xf32>
    %325 = tpu.matmul %324, %323, %cst_121 {dimension_numbers = #tpu.dot_dimension_numbers<[1], [0], [0], [1], [0, 0, 1, 1], [], []>} : vector<16x96xf32>, vector<96x128xf32>, vector<16x128xf32> -> vector<16x128xf32>
    %c0_122 = arith.constant 0 : index
    %c0_123 = arith.constant 0 : index
    %326 = vector.load %arg14[%c0_122, %c0_123] : memref<16x1xf32, #tpu.memory_space<vmem>>, vector<16x1xf32>
    %c0_124 = arith.constant 0 : index
    %c0_125 = arith.constant 0 : index
    %327 = vector.load %arg15[%c0_124, %c0_125] : memref<16x1xf32, #tpu.memory_space<vmem>>, vector<16x1xf32>
    %cst_126 = arith.constant dense<0.000000e+00> : vector<16xf32>
    %328 = vector.multi_reduction <add>, %325, %cst_126 [1] : vector<16x128xf32> to vector<16xf32>
    %329 = vector.shape_cast %328 : vector<16xf32> to vector<16x1xf32>
    %cst_127 = arith.constant 1.280000e+02 : f32
    %330 = vector.broadcast %cst_127 : f32 to vector<16x1xf32>
    %331 = arith.divf %329, %330 : vector<16x1xf32>
    %332 = vector.broadcast %331 : vector<16x1xf32> to vector<16x128xf32>
    %333 = arith.subf %325, %332 : vector<16x128xf32>
    %334 = arith.mulf %333, %333 : vector<16x128xf32>
    %cst_128 = arith.constant dense<0.000000e+00> : vector<16xf32>
    %335 = vector.multi_reduction <add>, %334, %cst_128 [1] : vector<16x128xf32> to vector<16xf32>
    %336 = vector.shape_cast %335 : vector<16xf32> to vector<16x1xf32>
    %cst_129 = arith.constant 1.280000e+02 : f32
    %337 = vector.broadcast %cst_129 : f32 to vector<16x1xf32>
    %338 = arith.divf %336, %337 : vector<16x1xf32>
    %cst_130 = arith.constant 9.99999974E-6 : f32
    %339 = vector.broadcast %cst_130 : f32 to vector<16x1xf32>
    %340 = arith.addf %338, %339 : vector<16x1xf32>
    %341 = math.rsqrt %340 : vector<16x1xf32>
    %342 = arith.mulf %326, %341 : vector<16x1xf32>
    %343 = vector.broadcast %342 : vector<16x1xf32> to vector<16x128xf32>
    %344 = arith.mulf %333, %343 : vector<16x128xf32>
    %345 = vector.broadcast %327 : vector<16x1xf32> to vector<16x128xf32>
    %346 = arith.addf %344, %345 : vector<16x128xf32>
    %cst_131 = arith.constant 0.000000e+00 : f32
    %347 = vector.broadcast %cst_131 : f32 to vector<16x128xf32>
    %348 = arith.cmpf ogt, %346, %347 : vector<16x128xf32>
    %cst_132 = arith.constant 0.00999999977 : f32
    %349 = vector.broadcast %cst_132 : f32 to vector<16x128xf32>
    %350 = arith.mulf %349, %346 : vector<16x128xf32>
    %351 = arith.select %348, %346, %350 : vector<16x128xi1>, vector<16x128xf32>
    %c0_133 = arith.constant 0 : index
    %c0_134 = arith.constant 0 : index
    %352 = vector.load %arg16[%c0_133, %c0_134] : memref<16x3xf32, #tpu.memory_space<vmem>>, vector<16x3xf32>
    %353 = vector.extract_strided_slice %352 {offsets = [0, 0], sizes = [16, 1], strides = [1, 1]} : vector<16x3xf32> to vector<16x1xf32>
    %c1_i32_135 = arith.constant 1 : i32
    %354 = tpu.dynamic_rotate %351 by %c1_i32_135 dim 1 : vector<16x128xf32>, i32 -> vector<16x128xf32>
    %c-1_i32_136 = arith.constant -1 : i32
    %355 = vector.broadcast %c-1_i32_136 : i32 to vector<1x128xi32>
    %356 = arith.addi %281, %355 : vector<1x128xi32>
    %c0_i32_137 = arith.constant 0 : i32
    %357 = vector.broadcast %c0_i32_137 : i32 to vector<1x128xi32>
    %358 = arith.cmpi sge, %356, %357 : vector<1x128xi32>
    %c-1_i32_138 = arith.constant -1 : i32
    %359 = vector.broadcast %c-1_i32_138 : i32 to vector<1x128xi32>
    %360 = arith.addi %281, %359 : vector<1x128xi32>
    %c32_i32_139 = arith.constant 32 : i32
    %361 = vector.broadcast %c32_i32_139 : i32 to vector<1x128xi32>
    %362 = arith.cmpi slt, %360, %361 : vector<1x128xi32>
    %363 = arith.andi %358, %362 : vector<1x128xi1>
    %cst_140 = arith.constant 0.000000e+00 : f32
    %364 = vector.shape_cast %363 : vector<1x128xi1> to vector<1x128xi1>
    %365 = vector.broadcast %364 : vector<1x128xi1> to vector<16x128xi1>
    %366 = vector.broadcast %cst_140 : f32 to vector<16x128xf32>
    %367 = arith.select %365, %354, %366 : vector<16x128xi1>, vector<16x128xf32>
    %368 = vector.broadcast %353 : vector<16x1xf32> to vector<16x128xf32>
    %369 = arith.mulf %368, %367 : vector<16x128xf32>
    %370 = vector.extract_strided_slice %352 {offsets = [0, 1], sizes = [16, 1], strides = [1, 1]} : vector<16x3xf32> to vector<16x1xf32>
    %c0_i32_141 = arith.constant 0 : i32
    %371 = vector.broadcast %c0_i32_141 : i32 to vector<1x128xi32>
    %372 = arith.addi %281, %371 : vector<1x128xi32>
    %c0_i32_142 = arith.constant 0 : i32
    %373 = vector.broadcast %c0_i32_142 : i32 to vector<1x128xi32>
    %374 = arith.cmpi sge, %372, %373 : vector<1x128xi32>
    %c0_i32_143 = arith.constant 0 : i32
    %375 = vector.broadcast %c0_i32_143 : i32 to vector<1x128xi32>
    %376 = arith.addi %281, %375 : vector<1x128xi32>
    %c32_i32_144 = arith.constant 32 : i32
    %377 = vector.broadcast %c32_i32_144 : i32 to vector<1x128xi32>
    %378 = arith.cmpi slt, %376, %377 : vector<1x128xi32>
    %379 = arith.andi %374, %378 : vector<1x128xi1>
    %cst_145 = arith.constant 0.000000e+00 : f32
    %380 = vector.shape_cast %379 : vector<1x128xi1> to vector<1x128xi1>
    %381 = vector.broadcast %380 : vector<1x128xi1> to vector<16x128xi1>
    %382 = vector.broadcast %cst_145 : f32 to vector<16x128xf32>
    %383 = arith.select %381, %351, %382 : vector<16x128xi1>, vector<16x128xf32>
    %384 = vector.broadcast %370 : vector<16x1xf32> to vector<16x128xf32>
    %385 = arith.mulf %384, %383 : vector<16x128xf32>
    %386 = arith.addf %369, %385 : vector<16x128xf32>
    %387 = vector.extract_strided_slice %352 {offsets = [0, 2], sizes = [16, 1], strides = [1, 1]} : vector<16x3xf32> to vector<16x1xf32>
    %c127_i32_146 = arith.constant 127 : i32
    %388 = tpu.dynamic_rotate %351 by %c127_i32_146 dim 1 : vector<16x128xf32>, i32 -> vector<16x128xf32>
    %c1_i32_147 = arith.constant 1 : i32
    %389 = vector.broadcast %c1_i32_147 : i32 to vector<1x128xi32>
    %390 = arith.addi %281, %389 : vector<1x128xi32>
    %c0_i32_148 = arith.constant 0 : i32
    %391 = vector.broadcast %c0_i32_148 : i32 to vector<1x128xi32>
    %392 = arith.cmpi sge, %390, %391 : vector<1x128xi32>
    %c1_i32_149 = arith.constant 1 : i32
    %393 = vector.broadcast %c1_i32_149 : i32 to vector<1x128xi32>
    %394 = arith.addi %281, %393 : vector<1x128xi32>
    %c32_i32_150 = arith.constant 32 : i32
    %395 = vector.broadcast %c32_i32_150 : i32 to vector<1x128xi32>
    %396 = arith.cmpi slt, %394, %395 : vector<1x128xi32>
    %397 = arith.andi %392, %396 : vector<1x128xi1>
    %cst_151 = arith.constant 0.000000e+00 : f32
    %398 = vector.shape_cast %397 : vector<1x128xi1> to vector<1x128xi1>
    %399 = vector.broadcast %398 : vector<1x128xi1> to vector<16x128xi1>
    %400 = vector.broadcast %cst_151 : f32 to vector<16x128xf32>
    %401 = arith.select %399, %388, %400 : vector<16x128xi1>, vector<16x128xf32>
    %402 = vector.broadcast %387 : vector<16x1xf32> to vector<16x128xf32>
    %403 = arith.mulf %402, %401 : vector<16x128xf32>
    %404 = arith.addf %386, %403 : vector<16x128xf32>
    %cst_152 = arith.constant dense<0.000000e+00> : vector<128xf32>
    %405 = vector.multi_reduction <add>, %404, %cst_152 [0] : vector<16x128xf32> to vector<128xf32>
    %406 = vector.shape_cast %405 : vector<128xf32> to vector<1x128xf32>
    %c0_153 = arith.constant 0 : index
    %c0_154 = arith.constant 0 : index
    %407 = vector.load %arg17[%c0_153, %c0_154] : memref<1x1xf32, #tpu.memory_space<vmem>>, vector<1x1xf32>
    %c0_155 = arith.constant 0 : index
    %c0_156 = arith.constant 0 : index
    %408 = vector.load %arg18[%c0_155, %c0_156] : memref<1x1xf32, #tpu.memory_space<vmem>>, vector<1x1xf32>
    %cst_157 = arith.constant dense<0.000000e+00> : vector<1xf32>
    %409 = vector.multi_reduction <add>, %406, %cst_157 [1] : vector<1x128xf32> to vector<1xf32>
    %410 = vector.shape_cast %409 : vector<1xf32> to vector<1x1xf32>
    %cst_158 = arith.constant 1.280000e+02 : f32
    %411 = vector.broadcast %cst_158 : f32 to vector<1x1xf32>
    %412 = arith.divf %410, %411 : vector<1x1xf32>
    %413 = vector.broadcast %412 : vector<1x1xf32> to vector<1x128xf32>
    %414 = arith.subf %406, %413 : vector<1x128xf32>
    %415 = arith.mulf %414, %414 : vector<1x128xf32>
    %cst_159 = arith.constant dense<0.000000e+00> : vector<1xf32>
    %416 = vector.multi_reduction <add>, %415, %cst_159 [1] : vector<1x128xf32> to vector<1xf32>
    %417 = vector.shape_cast %416 : vector<1xf32> to vector<1x1xf32>
    %cst_160 = arith.constant 1.280000e+02 : f32
    %418 = vector.broadcast %cst_160 : f32 to vector<1x1xf32>
    %419 = arith.divf %417, %418 : vector<1x1xf32>
    %cst_161 = arith.constant 9.99999974E-6 : f32
    %420 = vector.broadcast %cst_161 : f32 to vector<1x1xf32>
    %421 = arith.addf %419, %420 : vector<1x1xf32>
    %422 = math.rsqrt %421 : vector<1x1xf32>
    %423 = arith.mulf %407, %422 : vector<1x1xf32>
    %424 = vector.broadcast %423 : vector<1x1xf32> to vector<1x128xf32>
    %425 = arith.mulf %414, %424 : vector<1x128xf32>
    %426 = vector.broadcast %408 : vector<1x1xf32> to vector<1x128xf32>
    %427 = arith.addf %425, %426 : vector<1x128xf32>
    %cst_162 = arith.constant 0.000000e+00 : f32
    %428 = vector.broadcast %cst_162 : f32 to vector<1x128xf32>
    %429 = arith.cmpf ogt, %427, %428 : vector<1x128xf32>
    %cst_163 = arith.constant 0.00999999977 : f32
    %430 = vector.broadcast %cst_163 : f32 to vector<1x128xf32>
    %431 = arith.mulf %430, %427 : vector<1x128xf32>
    %432 = arith.select %429, %427, %431 : vector<1x128xi1>, vector<1x128xf32>
    %c0_164 = arith.constant 0 : index
    %c0_165 = arith.constant 0 : index
    %433 = vector.load %arg19[%c0_164, %c0_165] : memref<1x128xf32, #tpu.memory_space<vmem>>, vector<1x128xf32>
    tpu.vector_store %arg19[%c0_164, %c0_165], %432 {strides = array<i32>} : memref<1x128xf32, #tpu.memory_space<vmem>>, vector<1x128xf32>,
    return
  }
  func.func @transform_0(%arg0: i32) -> (i32, i32) {
    %c0_i32 = arith.constant 0 : i32
    %c0_i32_0 = arith.constant 0 : i32
    %c0_i32_1 = arith.constant 0 : i32
    return %c0_i32, %c0_i32_0 : i32, i32
  }
  func.func @transform_1(%arg0: i32) -> (i32, i32) {
    %c0_i32 = arith.constant 0 : i32
    %c0_i32_0 = arith.constant 0 : i32
    %c0_i32_1 = arith.constant 0 : i32
    return %c0_i32, %c0_i32_0 : i32, i32
  }
  func.func @transform_2(%arg0: i32) -> (i32, i32) {
    %c0_i32 = arith.constant 0 : i32
    %c0_i32_0 = arith.constant 0 : i32
    %c0_i32_1 = arith.constant 0 : i32
    return %c0_i32, %c0_i32_0 : i32, i32
  }
  func.func @transform_3(%arg0: i32) -> (i32, i32) {
    %c0_i32 = arith.constant 0 : i32
    %c0_i32_0 = arith.constant 0 : i32
    %c0_i32_1 = arith.constant 0 : i32
    return %c0_i32, %c0_i32_0 : i32, i32
  }
  func.func @transform_4(%arg0: i32) -> (i32, i32) {
    %c0_i32 = arith.constant 0 : i32
    %c0_i32_0 = arith.constant 0 : i32
    %c0_i32_1 = arith.constant 0 : i32
    return %c0_i32, %c0_i32_0 : i32, i32
  }
  func.func @transform_5(%arg0: i32) -> (i32, i32) {
    %c0_i32 = arith.constant 0 : i32
    %c0_i32_0 = arith.constant 0 : i32
    %c0_i32_1 = arith.constant 0 : i32
    return %c0_i32, %c0_i32_0 : i32, i32
  }
  func.func @transform_6(%arg0: i32) -> (i32, i32) {
    %c0_i32 = arith.constant 0 : i32
    %c0_i32_0 = arith.constant 0 : i32
    %c0_i32_1 = arith.constant 0 : i32
    return %c0_i32, %c0_i32_0 : i32, i32
  }
  func.func @transform_7(%arg0: i32) -> (i32, i32) {
    %c0_i32 = arith.constant 0 : i32
    %c0_i32_0 = arith.constant 0 : i32
    %c0_i32_1 = arith.constant 0 : i32
    return %c0_i32, %c0_i32_0 : i32, i32
  }
  func.func @transform_8(%arg0: i32) -> (i32, i32) {
    %c0_i32 = arith.constant 0 : i32
    %c0_i32_0 = arith.constant 0 : i32
    %c0_i32_1 = arith.constant 0 : i32
    return %c0_i32, %c0_i32_0 : i32, i32
  }
  func.func @transform_9(%arg0: i32) -> (i32, i32) {
    %c0_i32 = arith.constant 0 : i32
    %c0_i32_0 = arith.constant 0 : i32
    %c0_i32_1 = arith.constant 0 : i32
    return %c0_i32, %c0_i32_0 : i32, i32
  }
  func.func @transform_10(%arg0: i32) -> (i32, i32) {
    %c0_i32 = arith.constant 0 : i32
    %c0_i32_0 = arith.constant 0 : i32
    %c0_i32_1 = arith.constant 0 : i32
    return %c0_i32, %c0_i32_0 : i32, i32
  }
  func.func @transform_11(%arg0: i32) -> (i32, i32) {
    %c0_i32 = arith.constant 0 : i32
    %c0_i32_0 = arith.constant 0 : i32
    %c0_i32_1 = arith.constant 0 : i32
    return %c0_i32, %c0_i32_0 : i32, i32
  }
  func.func @transform_12(%arg0: i32) -> (i32, i32) {
    %c0_i32 = arith.constant 0 : i32
    %c0_i32_0 = arith.constant 0 : i32
    %c0_i32_1 = arith.constant 0 : i32
    return %c0_i32, %c0_i32_0 : i32, i32
  }
  func.func @transform_13(%arg0: i32) -> (i32, i32) {
    %c0_i32 = arith.constant 0 : i32
    %c0_i32_0 = arith.constant 0 : i32
    %c0_i32_1 = arith.constant 0 : i32
    return %c0_i32, %c0_i32_0 : i32, i32
  }
  func.func @transform_14(%arg0: i32) -> (i32, i32) {
    %c0_i32 = arith.constant 0 : i32
    %c0_i32_0 = arith.constant 0 : i32
    %c0_i32_1 = arith.constant 0 : i32
    return %c0_i32, %c0_i32_0 : i32, i32
  }
  func.func @transform_15(%arg0: i32) -> (i32, i32) {
    %c0_i32 = arith.constant 0 : i32
    %c0_i32_0 = arith.constant 0 : i32
    %c0_i32_1 = arith.constant 0 : i32
    return %c0_i32, %c0_i32_0 : i32, i32
  }
  func.func @transform_16(%arg0: i32) -> (i32, i32) {
    %c0_i32 = arith.constant 0 : i32
    %c0_i32_0 = arith.constant 0 : i32
    %c0_i32_1 = arith.constant 0 : i32
    return %c0_i32, %c0_i32_0 : i32, i32
  }
  func.func @transform_17(%arg0: i32) -> (i32, i32) {
    %c0_i32 = arith.constant 0 : i32
    %c0_i32_0 = arith.constant 0 : i32
    %c0_i32_1 = arith.constant 0 : i32
    return %c0_i32, %c0_i32_0 : i32, i32
  }
  func.func @transform_18(%arg0: i32) -> (i32, i32) {
    %c0_i32 = arith.constant 0 : i32
    %c0_i32_0 = arith.constant 0 : i32
    %c0_i32_1 = arith.constant 0 : i32
    return %c0_i32, %c0_i32_0 : i32, i32
  }
}

</mosaic_0001>

<llo_original>
// kernel: tpu_custom_call.1
$region0: #{tpu_custom_call.1}
  #allocation0 [shape = 'u32[]', space=smem, size = 0x4, offset = 0x4, fixed_abs, tag = 'smem constant byte address 0x4 - core index']
  #allocation1 [shape = 'u32[144,128]{1,0:T(1,128)}', space=vmem, size = 0x12000, scoped, tag = 'internal scratch']
  #allocation2 [shape = 'f32[1,1]{1,0:T(1,128)S(1)}', space=vmem, size = 0x200, scoped, tag = 'scoped memory for tpu_custom_call.1']
  #allocation3 [shape = 'f32[1,1]{1,0:T(1,128)S(1)}', space=vmem, size = 0x200, scoped, tag = 'scoped memory for tpu_custom_call.1']
  %s0 = inlined_call_operand.vmem [shape: f32[1,512], index: 0, kind: input, shape index: {}]
  %s1 = inlined_call_operand.vmem [shape: s32[1,512], index: 1, kind: input, shape index: {}]
  %s2 = inlined_call_operand.vmem [shape: s32[1,256], index: 2, kind: input, shape index: {}]
  %s3 = inlined_call_operand.vmem [shape: s32[1,128], index: 3, kind: input, shape index: {}]
  %s4 = inlined_call_operand.hbm [shape: f32[512,256], index: 4, kind: input, shape index: {}]
  %s5 = inlined_call_operand.hbm [shape: f32[256,128], index: 5, kind: input, shape index: {}]
  %s6 = inlined_call_operand.vmem [shape: f32[32,9], index: 6, kind: input, shape index: {}]
  %s7 = inlined_call_operand.vmem [shape: f32[32,1], index: 7, kind: input, shape index: {}]
  %s8 = inlined_call_operand.vmem [shape: f32[32,1], index: 8, kind: input, shape index: {}]
  %s9 = inlined_call_operand.vmem [shape: f32[32,160], index: 9, kind: input, shape index: {}]
  %s10 = inlined_call_operand.vmem [shape: f32[32,1], index: 10, kind: input, shape index: {}]
  %s11 = inlined_call_operand.vmem [shape: f32[32,1], index: 11, kind: input, shape index: {}]
  %s12 = inlined_call_operand.vmem [shape: f32[16,96], index: 12, kind: input, shape index: {}]
  %s13 = inlined_call_operand.vmem [shape: f32[16,1], index: 13, kind: input, shape index: {}]
  %s14 = inlined_call_operand.vmem [shape: f32[16,1], index: 14, kind: input, shape index: {}]
  %s15 = inlined_call_operand.vmem [shape: f32[16,3], index: 15, kind: input, shape index: {}]
  %s16 = inlined_call_operand.<no memory space> [shape: f32[1,1], index: 16, kind: input, shape index: {}]
  %s17 = inlined_call_operand.<no memory space> [shape: f32[1,1], index: 17, kind: input, shape index: {}]
  %s18 = inlined_call_operand.hbm [shape: f32[1,128], index: 18, kind: output, shape index: {}]
  %s19 = sld [smem:[#allocation0]]
  $region90: #{tpu_custom_call.1} parent=0
    _
  %s21 = ssub.s32 1, %s19
  %s22 = scalar_select 0, %s21, %s19
  %v23 = vstv %s16
  %24 = vst [vmem:[#allocation2] sm:$0x1] %v23
  %v25 = vstv %s17
  %26 = vst [vmem:[#allocation3] sm:$0x1] %v25
  $region1: #{tpu_custom_call.1} parent=0
    #allocation4 [shape = 'u8[524288]{0}', space=vmem, size = 0x80000, scoped, tag = 'input window, operand 4, single buffered']
    #allocation5 [shape = 's32[1]{0}', space=sflag, size = 0x4, scoped, tag = 'scoped memory for tpu_custom_call.1']
    #allocation6 [shape = 's32[1]{0}', space=sflag, size = 0x4, scoped, tag = 'scoped memory for tpu_custom_call.1']
    #allocation7 [shape = 'u8[131072]{0}', space=vmem, size = 0x20000, scoped, tag = 'input window, operand 5, single buffered']
    #allocation8 [shape = 's32[1]{0}', space=sflag, size = 0x4, scoped, tag = 'scoped memory for tpu_custom_call.1']
    #allocation9 [shape = 'u8[512]{0}', space=vmem, size = 0x400, scoped, tag = 'output window, operand 0, single buffered']
    %27 = vsyncpa [#allocation5], 0
    %28 = vsyncpa [#allocation8], 0
    %29 = vsyncpa [#allocation6], 0
    // Predicated region
    $region2: #{tpu_custom_call.1} parent=1 // pred_check
      _
    $region3: #{tpu_custom_call.1} parent=1 // pred_check_branch
      %31 = sbr.rel (0) target = $region5
    $region4: #{tpu_custom_call.1} parent=1 // pred_region
      _
    $region5: #{tpu_custom_call.1} parent=1 // pred_fallthru
      _
    // Predicated region
    $region6: #{tpu_custom_call.1} parent=1 // pred_check
      _
    $region7: #{tpu_custom_call.1} parent=1 // pred_check_branch
      %33 = sbr.rel (0) target = $region9
    $region8: #{tpu_custom_call.1} parent=1 // pred_region
      _
    $region9: #{tpu_custom_call.1} parent=1 // pred_fallthru
      _
    // Predicated region
    $region10: #{tpu_custom_call.1} parent=1 // pred_check
      _
    $region11: #{tpu_custom_call.1} parent=1 // pred_check_branch
      %35 = sbr.rel (0) target = $region13
    $region12: #{tpu_custom_call.1} parent=1 // pred_region
      _
    $region13: #{tpu_custom_call.1} parent=1 // pred_fallthru
      _
    // Predicated region
    $region14: #{tpu_custom_call.1} parent=1 // pred_check
      _
    $region15: #{tpu_custom_call.1} parent=1 // pred_check_branch
      %37 = sbr.rel (0) target = $region17
    $region16: #{tpu_custom_call.1} parent=1 // pred_region
      _
    $region17: #{tpu_custom_call.1} parent=1 // pred_fallthru
      _
    // Predicated region
    $region18: #{tpu_custom_call.1} parent=1 // pred_check
      _
    $region19: #{tpu_custom_call.1} parent=1 // pred_check_branch
      %39 = sbr.rel (0) target = $region21
    $region20: #{tpu_custom_call.1} parent=1 // pred_region
      %s41 = ssub.s32 16384, 16384
      %42 = vsyncadd [#allocation5], %s41
      %s43 = sshll.u32 [#allocation4], 4
      %s44 = int_to_ptr.vmem [resolvable:$true] %s43
      %49 = dma.hbm_to_vmem [thread:$0]  %s4, 16384, %s44, [#allocation5], 256, 256, 16
    $region21: #{tpu_custom_call.1} parent=1 // pred_fallthru
      _
    // Predicated region
    $region22: #{tpu_custom_call.1} parent=1 // pred_check
      _
    $region23: #{tpu_custom_call.1} parent=1 // pred_check_branch
      %51 = sbr.rel (0) target = $region25
    $region24: #{tpu_custom_call.1} parent=1 // pred_region
      %s53 = ssub.s32 4096, 4096
      %54 = vsyncadd [#allocation8], %s53
      %s55 = sshll.u32 [#allocation7], 4
      %s56 = int_to_ptr.vmem [resolvable:$true] %s55
      %61 = dma.hbm_to_vmem [thread:$0]  %s5, 4096, %s56, [#allocation8], 128, 128, 8
    $region25: #{tpu_custom_call.1} parent=1 // pred_fallthru
      _
    // Predicated region
    $region26: #{tpu_custom_call.1} parent=1 // pred_check
      _
    $region27: #{tpu_custom_call.1} parent=1 // pred_check_branch
      %63 = sbr.rel (0) target = $region29
    $region28: #{tpu_custom_call.1} parent=1 // pred_region
      _
    $region29: #{tpu_custom_call.1} parent=1 // pred_fallthru
      _
    // Predicated region
    $region30: #{tpu_custom_call.1} parent=1 // pred_check
      _
    $region31: #{tpu_custom_call.1} parent=1 // pred_check_branch
      %65 = sbr.rel (0) target = $region33
    $region32: #{tpu_custom_call.1} parent=1 // pred_region
      _
    $region33: #{tpu_custom_call.1} parent=1 // pred_fallthru
      _
    // Predicated region
    $region34: #{tpu_custom_call.1} parent=1 // pred_check
      _
    $region35: #{tpu_custom_call.1} parent=1 // pred_check_branch
      %67 = sbr.rel (0) target = $region37
    $region36: #{tpu_custom_call.1} parent=1 // pred_region
      _
    $region37: #{tpu_custom_call.1} parent=1 // pred_fallthru
      _
    // Predicated region
    $region38: #{tpu_custom_call.1} parent=1 // pred_check
      _
    $region39: #{tpu_custom_call.1} parent=1 // pred_check_branch
      %69 = sbr.rel (0) target = $region41
    $region40: #{tpu_custom_call.1} parent=1 // pred_region
      _
    $region41: #{tpu_custom_call.1} parent=1 // pred_fallthru
      _
    // Predicated region
    $region42: #{tpu_custom_call.1} parent=1 // pred_check
      _
    $region43: #{tpu_custom_call.1} parent=1 // pred_check_branch
      %71 = sbr.rel (0) target = $region45
    $region44: #{tpu_custom_call.1} parent=1 // pred_region
      _
    $region45: #{tpu_custom_call.1} parent=1 // pred_fallthru
      _
    // Predicated region
    $region46: #{tpu_custom_call.1} parent=1 // pred_check
      _
    $region47: #{tpu_custom_call.1} parent=1 // pred_check_branch
      %73 = sbr.rel (0) target = $region49
    $region48: #{tpu_custom_call.1} parent=1 // pred_region
      _
    $region49: #{tpu_custom_call.1} parent=1 // pred_fallthru
      _
    // Predicated region
    $region50: #{tpu_custom_call.1} parent=1 // pred_check
      _
    $region51: #{tpu_custom_call.1} parent=1 // pred_check_branch
      %75 = sbr.rel (0) target = $region53
    $region52: #{tpu_custom_call.1} parent=1 // pred_region
      _
    $region53: #{tpu_custom_call.1} parent=1 // pred_fallthru
      _
    // Predicated region
    $region54: #{tpu_custom_call.1} parent=1 // pred_check
      _
    $region55: #{tpu_custom_call.1} parent=1 // pred_check_branch
      %77 = sbr.rel (0) target = $region57
    $region56: #{tpu_custom_call.1} parent=1 // pred_region
      _
    $region57: #{tpu_custom_call.1} parent=1 // pred_fallthru
      _
    // Predicated region
    $region58: #{tpu_custom_call.1} parent=1 // pred_check
      _
    $region59: #{tpu_custom_call.1} parent=1 // pred_check_branch
      %79 = sbr.rel (0) target = $region61
    $region60: #{tpu_custom_call.1} parent=1 // pred_region
      _
    $region61: #{tpu_custom_call.1} parent=1 // pred_fallthru
      _
    // Predicated region
    $region62: #{tpu_custom_call.1} parent=1 // pred_check
      _
    $region63: #{tpu_custom_call.1} parent=1 // pred_check_branch
      %81 = sbr.rel (0) target = $region65
    $region64: #{tpu_custom_call.1} parent=1 // pred_region
      _
    $region65: #{tpu_custom_call.1} parent=1 // pred_fallthru
      _
    // Predicated region
    $region66: #{tpu_custom_call.1} parent=1 // pred_check
      _
    $region67: #{tpu_custom_call.1} parent=1 // pred_check_branch
      %83 = sbr.rel (0) target = $region69
    $region68: #{tpu_custom_call.1} parent=1 // pred_region
      _
    $region69: #{tpu_custom_call.1} parent=1 // pred_fallthru
      _
    // Predicated region
    $region70: #{tpu_custom_call.1} parent=1 // pred_check
      _
    $region71: #{tpu_custom_call.1} parent=1 // pred_check_branch
      %85 = sbr.rel (0) target = $region73
    $region72: #{tpu_custom_call.1} parent=1 // pred_region
      _
    $region73: #{tpu_custom_call.1} parent=1 // pred_fallthru
      _
    // Predicated region
    $region74: #{tpu_custom_call.1} parent=1 // pred_check
      _
    $region75: #{tpu_custom_call.1} parent=1 // pred_check_branch
      %87 = sbr.rel (0) target = $region77
    $region76: #{tpu_custom_call.1} parent=1 // pred_region
      %88 = dma.done [#allocation5], 16384
    $region77: #{tpu_custom_call.1} parent=1 // pred_fallthru
      _
    // Predicated region
    $region78: #{tpu_custom_call.1} parent=1 // pred_check
      _
    $region79: #{tpu_custom_call.1} parent=1 // pred_check_branch
      %90 = sbr.rel (0) target = $region81
    $region80: #{tpu_custom_call.1} parent=1 // pred_region
      %91 = dma.done [#allocation8], 4096
    $region81: #{tpu_custom_call.1} parent=1 // pred_fallthru
      _
    %v92 = vld [vmem:[%s0] sm:$0xf]
    %v93 = vld [vmem:[%s1] sm:$0xf]
    %v94 = vld [vmem:[%s6] sm:$0xff]
    %v95 = vld [vmem:[%s6 + $0x8] sm:$0xff]
    %v96 = vld [vmem:[%s6 + $0x10] sm:$0xff]
    %v97 = vld [vmem:[%s6 + $0x18] sm:$0xff]
    %v99 = vlaneseq
    %v100 = vshrl.u32 %v99, 7
    %v101 = vsub.s32 0, %v100
    %v102 = vrot.slane %v92, %v101
    %v103 = vlaneseq
    %v104 = vshrl.u32 %v103, 7
    %v105 = vsub.s32 1, %v104
    %v106 = vrot.slane %v92, %v105
    %v107 = vlaneseq
    %v108 = vshrl.u32 %v107, 7
    %v109 = vsub.s32 2, %v108
    %v110 = vrot.slane %v92, %v109
    %v111 = vlaneseq
    %v112 = vshrl.u32 %v111, 7
    %v113 = vsub.s32 3, %v112
    %v114 = vrot.slane %v92, %v113
    %119 = vrot.lane.b32.xlu0 %v102, 4
    %v120 = vpop.permute.xlu0 %119
    %121 = vrot.lane.b32.xlu0 %v106, 4
    %v122 = vpop.permute.xlu0 %121
    %123 = vrot.lane.b32.xlu0 %v110, 4
    %v124 = vpop.permute.xlu0 %123
    %125 = vrot.lane.b32.xlu0 %v114, 4
    %v126 = vpop.permute.xlu0 %125
    %v127 = vlaneseq
    %v128 = vand.u32 %v127, 127
    %vm129 = vcmp.lt.s32.totalorder %v128, 4
    %v130 = vsel %vm129, %v124, %v126
    %v131 = vsel %vm129, %v122, %v124
    %v132 = vsel %vm129, %v120, %v122
    %v133 = vsel %vm129, %v126, %v120
    %v134 = vadd.s32 %v93, 4294967292
    %vm135 = vcmp.ge.s32.totalorder %v134, 0
    %vm136 = vcmp.lt.s32.totalorder %v134, 128
    %vm137 = vmand %vm135, %vm136
    %v142 = vcombine.low %v133, %v132
    %v143 = vcombine.low %v131, %v130
    %v145 = vunpack.c.l.s4 1966171168
    %v146 = vunpack.c.0.s8 %v145
    %v147 = vlaneseq
    %v148 = vshrl.u32 %v147, 7
    %v149 = vsub.s32 %v146, %v148
    %v150 = vrot.slane %v142, %v149
    %v152 = vunpack.c.l.s4 1966171168
    %v153 = vunpack.c.0.s8 %v152
    %v154 = vlaneseq
    %v155 = vshrl.u32 %v154, 7
    %v156 = vsub.s32 %v153, %v155
    %v157 = vrot.slane %v143, %v156
    %v158 = vcombine.low %v150, %v157
    %v160 = vunpack.c.l.s4 1966171168
    %v161 = vunpack.c.0.s8 %v160
    %v162 = vlaneseq
    %v163 = vshrl.u32 %v162, 7
    %v164 = vsub.s32 %v161, %v163
    %v165 = vrot.slane %v158, %v164
    %v167 = vsel %vm137, %v165, 0.0
    %169 = vset.pattern.permute.xlu0 0
    %170 = vperm.xlu0 %169, %v94
    %v171 = vpop.permute.xlu0 %170
    %174 = vset.pattern.permute.xlu0 0
    %175 = vperm.xlu0 %174, %v95
    %v176 = vpop.permute.xlu0 %175
    %179 = vset.pattern.permute.xlu0 0
    %180 = vperm.xlu0 %179, %v96
    %v181 = vpop.permute.xlu0 %180
    %184 = vset.pattern.permute.xlu0 0
    %185 = vperm.xlu0 %184, %v97
    %v186 = vpop.permute.xlu0 %185
    %v189 = vlaneseq
    %v190 = vshrl.u32 %v189, 7
    %v191 = vsub.s32 0, %v190
    %v192 = vrot.slane %v167, %v191
    %v193 = vlaneseq
    %v194 = vshrl.u32 %v193, 7
    %v195 = vsub.s32 1, %v194
    %v196 = vrot.slane %v167, %v195
    %v197 = vlaneseq
    %v198 = vshrl.u32 %v197, 7
    %v199 = vsub.s32 2, %v198
    %v200 = vrot.slane %v167, %v199
    %v201 = vlaneseq
    %v202 = vshrl.u32 %v201, 7
    %v203 = vsub.s32 3, %v202
    %v204 = vrot.slane %v167, %v203
    %v209 = vmul.f32 %v171, %v192
    %v210 = vmul.f32 %v171, %v196
    %v211 = vmul.f32 %v171, %v200
    %v212 = vmul.f32 %v171, %v204
    %v213 = vmul.f32 %v176, %v192
    %v214 = vmul.f32 %v176, %v196
    %v215 = vmul.f32 %v176, %v200
    %v216 = vmul.f32 %v176, %v204
    %v217 = vmul.f32 %v181, %v192
    %v218 = vmul.f32 %v181, %v196
    %v219 = vmul.f32 %v181, %v200
    %v220 = vmul.f32 %v181, %v204
    %v221 = vmul.f32 %v186, %v192
    %v222 = vmul.f32 %v186, %v196
    %v223 = vmul.f32 %v186, %v200
    %v224 = vmul.f32 %v186, %v204
    %225 = vrot.lane.b32.xlu0 %v102, 3
    %v226 = vpop.permute.xlu0 %225
    %227 = vrot.lane.b32.xlu0 %v106, 3
    %v228 = vpop.permute.xlu0 %227
    %229 = vrot.lane.b32.xlu0 %v110, 3
    %v230 = vpop.permute.xlu0 %229
    %231 = vrot.lane.b32.xlu0 %v114, 3
    %v232 = vpop.permute.xlu0 %231
    %vm233 = vcmp.lt.s32.totalorder %v128, 3
    %v234 = vsel %vm233, %v230, %v232
    %v235 = vsel %vm233, %v228, %v230
    %v236 = vsel %vm233, %v226, %v228
    %v237 = vsel %vm233, %v232, %v226
    %v238 = vadd.s32 %v93, 4294967293
    %vm239 = vcmp.ge.s32.totalorder %v238, 0
    %vm240 = vcmp.lt.s32.totalorder %v238, 128
    %vm241 = vmand %vm239, %vm240
    %v246 = vcombine.low %v237, %v236
    %v247 = vcombine.low %v235, %v234
    %v249 = vunpack.c.l.s4 1966171168
    %v250 = vunpack.c.0.s8 %v249
    %v251 = vlaneseq
    %v252 = vshrl.u32 %v251, 7
    %v253 = vsub.s32 %v250, %v252
    %v254 = vrot.slane %v246, %v253
    %v256 = vunpack.c.l.s4 1966171168
    %v257 = vunpack.c.0.s8 %v256
    %v258 = vlaneseq
    %v259 = vshrl.u32 %v258, 7
    %v260 = vsub.s32 %v257, %v259
    %v261 = vrot.slane %v247, %v260
    %v262 = vcombine.low %v254, %v261
    %v264 = vunpack.c.l.s4 1966171168
    %v265 = vunpack.c.0.s8 %v264
    %v266 = vlaneseq
    %v267 = vshrl.u32 %v266, 7
    %v268 = vsub.s32 %v265, %v267
    %v269 = vrot.slane %v262, %v268
    %v271 = vsel %vm241, %v269, 0.0
    %272 = vset.pattern.permute.xlu0 1
    %273 = vperm.xlu0 %272, %v94
    %v274 = vpop.permute.xlu0 %273
    %276 = vset.pattern.permute.xlu0 1
    %277 = vperm.xlu0 %276, %v95
    %v278 = vpop.permute.xlu0 %277
    %280 = vset.pattern.permute.xlu0 1
    %281 = vperm.xlu0 %280, %v96
    %v282 = vpop.permute.xlu0 %281
    %284 = vset.pattern.permute.xlu0 1
    %285 = vperm.xlu0 %284, %v97
    %v286 = vpop.permute.xlu0 %285
    %v289 = vlaneseq
    %v290 = vshrl.u32 %v289, 7
    %v291 = vsub.s32 0, %v290
    %v292 = vrot.slane %v271, %v291
    %v293 = vlaneseq
    %v294 = vshrl.u32 %v293, 7
    %v295 = vsub.s32 1, %v294
    %v296 = vrot.slane %v271, %v295
    %v297 = vlaneseq
    %v298 = vshrl.u32 %v297, 7
    %v299 = vsub.s32 2, %v298
    %v300 = vrot.slane %v271, %v299
    %v301 = vlaneseq
    %v302 = vshrl.u32 %v301, 7
    %v303 = vsub.s32 3, %v302
    %v304 = vrot.slane %v271, %v303
    %v309 = vmul.f32 %v274, %v292
    %v310 = vmul.f32 %v274, %v296
    %v311 = vmul.f32 %v274, %v300
    %v312 = vmul.f32 %v274, %v304
    %v313 = vmul.f32 %v278, %v292
    %v314 = vmul.f32 %v278, %v296
    %v315 = vmul.f32 %v278, %v300
    %v316 = vmul.f32 %v278, %v304
    %v317 = vmul.f32 %v282, %v292
    %v318 = vmul.f32 %v282, %v296
    %v319 = vmul.f32 %v282, %v300
    %v320 = vmul.f32 %v282, %v304
    %v321 = vmul.f32 %v286, %v292
    %v322 = vmul.f32 %v286, %v296
    %v323 = vmul.f32 %v286, %v300
    %v324 = vmul.f32 %v286, %v304
    %v325 = vadd.f32 %v209, %v309
    %v326 = vadd.f32 %v210, %v310
    %v327 = vadd.f32 %v211, %v311
    %v328 = vadd.f32 %v212, %v312
    %v329 = vadd.f32 %v213, %v313
    %v330 = vadd.f32 %v214, %v314
    %v331 = vadd.f32 %v215, %v315
    %v332 = vadd.f32 %v216, %v316
    %v333 = vadd.f32 %v217, %v317
    %v334 = vadd.f32 %v218, %v318
    %v335 = vadd.f32 %v219, %v319
    %v336 = vadd.f32 %v220, %v320
    %v337 = vadd.f32 %v221, %v321
    %v338 = vadd.f32 %v222, %v322
    %v339 = vadd.f32 %v223, %v323
    %v340 = vadd.f32 %v224, %v324
    %341 = vrot.lane.b32.xlu0 %v102, 2
    %v342 = vpop.permute.xlu0 %341
    %343 = vrot.lane.b32.xlu0 %v106, 2
    %v344 = vpop.permute.xlu0 %343
    %345 = vrot.lane.b32.xlu0 %v110, 2
    %v346 = vpop.permute.xlu0 %345
    %347 = vrot.lane.b32.xlu0 %v114, 2
    %v348 = vpop.permute.xlu0 %347
    %vm349 = vcmp.lt.s32.totalorder %v128, 2
    %v350 = vsel %vm349, %v346, %v348
    %v351 = vsel %vm349, %v344, %v346
    %v352 = vsel %vm349, %v342, %v344
    %v353 = vsel %vm349, %v348, %v342
    %v354 = vadd.s32 %v93, 4294967294
    %vm355 = vcmp.ge.s32.totalorder %v354, 0
    %vm356 = vcmp.lt.s32.totalorder %v354, 128
    %vm357 = vmand %vm355, %vm356
    %v362 = vcombine.low %v353, %v352
    %v363 = vcombine.low %v351, %v350
    %v365 = vunpack.c.l.s4 1966171168
    %v366 = vunpack.c.0.s8 %v365
    %v367 = vlaneseq
    %v368 = vshrl.u32 %v367, 7
    %v369 = vsub.s32 %v366, %v368
    %v370 = vrot.slane %v362, %v369
    %v372 = vunpack.c.l.s4 1966171168
    %v373 = vunpack.c.0.s8 %v372
    %v374 = vlaneseq
    %v375 = vshrl.u32 %v374, 7
    %v376 = vsub.s32 %v373, %v375
    %v377 = vrot.slane %v363, %v376
    %v378 = vcombine.low %v370, %v377
    %v380 = vunpack.c.l.s4 1966171168
    %v381 = vunpack.c.0.s8 %v380
    %v382 = vlaneseq
    %v383 = vshrl.u32 %v382, 7
    %v384 = vsub.s32 %v381, %v383
    %v385 = vrot.slane %v378, %v384
    %v387 = vsel %vm357, %v385, 0.0
    %388 = vset.pattern.permute.xlu0 2
    %389 = vperm.xlu0 %388, %v94
    %v390 = vpop.permute.xlu0 %389
    %392 = vset.pattern.permute.xlu0 2
    %393 = vperm.xlu0 %392, %v95
    %v394 = vpop.permute.xlu0 %393
    %396 = vset.pattern.permute.xlu0 2
    %397 = vperm.xlu0 %396, %v96
    %v398 = vpop.permute.xlu0 %397
    %400 = vset.pattern.permute.xlu0 2
    %401 = vperm.xlu0 %400, %v97
    %v402 = vpop.permute.xlu0 %401
    %v405 = vlaneseq
    %v406 = vshrl.u32 %v405, 7
    %v407 = vsub.s32 0, %v406
    %v408 = vrot.slane %v387, %v407
    %v409 = vlaneseq
    %v410 = vshrl.u32 %v409, 7
    %v411 = vsub.s32 1, %v410
    %v412 = vrot.slane %v387, %v411
    %v413 = vlaneseq
    %v414 = vshrl.u32 %v413, 7
    %v415 = vsub.s32 2, %v414
    %v416 = vrot.slane %v387, %v415
    %v417 = vlaneseq
    %v418 = vshrl.u32 %v417, 7
    %v419 = vsub.s32 3, %v418
    %v420 = vrot.slane %v387, %v419
    %v425 = vmul.f32 %v390, %v408
    %v426 = vmul.f32 %v390, %v412
    %v427 = vmul.f32 %v390, %v416
    %v428 = vmul.f32 %v390, %v420
    %v429 = vmul.f32 %v394, %v408
    %v430 = vmul.f32 %v394, %v412
    %v431 = vmul.f32 %v394, %v416
    %v432 = vmul.f32 %v394, %v420
    %v433 = vmul.f32 %v398, %v408
    %v434 = vmul.f32 %v398, %v412
    %v435 = vmul.f32 %v398, %v416
    %v436 = vmul.f32 %v398, %v420
    %v437 = vmul.f32 %v402, %v408
    %v438 = vmul.f32 %v402, %v412
    %v439 = vmul.f32 %v402, %v416
    %v440 = vmul.f32 %v402, %v420
    %v441 = vadd.f32 %v325, %v425
    %v442 = vadd.f32 %v326, %v426
    %v443 = vadd.f32 %v327, %v427
    %v444 = vadd.f32 %v328, %v428
    %v445 = vadd.f32 %v329, %v429
    %v446 = vadd.f32 %v330, %v430
    %v447 = vadd.f32 %v331, %v431
    %v448 = vadd.f32 %v332, %v432
    %v449 = vadd.f32 %v333, %v433
    %v450 = vadd.f32 %v334, %v434
    %v451 = vadd.f32 %v335, %v435
    %v452 = vadd.f32 %v336, %v436
    %v453 = vadd.f32 %v337, %v437
    %v454 = vadd.f32 %v338, %v438
    %v455 = vadd.f32 %v339, %v439
    %v456 = vadd.f32 %v340, %v440
    %457 = vrot.lane.b32.xlu0 %v102, 1
    %v458 = vpop.permute.xlu0 %457
    %459 = vrot.lane.b32.xlu0 %v106, 1
    %v460 = vpop.permute.xlu0 %459
    %461 = vrot.lane.b32.xlu0 %v110, 1
    %v462 = vpop.permute.xlu0 %461
    %463 = vrot.lane.b32.xlu0 %v114, 1
    %v464 = vpop.permute.xlu0 %463
    %vm465 = vcmp.lt.s32.totalorder %v128, 1
    %v466 = vsel %vm465, %v462, %v464
    %v467 = vsel %vm465, %v460, %v462
    %v468 = vsel %vm465, %v458, %v460
    %v469 = vsel %vm465, %v464, %v458
    %v470 = vadd.s32 %v93, 4294967295
    %vm471 = vcmp.ge.s32.totalorder %v470, 0
    %vm472 = vcmp.lt.s32.totalorder %v470, 128
    %vm473 = vmand %vm471, %vm472
    %v478 = vcombine.low %v469, %v468
    %v479 = vcombine.low %v467, %v466
    %v481 = vunpack.c.l.s4 1966171168
    %v482 = vunpack.c.0.s8 %v481
    %v483 = vlaneseq
    %v484 = vshrl.u32 %v483, 7
    %v485 = vsub.s32 %v482, %v484
    %v486 = vrot.slane %v478, %v485
    %v488 = vunpack.c.l.s4 1966171168
    %v489 = vunpack.c.0.s8 %v488
    %v490 = vlaneseq
    %v491 = vshrl.u32 %v490, 7
    %v492 = vsub.s32 %v489, %v491
    %v493 = vrot.slane %v479, %v492
    %v494 = vcombine.low %v486, %v493
    %v496 = vunpack.c.l.s4 1966171168
    %v497 = vunpack.c.0.s8 %v496
    %v498 = vlaneseq
    %v499 = vshrl.u32 %v498, 7
    %v500 = vsub.s32 %v497, %v499
    %v501 = vrot.slane %v494, %v500
    %v503 = vsel %vm473, %v501, 0.0
    %504 = vset.pattern.permute.xlu0 3
    %505 = vperm.xlu0 %504, %v94
    %v506 = vpop.permute.xlu0 %505
    %508 = vset.pattern.permute.xlu0 3
    %509 = vperm.xlu0 %508, %v95
    %v510 = vpop.permute.xlu0 %509
    %512 = vset.pattern.permute.xlu0 3
    %513 = vperm.xlu0 %512, %v96
    %v514 = vpop.permute.xlu0 %513
    %516 = vset.pattern.permute.xlu0 3
    %517 = vperm.xlu0 %516, %v97
    %v518 = vpop.permute.xlu0 %517
    %v521 = vlaneseq
    %v522 = vshrl.u32 %v521, 7
    %v523 = vsub.s32 0, %v522
    %v524 = vrot.slane %v503, %v523
    %v525 = vlaneseq
    %v526 = vshrl.u32 %v525, 7
    %v527 = vsub.s32 1, %v526
    %v528 = vrot.slane %v503, %v527
    %v529 = vlaneseq
    %v530 = vshrl.u32 %v529, 7
    %v531 = vsub.s32 2, %v530
    %v532 = vrot.slane %v503, %v531
    %v533 = vlaneseq
    %v534 = vshrl.u32 %v533, 7
    %v535 = vsub.s32 3, %v534
    %v536 = vrot.slane %v503, %v535
    %v541 = vmul.f32 %v506, %v524
    %v542 = vmul.f32 %v506, %v528
    %v543 = vmul.f32 %v506, %v532
    %v544 = vmul.f32 %v506, %v536
    %v545 = vmul.f32 %v510, %v524
    %v546 = vmul.f32 %v510, %v528
    %v547 = vmul.f32 %v510, %v532
    %v548 = vmul.f32 %v510, %v536
    %v549 = vmul.f32 %v514, %v524
    %v550 = vmul.f32 %v514, %v528
    %v551 = vmul.f32 %v514, %v532
    %v552 = vmul.f32 %v514, %v536
    %v553 = vmul.f32 %v518, %v524
    %v554 = vmul.f32 %v518, %v528
    %v555 = vmul.f32 %v518, %v532
    %v556 = vmul.f32 %v518, %v536
    %v557 = vadd.f32 %v441, %v541
    %v558 = vadd.f32 %v442, %v542
    %v559 = vadd.f32 %v443, %v543
    %v560 = vadd.f32 %v444, %v544
    %v561 = vadd.f32 %v445, %v545
    %v562 = vadd.f32 %v446, %v546
    %v563 = vadd.f32 %v447, %v547
    %v564 = vadd.f32 %v448, %v548
    %v565 = vadd.f32 %v449, %v549
    %v566 = vadd.f32 %v450, %v550
    %v567 = vadd.f32 %v451, %v551
    %v568 = vadd.f32 %v452, %v552
    %v569 = vadd.f32 %v453, %v553
    %v570 = vadd.f32 %v454, %v554
    %v571 = vadd.f32 %v455, %v555
    %v572 = vadd.f32 %v456, %v556
    %vm573 = vcmp.ge.s32.totalorder %v93, 0
    %vm574 = vcmp.lt.s32.totalorder %v93, 128
    %vm575 = vmand %vm573, %vm574
    %v576 = vsel %vm575, %v92, 0.0
    %577 = vset.pattern.permute.xlu0 4
    %578 = vperm.xlu0 %577, %v94
    %v579 = vpop.permute.xlu0 %578
    %581 = vset.pattern.permute.xlu0 4
    %582 = vperm.xlu0 %581, %v95
    %v583 = vpop.permute.xlu0 %582
    %585 = vset.pattern.permute.xlu0 4
    %586 = vperm.xlu0 %585, %v96
    %v587 = vpop.permute.xlu0 %586
    %589 = vset.pattern.permute.xlu0 4
    %590 = vperm.xlu0 %589, %v97
    %v591 = vpop.permute.xlu0 %590
    %v594 = vlaneseq
    %v595 = vshrl.u32 %v594, 7
    %v596 = vsub.s32 0, %v595
    %v597 = vrot.slane %v576, %v596
    %v598 = vlaneseq
    %v599 = vshrl.u32 %v598, 7
    %v600 = vsub.s32 1, %v599
    %v601 = vrot.slane %v576, %v600
    %v602 = vlaneseq
    %v603 = vshrl.u32 %v602, 7
    %v604 = vsub.s32 2, %v603
    %v605 = vrot.slane %v576, %v604
    %v606 = vlaneseq
    %v607 = vshrl.u32 %v606, 7
    %v608 = vsub.s32 3, %v607
    %v609 = vrot.slane %v576, %v608
    %v614 = vmul.f32 %v579, %v597
    %v615 = vmul.f32 %v579, %v601
    %v616 = vmul.f32 %v579, %v605
    %v617 = vmul.f32 %v579, %v609
    %v618 = vmul.f32 %v583, %v597
    %v619 = vmul.f32 %v583, %v601
    %v620 = vmul.f32 %v583, %v605
    %v621 = vmul.f32 %v583, %v609
    %v622 = vmul.f32 %v587, %v597
    %v623 = vmul.f32 %v587, %v601
    %v624 = vmul.f32 %v587, %v605
    %v625 = vmul.f32 %v587, %v609
    %v626 = vmul.f32 %v591, %v597
    %v627 = vmul.f32 %v591, %v601
    %v628 = vmul.f32 %v591, %v605
    %v629 = vmul.f32 %v591, %v609
    %v630 = vadd.f32 %v557, %v614
    %v631 = vadd.f32 %v558, %v615
    %v632 = vadd.f32 %v559, %v616
    %v633 = vadd.f32 %v560, %v617
    %v634 = vadd.f32 %v561, %v618
    %v635 = vadd.f32 %v562, %v619
    %v636 = vadd.f32 %v563, %v620
    %v637 = vadd.f32 %v564, %v621
    %v638 = vadd.f32 %v565, %v622
    %v639 = vadd.f32 %v566, %v623
    %v640 = vadd.f32 %v567, %v624
    %v641 = vadd.f32 %v568, %v625
    %v642 = vadd.f32 %v569, %v626
    %v643 = vadd.f32 %v570, %v627
    %v644 = vadd.f32 %v571, %v628
    %v645 = vadd.f32 %v572, %v629
    %646 = vrot.lane.b32.xlu0 %v102, 127
    %v647 = vpop.permute.xlu0 %646
    %648 = vrot.lane.b32.xlu0 %v106, 127
    %v649 = vpop.permute.xlu0 %648
    %650 = vrot.lane.b32.xlu0 %v110, 127
    %v651 = vpop.permute.xlu0 %650
    %652 = vrot.lane.b32.xlu0 %v114, 127
    %v653 = vpop.permute.xlu0 %652
    %vm654 = vcmp.lt.s32.totalorder %v128, 127
    %v655 = vsel %vm654, %v651, %v653
    %v656 = vsel %vm654, %v649, %v651
    %v657 = vsel %vm654, %v647, %v649
    %v658 = vsel %vm654, %v653, %v647
    %v659 = vadd.s32 %v93, 1
    %vm660 = vcmp.ge.s32.totalorder %v659, 0
    %vm661 = vcmp.lt.s32.totalorder %v659, 128
    %vm662 = vmand %vm660, %vm661
    %v667 = vcombine.low %v657, %v656
    %v668 = vcombine.low %v655, %v658
    %v670 = vunpack.c.l.s4 1966171168
    %v671 = vunpack.c.0.s8 %v670
    %v672 = vlaneseq
    %v673 = vshrl.u32 %v672, 7
    %v674 = vsub.s32 %v671, %v673
    %v675 = vrot.slane %v667, %v674
    %v677 = vunpack.c.l.s4 1966171168
    %v678 = vunpack.c.0.s8 %v677
    %v679 = vlaneseq
    %v680 = vshrl.u32 %v679, 7
    %v681 = vsub.s32 %v678, %v680
    %v682 = vrot.slane %v668, %v681
    %v683 = vcombine.low %v675, %v682
    %v685 = vunpack.c.l.s4 1966171168
    %v686 = vunpack.c.0.s8 %v685
    %v687 = vlaneseq
    %v688 = vshrl.u32 %v687, 7
    %v689 = vsub.s32 %v686, %v688
    %v690 = vrot.slane %v683, %v689
    %v692 = vsel %vm662, %v690, 0.0
    %693 = vset.pattern.permute.xlu0 5
    %694 = vperm.xlu0 %693, %v94
    %v695 = vpop.permute.xlu0 %694
    %697 = vset.pattern.permute.xlu0 5
    %698 = vperm.xlu0 %697, %v95
    %v699 = vpop.permute.xlu0 %698
    %701 = vset.pattern.permute.xlu0 5
    %702 = vperm.xlu0 %701, %v96
    %v703 = vpop.permute.xlu0 %702
    %705 = vset.pattern.permute.xlu0 5
    %706 = vperm.xlu0 %705, %v97
    %v707 = vpop.permute.xlu0 %706
    %v710 = vlaneseq
    %v711 = vshrl.u32 %v710, 7
    %v712 = vsub.s32 0, %v711
    %v713 = vrot.slane %v692, %v712
    %v714 = vlaneseq
    %v715 = vshrl.u32 %v714, 7
    %v716 = vsub.s32 1, %v715
    %v717 = vrot.slane %v692, %v716
    %v718 = vlaneseq
    %v719 = vshrl.u32 %v718, 7
    %v720 = vsub.s32 2, %v719
    %v721 = vrot.slane %v692, %v720
    %v722 = vlaneseq
    %v723 = vshrl.u32 %v722, 7
    %v724 = vsub.s32 3, %v723
    %v725 = vrot.slane %v692, %v724
    %v730 = vmul.f32 %v695, %v713
    %v731 = vmul.f32 %v695, %v717
    %v732 = vmul.f32 %v695, %v721
    %v733 = vmul.f32 %v695, %v725
    %v734 = vmul.f32 %v699, %v713
    %v735 = vmul.f32 %v699, %v717
    %v736 = vmul.f32 %v699, %v721
    %v737 = vmul.f32 %v699, %v725
    %v738 = vmul.f32 %v703, %v713
    %v739 = vmul.f32 %v703, %v717
    %v740 = vmul.f32 %v703, %v721
    %v741 = vmul.f32 %v703, %v725
    %v742 = vmul.f32 %v707, %v713
    %v743 = vmul.f32 %v707, %v717
    %v744 = vmul.f32 %v707, %v721
    %v745 = vmul.f32 %v707, %v725
    %v746 = vadd.f32 %v630, %v730
    %v747 = vadd.f32 %v631, %v731
    %v748 = vadd.f32 %v632, %v732
    %v749 = vadd.f32 %v633, %v733
    %v750 = vadd.f32 %v634, %v734
    %v751 = vadd.f32 %v635, %v735
    %v752 = vadd.f32 %v636, %v736
    %v753 = vadd.f32 %v637, %v737
    %v754 = vadd.f32 %v638, %v738
    %v755 = vadd.f32 %v639, %v739
    %v756 = vadd.f32 %v640, %v740
    %v757 = vadd.f32 %v641, %v741
    %v758 = vadd.f32 %v642, %v742
    %v759 = vadd.f32 %v643, %v743
    %v760 = vadd.f32 %v644, %v744
    %v761 = vadd.f32 %v645, %v745
    %762 = vrot.lane.b32.xlu0 %v102, 126
    %v763 = vpop.permute.xlu0 %762
    %764 = vrot.lane.b32.xlu0 %v106, 126
    %v765 = vpop.permute.xlu0 %764
    %766 = vrot.lane.b32.xlu0 %v110, 126
    %v767 = vpop.permute.xlu0 %766
    %768 = vrot.lane.b32.xlu0 %v114, 126
    %v769 = vpop.permute.xlu0 %768
    %vm770 = vcmp.lt.s32.totalorder %v128, 126
    %v771 = vsel %vm770, %v767, %v769
    %v772 = vsel %vm770, %v765, %v767
    %v773 = vsel %vm770, %v763, %v765
    %v774 = vsel %vm770, %v769, %v763
    %v775 = vadd.s32 %v93, 2
    %vm776 = vcmp.ge.s32.totalorder %v775, 0
    %vm777 = vcmp.lt.s32.totalorder %v775, 128
    %vm778 = vmand %vm776, %vm777
    %v783 = vcombine.low %v773, %v772
    %v784 = vcombine.low %v771, %v774
    %v786 = vunpack.c.l.s4 1966171168
    %v787 = vunpack.c.0.s8 %v786
    %v788 = vlaneseq
    %v789 = vshrl.u32 %v788, 7
    %v790 = vsub.s32 %v787, %v789
    %v791 = vrot.slane %v783, %v790
    %v793 = vunpack.c.l.s4 1966171168
    %v794 = vunpack.c.0.s8 %v793
    %v795 = vlaneseq
    %v796 = vshrl.u32 %v795, 7
    %v797 = vsub.s32 %v794, %v796
    %v798 = vrot.slane %v784, %v797
    %v799 = vcombine.low %v791, %v798
    %v801 = vunpack.c.l.s4 1966171168
    %v802 = vunpack.c.0.s8 %v801
    %v803 = vlaneseq
    %v804 = vshrl.u32 %v803, 7
    %v805 = vsub.s32 %v802, %v804
    %v806 = vrot.slane %v799, %v805
    %v808 = vsel %vm778, %v806, 0.0
    %809 = vset.pattern.permute.xlu0 6
    %810 = vperm.xlu0 %809, %v94
    %v811 = vpop.permute.xlu0 %810
    %813 = vset.pattern.permute.xlu0 6
    %814 = vperm.xlu0 %813, %v95
    %v815 = vpop.permute.xlu0 %814
    %817 = vset.pattern.permute.xlu0 6
    %818 = vperm.xlu0 %817, %v96
    %v819 = vpop.permute.xlu0 %818
    %821 = vset.pattern.permute.xlu0 6
    %822 = vperm.xlu0 %821, %v97
    %v823 = vpop.permute.xlu0 %822
    %v826 = vlaneseq
    %v827 = vshrl.u32 %v826, 7
    %v828 = vsub.s32 0, %v827
    %v829 = vrot.slane %v808, %v828
    %v830 = vlaneseq
    %v831 = vshrl.u32 %v830, 7
    %v832 = vsub.s32 1, %v831
    %v833 = vrot.slane %v808, %v832
    %v834 = vlaneseq
    %v835 = vshrl.u32 %v834, 7
    %v836 = vsub.s32 2, %v835
    %v837 = vrot.slane %v808, %v836
    %v838 = vlaneseq
    %v839 = vshrl.u32 %v838, 7
    %v840 = vsub.s32 3, %v839
    %v841 = vrot.slane %v808, %v840
    %v846 = vmul.f32 %v811, %v829
    %v847 = vmul.f32 %v811, %v833
    %v848 = vmul.f32 %v811, %v837
    %v849 = vmul.f32 %v811, %v841
    %v850 = vmul.f32 %v815, %v829
    %v851 = vmul.f32 %v815, %v833
    %v852 = vmul.f32 %v815, %v837
    %v853 = vmul.f32 %v815, %v841
    %v854 = vmul.f32 %v819, %v829
    %v855 = vmul.f32 %v819, %v833
    %v856 = vmul.f32 %v819, %v837
    %v857 = vmul.f32 %v819, %v841
    %v858 = vmul.f32 %v823, %v829
    %v859 = vmul.f32 %v823, %v833
    %v860 = vmul.f32 %v823, %v837
    %v861 = vmul.f32 %v823, %v841
    %v862 = vadd.f32 %v746, %v846
    %v863 = vadd.f32 %v747, %v847
    %v864 = vadd.f32 %v748, %v848
    %v865 = vadd.f32 %v749, %v849
    %v866 = vadd.f32 %v750, %v850
    %v867 = vadd.f32 %v751, %v851
    %v868 = vadd.f32 %v752, %v852
    %v869 = vadd.f32 %v753, %v853
    %v870 = vadd.f32 %v754, %v854
    %v871 = vadd.f32 %v755, %v855
    %v872 = vadd.f32 %v756, %v856
    %v873 = vadd.f32 %v757, %v857
    %v874 = vadd.f32 %v758, %v858
    %v875 = vadd.f32 %v759, %v859
    %v876 = vadd.f32 %v760, %v860
    %v877 = vadd.f32 %v761, %v861
    %878 = vrot.lane.b32.xlu0 %v102, 125
    %v879 = vpop.permute.xlu0 %878
    %880 = vrot.lane.b32.xlu0 %v106, 125
    %v881 = vpop.permute.xlu0 %880
    %882 = vrot.lane.b32.xlu0 %v110, 125
    %v883 = vpop.permute.xlu0 %882
    %884 = vrot.lane.b32.xlu0 %v114, 125
    %v885 = vpop.permute.xlu0 %884
    %vm886 = vcmp.lt.s32.totalorder %v128, 125
    %v887 = vsel %vm886, %v883, %v885
    %v888 = vsel %vm886, %v881, %v883
    %v889 = vsel %vm886, %v879, %v881
    %v890 = vsel %vm886, %v885, %v879
    %v891 = vadd.s32 %v93, 3
    %vm892 = vcmp.ge.s32.totalorder %v891, 0
    %vm893 = vcmp.lt.s32.totalorder %v891, 128
    %vm894 = vmand %vm892, %vm893
    %v899 = vcombine.low %v889, %v888
    %v900 = vcombine.low %v887, %v890
    %v902 = vunpack.c.l.s4 1966171168
    %v903 = vunpack.c.0.s8 %v902
    %v904 = vlaneseq
    %v905 = vshrl.u32 %v904, 7
    %v906 = vsub.s32 %v903, %v905
    %v907 = vrot.slane %v899, %v906
    %v909 = vunpack.c.l.s4 1966171168
    %v910 = vunpack.c.0.s8 %v909
    %v911 = vlaneseq
    %v912 = vshrl.u32 %v911, 7
    %v913 = vsub.s32 %v910, %v912
    %v914 = vrot.slane %v900, %v913
    %v915 = vcombine.low %v907, %v914
    %v917 = vunpack.c.l.s4 1966171168
    %v918 = vunpack.c.0.s8 %v917
    %v919 = vlaneseq
    %v920 = vshrl.u32 %v919, 7
    %v921 = vsub.s32 %v918, %v920
    %v922 = vrot.slane %v915, %v921
    %v924 = vsel %vm894, %v922, 0.0
    %925 = vset.pattern.permute.xlu0 7
    %926 = vperm.xlu0 %925, %v94
    %v927 = vpop.permute.xlu0 %926
    %929 = vset.pattern.permute.xlu0 7
    %930 = vperm.xlu0 %929, %v95
    %v931 = vpop.permute.xlu0 %930
    %933 = vset.pattern.permute.xlu0 7
    %934 = vperm.xlu0 %933, %v96
    %v935 = vpop.permute.xlu0 %934
    %937 = vset.pattern.permute.xlu0 7
    %938 = vperm.xlu0 %937, %v97
    %v939 = vpop.permute.xlu0 %938
    %v942 = vlaneseq
    %v943 = vshrl.u32 %v942, 7
    %v944 = vsub.s32 0, %v943
    %v945 = vrot.slane %v924, %v944
    %v946 = vlaneseq
    %v947 = vshrl.u32 %v946, 7
    %v948 = vsub.s32 1, %v947
    %v949 = vrot.slane %v924, %v948
    %v950 = vlaneseq
    %v951 = vshrl.u32 %v950, 7
    %v952 = vsub.s32 2, %v951
    %v953 = vrot.slane %v924, %v952
    %v954 = vlaneseq
    %v955 = vshrl.u32 %v954, 7
    %v956 = vsub.s32 3, %v955
    %v957 = vrot.slane %v924, %v956
    %v962 = vmul.f32 %v927, %v945
    %v963 = vmul.f32 %v927, %v949
    %v964 = vmul.f32 %v927, %v953
    %v965 = vmul.f32 %v927, %v957
    %v966 = vmul.f32 %v931, %v945
    %v967 = vmul.f32 %v931, %v949
    %v968 = vmul.f32 %v931, %v953
    %v969 = vmul.f32 %v931, %v957
    %v970 = vmul.f32 %v935, %v945
    %v971 = vmul.f32 %v935, %v949
    %v972 = vmul.f32 %v935, %v953
    %v973 = vmul.f32 %v935, %v957
    %v974 = vmul.f32 %v939, %v945
    %v975 = vmul.f32 %v939, %v949
    %v976 = vmul.f32 %v939, %v953
    %v977 = vmul.f32 %v939, %v957
    %v978 = vadd.f32 %v862, %v962
    %v979 = vadd.f32 %v863, %v963
    %v980 = vadd.f32 %v864, %v964
    %v981 = vadd.f32 %v865, %v965
    %v982 = vadd.f32 %v866, %v966
    %v983 = vadd.f32 %v867, %v967
    %v984 = vadd.f32 %v868, %v968
    %v985 = vadd.f32 %v869, %v969
    %v986 = vadd.f32 %v870, %v970
    %v987 = vadd.f32 %v871, %v971
    %v988 = vadd.f32 %v872, %v972
    %v989 = vadd.f32 %v873, %v973
    %v990 = vadd.f32 %v874, %v974
    %v991 = vadd.f32 %v875, %v975
    %v992 = vadd.f32 %v876, %v976
    %v993 = vadd.f32 %v877, %v977
    %994 = vrot.lane.b32.xlu0 %v102, 124
    %v995 = vpop.permute.xlu0 %994
    %996 = vrot.lane.b32.xlu0 %v106, 124
    %v997 = vpop.permute.xlu0 %996
    %998 = vrot.lane.b32.xlu0 %v110, 124
    %v999 = vpop.permute.xlu0 %998
    %1000 = vrot.lane.b32.xlu0 %v114, 124
    %v1001 = vpop.permute.xlu0 %1000
    %vm1002 = vcmp.lt.s32.totalorder %v128, 124
    %v1003 = vsel %vm1002, %v999, %v1001
    %v1004 = vsel %vm1002, %v997, %v999
    %v1005 = vsel %vm1002, %v995, %v997
    %v1006 = vsel %vm1002, %v1001, %v995
    %v1007 = vadd.s32 %v93, 4
    %vm1008 = vcmp.ge.s32.totalorder %v1007, 0
    %vm1009 = vcmp.lt.s32.totalorder %v1007, 128
    %vm1010 = vmand %vm1008, %vm1009
    %v1015 = vcombine.low %v1005, %v1004
    %v1016 = vcombine.low %v1003, %v1006
    %v1018 = vunpack.c.l.s4 1966171168
    %v1019 = vunpack.c.0.s8 %v1018
    %v1020 = vlaneseq
    %v1021 = vshrl.u32 %v1020, 7
    %v1022 = vsub.s32 %v1019, %v1021
    %v1023 = vrot.slane %v1015, %v1022
    %v1025 = vunpack.c.l.s4 1966171168
    %v1026 = vunpack.c.0.s8 %v1025
    %v1027 = vlaneseq
    %v1028 = vshrl.u32 %v1027, 7
    %v1029 = vsub.s32 %v1026, %v1028
    %v1030 = vrot.slane %v1016, %v1029
    %v1031 = vcombine.low %v1023, %v1030
    %v1033 = vunpack.c.l.s4 1966171168
    %v1034 = vunpack.c.0.s8 %v1033
    %v1035 = vlaneseq
    %v1036 = vshrl.u32 %v1035, 7
    %v1037 = vsub.s32 %v1034, %v1036
    %v1038 = vrot.slane %v1031, %v1037
    %v1040 = vsel %vm1010, %v1038, 0.0
    %1041 = vset.pattern.permute.xlu0 8
    %1042 = vperm.xlu0 %1041, %v94
    %v1043 = vpop.permute.xlu0 %1042
    %1045 = vset.pattern.permute.xlu0 8
    %1046 = vperm.xlu0 %1045, %v95
    %v1047 = vpop.permute.xlu0 %1046
    %1049 = vset.pattern.permute.xlu0 8
    %1050 = vperm.xlu0 %1049, %v96
    %v1051 = vpop.permute.xlu0 %1050
    %1053 = vset.pattern.permute.xlu0 8
    %1054 = vperm.xlu0 %1053, %v97
    %v1055 = vpop.permute.xlu0 %1054
    %v1058 = vlaneseq
    %v1059 = vshrl.u32 %v1058, 7
    %v1060 = vsub.s32 0, %v1059
    %v1061 = vrot.slane %v1040, %v1060
    %v1062 = vlaneseq
    %v1063 = vshrl.u32 %v1062, 7
    %v1064 = vsub.s32 1, %v1063
    %v1065 = vrot.slane %v1040, %v1064
    %v1066 = vlaneseq
    %v1067 = vshrl.u32 %v1066, 7
    %v1068 = vsub.s32 2, %v1067
    %v1069 = vrot.slane %v1040, %v1068
    %v1070 = vlaneseq
    %v1071 = vshrl.u32 %v1070, 7
    %v1072 = vsub.s32 3, %v1071
    %v1073 = vrot.slane %v1040, %v1072
    %v1078 = vmul.f32 %v1043, %v1061
    %v1079 = vmul.f32 %v1043, %v1065
    %v1080 = vmul.f32 %v1043, %v1069
    %v1081 = vmul.f32 %v1043, %v1073
    %v1082 = vmul.f32 %v1047, %v1061
    %v1083 = vmul.f32 %v1047, %v1065
    %v1084 = vmul.f32 %v1047, %v1069
    %v1085 = vmul.f32 %v1047, %v1073
    %v1086 = vmul.f32 %v1051, %v1061
    %v1087 = vmul.f32 %v1051, %v1065
    %v1088 = vmul.f32 %v1051, %v1069
    %v1089 = vmul.f32 %v1051, %v1073
    %v1090 = vmul.f32 %v1055, %v1061
    %v1091 = vmul.f32 %v1055, %v1065
    %v1092 = vmul.f32 %v1055, %v1069
    %v1093 = vmul.f32 %v1055, %v1073
    %v1094 = vadd.f32 %v978, %v1078
    %v1095 = vadd.f32 %v979, %v1079
    %v1096 = vadd.f32 %v980, %v1080
    %v1097 = vadd.f32 %v981, %v1081
    %v1098 = vadd.f32 %v982, %v1082
    %v1099 = vadd.f32 %v983, %v1083
    %v1100 = vadd.f32 %v984, %v1084
    %v1101 = vadd.f32 %v985, %v1085
    %v1102 = vadd.f32 %v986, %v1086
    %v1103 = vadd.f32 %v987, %v1087
    %v1104 = vadd.f32 %v988, %v1088
    %v1105 = vadd.f32 %v989, %v1089
    %v1106 = vadd.f32 %v990, %v1090
    %v1107 = vadd.f32 %v991, %v1091
    %v1108 = vadd.f32 %v992, %v1092
    %v1109 = vadd.f32 %v993, %v1093
    %v1110 = vld [vmem:[%s7] sm:$0xff]
    %v1111 = vld [vmem:[%s7 + $0x8] sm:$0xff]
    %v1112 = vld [vmem:[%s7 + $0x10] sm:$0xff]
    %v1113 = vld [vmem:[%s7 + $0x18] sm:$0xff]
    %v1114 = vld [vmem:[%s8] sm:$0xff]
    %v1115 = vld [vmem:[%s8 + $0x8] sm:$0xff]
    %v1116 = vld [vmem:[%s8 + $0x10] sm:$0xff]
    %v1117 = vld [vmem:[%s8 + $0x18] sm:$0xff]
    %v1118 = vadd.f32 %v1094, %v1095
    %v1119 = vadd.f32 %v1118, %v1096
    %v1120 = vadd.f32 %v1119, %v1097
    %1121 = vadd.xlane.f32.xlu0 %v1120
    %v1122 = vpop.xlane.xlu0 %1121
    %v1123 = vadd.f32 %v1098, %v1099
    %v1124 = vadd.f32 %v1123, %v1100
    %v1125 = vadd.f32 %v1124, %v1101
    %1126 = vadd.xlane.f32.xlu0 %v1125
    %v1127 = vpop.xlane.xlu0 %1126
    %v1128 = vadd.f32 %v1102, %v1103
    %v1129 = vadd.f32 %v1128, %v1104
    %v1130 = vadd.f32 %v1129, %v1105
    %1131 = vadd.xlane.f32.xlu0 %v1130
    %v1132 = vpop.xlane.xlu0 %1131
    %v1133 = vadd.f32 %v1106, %v1107
    %v1134 = vadd.f32 %v1133, %v1108
    %v1135 = vadd.f32 %v1134, %v1109
    %1136 = vadd.xlane.f32.xlu0 %v1135
    %v1137 = vpop.xlane.xlu0 %1136
    %v1138 = vrcp.pop 512.0
    %v1139 = vmul.f32 %v1122, %v1138
    %v1140 = vmul.f32 %v1127, %v1138
    %v1141 = vmul.f32 %v1132, %v1138
    %v1142 = vmul.f32 %v1137, %v1138
    %v1143 = vsub.f32 %v1094, %v1139
    %v1144 = vsub.f32 %v1095, %v1139
    %v1145 = vsub.f32 %v1096, %v1139
    %v1146 = vsub.f32 %v1097, %v1139
    %v1147 = vsub.f32 %v1098, %v1140
    %v1148 = vsub.f32 %v1099, %v1140
    %v1149 = vsub.f32 %v1100, %v1140
    %v1150 = vsub.f32 %v1101, %v1140
    %v1151 = vsub.f32 %v1102, %v1141
    %v1152 = vsub.f32 %v1103, %v1141
    %v1153 = vsub.f32 %v1104, %v1141
    %v1154 = vsub.f32 %v1105, %v1141
    %v1155 = vsub.f32 %v1106, %v1142
    %v1156 = vsub.f32 %v1107, %v1142
    %v1157 = vsub.f32 %v1108, %v1142
    %v1158 = vsub.f32 %v1109, %v1142
    %v1159 = vmul.f32 %v1143, %v1143
    %v1160 = vmul.f32 %v1144, %v1144
    %v1161 = vmul.f32 %v1145, %v1145
    %v1162 = vmul.f32 %v1146, %v1146
    %v1163 = vmul.f32 %v1147, %v1147
    %v1164 = vmul.f32 %v1148, %v1148
    %v1165 = vmul.f32 %v1149, %v1149
    %v1166 = vmul.f32 %v1150, %v1150
    %v1167 = vmul.f32 %v1151, %v1151
    %v1168 = vmul.f32 %v1152, %v1152
    %v1169 = vmul.f32 %v1153, %v1153
    %v1170 = vmul.f32 %v1154, %v1154
    %v1171 = vmul.f32 %v1155, %v1155
    %v1172 = vmul.f32 %v1156, %v1156
    %v1173 = vmul.f32 %v1157, %v1157
    %v1174 = vmul.f32 %v1158, %v1158
    %v1175 = vadd.f32 %v1159, %v1160
    %v1176 = vadd.f32 %v1175, %v1161
    %v1177 = vadd.f32 %v1176, %v1162
    %1178 = vadd.xlane.f32.xlu0 %v1177
    %v1179 = vpop.xlane.xlu0 %1178
    %v1180 = vadd.f32 %v1163, %v1164
    %v1181 = vadd.f32 %v1180, %v1165
    %v1182 = vadd.f32 %v1181, %v1166
    %1183 = vadd.xlane.f32.xlu0 %v1182
    %v1184 = vpop.xlane.xlu0 %1183
    %v1185 = vadd.f32 %v1167, %v1168
    %v1186 = vadd.f32 %v1185, %v1169
    %v1187 = vadd.f32 %v1186, %v1170
    %1188 = vadd.xlane.f32.xlu0 %v1187
    %v1189 = vpop.xlane.xlu0 %1188
    %v1190 = vadd.f32 %v1171, %v1172
    %v1191 = vadd.f32 %v1190, %v1173
    %v1192 = vadd.f32 %v1191, %v1174
    %1193 = vadd.xlane.f32.xlu0 %v1192
    %v1194 = vpop.xlane.xlu0 %1193
    %v1195 = vmul.f32 %v1179, %v1138
    %v1196 = vmul.f32 %v1184, %v1138
    %v1197 = vmul.f32 %v1189, %v1138
    %v1198 = vmul.f32 %v1194, %v1138
    %v1199 = vadd.f32 %v1195, 1e-05
    %v1200 = vadd.f32 %v1196, 1e-05
    %v1201 = vadd.f32 %v1197, 1e-05
    %v1202 = vadd.f32 %v1198, 1e-05
    %v1203 = vrsqrt.pop %v1199
    %v1204 = vrsqrt.pop %v1200
    %v1205 = vrsqrt.pop %v1201
    %v1206 = vrsqrt.pop %v1202
    %v1207 = vmul.f32 %v1110, %v1203
    %v1208 = vmul.f32 %v1111, %v1204
    %v1209 = vmul.f32 %v1112, %v1205
    %v1210 = vmul.f32 %v1113, %v1206
    %1212 = vset.pattern.permute.xlu0 0
    %1213 = vperm.xlu0 %1212, %v1207
    %v1214 = vpop.permute.xlu0 %1213
    %1217 = vset.pattern.permute.xlu0 0
    %1218 = vperm.xlu0 %1217, %v1208
    %v1219 = vpop.permute.xlu0 %1218
    %1222 = vset.pattern.permute.xlu0 0
    %1223 = vperm.xlu0 %1222, %v1209
    %v1224 = vpop.permute.xlu0 %1223
    %1227 = vset.pattern.permute.xlu0 0
    %1228 = vperm.xlu0 %1227, %v1210
    %v1229 = vpop.permute.xlu0 %1228
    %v1231 = vmul.f32 %v1143, %v1214
    %v1232 = vmul.f32 %v1144, %v1214
    %v1233 = vmul.f32 %v1145, %v1214
    %v1234 = vmul.f32 %v1146, %v1214
    %v1235 = vmul.f32 %v1147, %v1219
    %v1236 = vmul.f32 %v1148, %v1219
    %v1237 = vmul.f32 %v1149, %v1219
    %v1238 = vmul.f32 %v1150, %v1219
    %v1239 = vmul.f32 %v1151, %v1224
    %v1240 = vmul.f32 %v1152, %v1224
    %v1241 = vmul.f32 %v1153, %v1224
    %v1242 = vmul.f32 %v1154, %v1224
    %v1243 = vmul.f32 %v1155, %v1229
    %v1244 = vmul.f32 %v1156, %v1229
    %v1245 = vmul.f32 %v1157, %v1229
    %v1246 = vmul.f32 %v1158, %v1229
    %1248 = vset.pattern.permute.xlu0 0
    %1249 = vperm.xlu0 %1248, %v1114
    %v1250 = vpop.permute.xlu0 %1249
    %1253 = vset.pattern.permute.xlu0 0
    %1254 = vperm.xlu0 %1253, %v1115
    %v1255 = vpop.permute.xlu0 %1254
    %1258 = vset.pattern.permute.xlu0 0
    %1259 = vperm.xlu0 %1258, %v1116
    %v1260 = vpop.permute.xlu0 %1259
    %1263 = vset.pattern.permute.xlu0 0
    %1264 = vperm.xlu0 %1263, %v1117
    %v1265 = vpop.permute.xlu0 %1264
    %v1267 = vadd.f32 %v1231, %v1250
    %v1268 = vadd.f32 %v1232, %v1250
    %v1269 = vadd.f32 %v1233, %v1250
    %v1270 = vadd.f32 %v1234, %v1250
    %v1271 = vadd.f32 %v1235, %v1255
    %v1272 = vadd.f32 %v1236, %v1255
    %v1273 = vadd.f32 %v1237, %v1255
    %v1274 = vadd.f32 %v1238, %v1255
    %v1275 = vadd.f32 %v1239, %v1260
    %v1276 = vadd.f32 %v1240, %v1260
    %v1277 = vadd.f32 %v1241, %v1260
    %v1278 = vadd.f32 %v1242, %v1260
    %v1279 = vadd.f32 %v1243, %v1265
    %v1280 = vadd.f32 %v1244, %v1265
    %v1281 = vadd.f32 %v1245, %v1265
    %v1282 = vadd.f32 %v1246, %v1265
    %v1283 = vmax.f32 %v1267, 0.0
    %v1284 = vmax.f32 %v1268, 0.0
    %v1285 = vmax.f32 %v1269, 0.0
    %v1286 = vmax.f32 %v1270, 0.0
    %v1287 = vmax.f32 %v1271, 0.0
    %v1288 = vmax.f32 %v1272, 0.0
    %v1289 = vmax.f32 %v1273, 0.0
    %v1290 = vmax.f32 %v1274, 0.0
    %v1291 = vmax.f32 %v1275, 0.0
    %v1292 = vmax.f32 %v1276, 0.0
    %v1293 = vmax.f32 %v1277, 0.0
    %v1294 = vmax.f32 %v1278, 0.0
    %v1295 = vmax.f32 %v1279, 0.0
    %v1296 = vmax.f32 %v1280, 0.0
    %v1297 = vmax.f32 %v1281, 0.0
    %v1298 = vmax.f32 %v1282, 0.0
    %v1299 = vld [vmem:[#allocation4] sm:$0xff]
    %v1300 = vld [vmem:[#allocation4 + $0x8] sm:$0xff]
    %v1301 = vld [vmem:[#allocation4 + $0x10] sm:$0xff]
    %v1302 = vld [vmem:[#allocation4 + $0x18] sm:$0xff]
    %v1303 = vld [vmem:[#allocation4 + $0x20] sm:$0xff]
    %v1304 = vld [vmem:[#allocation4 + $0x28] sm:$0xff]
    %v1305 = vld [vmem:[#allocation4 + $0x30] sm:$0xff]
    %v1306 = vld [vmem:[#allocation4 + $0x38] sm:$0xff]
    %v1307 = vld [vmem:[#allocation4 + $0x40] sm:$0xff]
    %v1308 = vld [vmem:[#allocation4 + $0x48] sm:$0xff]
    %v1309 = vld [vmem:[#allocation4 + $0x50] sm:$0xff]
    %v1310 = vld [vmem:[#allocation4 + $0x58] sm:$0xff]
    %v1311 = vld [vmem:[#allocation4 + $0x60] sm:$0xff]
    %v1312 = vld [vmem:[#allocation4 + $0x68] sm:$0xff]
    %v1313 = vld [vmem:[#allocation4 + $0x70] sm:$0xff]
    %v1314 = vld [vmem:[#allocation4 + $0x78] sm:$0xff]
    %v1315 = vld [vmem:[#allocation4 + $0x80] sm:$0xff]
    %v1316 = vld [vmem:[#allocation4 + $0x88] sm:$0xff]
    %v1317 = vld [vmem:[#allocation4 + $0x90] sm:$0xff]
    %v1318 = vld [vmem:[#allocation4 + $0x98] sm:$0xff]
    %v1319 = vld [vmem:[#allocation4 + $0xa0] sm:$0xff]
    %v1320 = vld [vmem:[#allocation4 + $0xa8] sm:$0xff]
    %v1321 = vld [vmem:[#allocation4 + $0xb0] sm:$0xff]
    %v1322 = vld [vmem:[#allocation4 + $0xb8] sm:$0xff]
    %v1323 = vld [vmem:[#allocation4 + $0xc0] sm:$0xff]
    %v1324 = vld [vmem:[#allocation4 + $0xc8] sm:$0xff]
    %v1325 = vld [vmem:[#allocation4 + $0xd0] sm:$0xff]
    %v1326 = vld [vmem:[#allocation4 + $0xd8] sm:$0xff]
    %v1327 = vld [vmem:[#allocation4 + $0xe0] sm:$0xff]
    %v1328 = vld [vmem:[#allocation4 + $0xe8] sm:$0xff]
    %v1329 = vld [vmem:[#allocation4 + $0xf0] sm:$0xff]
    %v1330 = vld [vmem:[#allocation4 + $0xf8] sm:$0xff]
    %v1331 = vld [vmem:[#allocation4 + $0x100] sm:$0xff]
    %v1332 = vld [vmem:[#allocation4 + $0x108] sm:$0xff]
    %v1333 = vld [vmem:[#allocation4 + $0x110] sm:$0xff]
    %v1334 = vld [vmem:[#allocation4 + $0x118] sm:$0xff]
    %v1335 = vld [vmem:[#allocation4 + $0x120] sm:$0xff]
    %v1336 = vld [vmem:[#allocation4 + $0x128] sm:$0xff]
    %v1337 = vld [vmem:[#allocation4 + $0x130] sm:$0xff]
    %v1338 = vld [vmem:[#allocation4 + $0x138] sm:$0xff]
    %v1339 = vld [vmem:[#allocation4 + $0x140] sm:$0xff]
    %v1340 = vld [vmem:[#allocation4 + $0x148] sm:$0xff]
    %v1341 = vld [vmem:[#allocation4 + $0x150] sm:$0xff]
    %v1342 = vld [vmem:[#allocation4 + $0x158] sm:$0xff]
    %v1343 = vld [vmem:[#allocation4 + $0x160] sm:$0xff]
    %v1344 = vld [vmem:[#allocation4 + $0x168] sm:$0xff]
    %v1345 = vld [vmem:[#allocation4 + $0x170] sm:$0xff]
    %v1346 = vld [vmem:[#allocation4 + $0x178] sm:$0xff]
    %v1347 = vld [vmem:[#allocation4 + $0x180] sm:$0xff]
    %v1348 = vld [vmem:[#allocation4 + $0x188] sm:$0xff]
    %v1349 = vld [vmem:[#allocation4 + $0x190] sm:$0xff]
    %v1350 = vld [vmem:[#allocation4 + $0x198] sm:$0xff]
    %v1351 = vld [vmem:[#allocation4 + $0x1a0] sm:$0xff]
    %v1352 = vld [vmem:[#allocation4 + $0x1a8] sm:$0xff]
    %v1353 = vld [vmem:[#allocation4 + $0x1b0] sm:$0xff]
    %v1354 = vld [vmem:[#allocation4 + $0x1b8] sm:$0xff]
    %v1355 = vld [vmem:[#allocation4 + $0x1c0] sm:$0xff]
    %v1356 = vld [vmem:[#allocation4 + $0x1c8] sm:$0xff]
    %v1357 = vld [vmem:[#allocation4 + $0x1d0] sm:$0xff]
    %v1358 = vld [vmem:[#allocation4 + $0x1d8] sm:$0xff]
    %v1359 = vld [vmem:[#allocation4 + $0x1e0] sm:$0xff]
    %v1360 = vld [vmem:[#allocation4 + $0x1e8] sm:$0xff]
    %v1361 = vld [vmem:[#allocation4 + $0x1f0] sm:$0xff]
    %v1362 = vld [vmem:[#allocation4 + $0x1f8] sm:$0xff]
    %v1363 = vld [vmem:[#allocation4 + $0x200] sm:$0xff]
    %v1364 = vld [vmem:[#allocation4 + $0x208] sm:$0xff]
    %v1365 = vld [vmem:[#allocation4 + $0x210] sm:$0xff]
    %v1366 = vld [vmem:[#allocation4 + $0x218] sm:$0xff]
    %v1367 = vld [vmem:[#allocation4 + $0x220] sm:$0xff]
    %v1368 = vld [vmem:[#allocation4 + $0x228] sm:$0xff]
    %v1369 = vld [vmem:[#allocation4 + $0x230] sm:$0xff]
    %v1370 = vld [vmem:[#allocation4 + $0x238] sm:$0xff]
    %v1371 = vld [vmem:[#allocation4 + $0x240] sm:$0xff]
    %v1372 = vld [vmem:[#allocation4 + $0x248] sm:$0xff]
    %v1373 = vld [vmem:[#allocation4 + $0x250] sm:$0xff]
    %v1374 = vld [vmem:[#allocation4 + $0x258] sm:$0xff]
    %v1375 = vld [vmem:[#allocation4 + $0x260] sm:$0xff]
    %v1376 = vld [vmem:[#allocation4 + $0x268] sm:$0xff]
    %v1377 = vld [vmem:[#allocation4 + $0x270] sm:$0xff]
    %v1378 = vld [vmem:[#allocation4 + $0x278] sm:$0xff]
    %v1379 = vld [vmem:[#allocation4 + $0x280] sm:$0xff]
    %v1380 = vld [vmem:[#allocation4 + $0x288] sm:$0xff]
    %v1381 = vld [vmem:[#allocation4 + $0x290] sm:$0xff]
    %v1382 = vld [vmem:[#allocation4 + $0x298] sm:$0xff]
    %v1383 = vld [vmem:[#allocation4 + $0x2a0] sm:$0xff]
    %v1384 = vld [vmem:[#allocation4 + $0x2a8] sm:$0xff]
    %v1385 = vld [vmem:[#allocation4 + $0x2b0] sm:$0xff]
    %v1386 = vld [vmem:[#allocation4 + $0x2b8] sm:$0xff]
    %v1387 = vld [vmem:[#allocation4 + $0x2c0] sm:$0xff]
    %v1388 = vld [vmem:[#allocation4 + $0x2c8] sm:$0xff]
    %v1389 = vld [vmem:[#allocation4 + $0x2d0] sm:$0xff]
    %v1390 = vld [vmem:[#allocation4 + $0x2d8] sm:$0xff]
    %v1391 = vld [vmem:[#allocation4 + $0x2e0] sm:$0xff]
    %v1392 = vld [vmem:[#allocation4 + $0x2e8] sm:$0xff]
    %v1393 = vld [vmem:[#allocation4 + $0x2f0] sm:$0xff]
    %v1394 = vld [vmem:[#allocation4 + $0x2f8] sm:$0xff]
    %v1395 = vld [vmem:[#allocation4 + $0x300] sm:$0xff]
    %v1396 = vld [vmem:[#allocation4 + $0x308] sm:$0xff]
    %v1397 = vld [vmem:[#allocation4 + $0x310] sm:$0xff]
    %v1398 = vld [vmem:[#allocation4 + $0x318] sm:$0xff]
    %v1399 = vld [vmem:[#allocation4 + $0x320] sm:$0xff]
    %v1400 = vld [vmem:[#allocation4 + $0x328] sm:$0xff]
    %v1401 = vld [vmem:[#allocation4 + $0x330] sm:$0xff]
    %v1402 = vld [vmem:[#allocation4 + $0x338] sm:$0xff]
    %v1403 = vld [vmem:[#allocation4 + $0x340] sm:$0xff]
    %v1404 = vld [vmem:[#allocation4 + $0x348] sm:$0xff]
    %v1405 = vld [vmem:[#allocation4 + $0x350] sm:$0xff]
    %v1406 = vld [vmem:[#allocation4 + $0x358] sm:$0xff]
    %v1407 = vld [vmem:[#allocation4 + $0x360] sm:$0xff]
    %v1408 = vld [vmem:[#allocation4 + $0x368] sm:$0xff]
    %v1409 = vld [vmem:[#allocation4 + $0x370] sm:$0xff]
    %v1410 = vld [vmem:[#allocation4 + $0x378] sm:$0xff]
    %v1411 = vld [vmem:[#allocation4 + $0x380] sm:$0xff]
    %v1412 = vld [vmem:[#allocation4 + $0x388] sm:$0xff]
    %v1413 = vld [vmem:[#allocation4 + $0x390] sm:$0xff]
    %v1414 = vld [vmem:[#allocation4 + $0x398] sm:$0xff]
    %v1415 = vld [vmem:[#allocation4 + $0x3a0] sm:$0xff]
    %v1416 = vld [vmem:[#allocation4 + $0x3a8] sm:$0xff]
    %v1417 = vld [vmem:[#allocation4 + $0x3b0] sm:$0xff]
    %v1418 = vld [vmem:[#allocation4 + $0x3b8] sm:$0xff]
    %v1419 = vld [vmem:[#allocation4 + $0x3c0] sm:$0xff]
    %v1420 = vld [vmem:[#allocation4 + $0x3c8] sm:$0xff]
    %v1421 = vld [vmem:[#allocation4 + $0x3d0] sm:$0xff]
    %v1422 = vld [vmem:[#allocation4 + $0x3d8] sm:$0xff]
    %v1423 = vld [vmem:[#allocation4 + $0x3e0] sm:$0xff]
    %v1424 = vld [vmem:[#allocation4 + $0x3e8] sm:$0xff]
    %v1425 = vld [vmem:[#allocation4 + $0x3f0] sm:$0xff]
    %v1426 = vld [vmem:[#allocation4 + $0x3f8] sm:$0xff]
    %1427 = vrot.lane.b32.xlu0 %v1283, 127
    %v1428 = vpop.permute.xlu0 %1427
    %1429 = vrot.lane.b32.xlu0 %v1287, 127
    %v1430 = vpop.permute.xlu0 %1429
    %1431 = vrot.lane.b32.xlu0 %v1291, 127
    %v1432 = vpop.permute.xlu0 %1431
    %1433 = vrot.lane.b32.xlu0 %v1295, 127
    %v1434 = vpop.permute.xlu0 %1433
    %1435 = vrot.lane.b32.xlu0 %v1284, 127
    %v1436 = vpop.permute.xlu0 %1435
    %1437 = vrot.lane.b32.xlu0 %v1288, 127
    %v1438 = vpop.permute.xlu0 %1437
    %1439 = vrot.lane.b32.xlu0 %v1292, 127
    %v1440 = vpop.permute.xlu0 %1439
    %1441 = vrot.lane.b32.xlu0 %v1296, 127
    %v1442 = vpop.permute.xlu0 %1441
    %1443 = vrot.lane.b32.xlu0 %v1285, 127
    %v1444 = vpop.permute.xlu0 %1443
    %1445 = vrot.lane.b32.xlu0 %v1289, 127
    %v1446 = vpop.permute.xlu0 %1445
    %1447 = vrot.lane.b32.xlu0 %v1293, 127
    %v1448 = vpop.permute.xlu0 %1447
    %1449 = vrot.lane.b32.xlu0 %v1297, 127
    %v1450 = vpop.permute.xlu0 %1449
    %1451 = vrot.lane.b32.xlu0 %v1286, 127
    %v1452 = vpop.permute.xlu0 %1451
    %1453 = vrot.lane.b32.xlu0 %v1290, 127
    %v1454 = vpop.permute.xlu0 %1453
    %1455 = vrot.lane.b32.xlu0 %v1294, 127
    %v1456 = vpop.permute.xlu0 %1455
    %1457 = vrot.lane.b32.xlu0 %v1298, 127
    %v1458 = vpop.permute.xlu0 %1457
    %v1459 = vsel %vm654, %v1444, %v1452
    %v1460 = vsel %vm654, %v1446, %v1454
    %v1461 = vsel %vm654, %v1448, %v1456
    %v1462 = vsel %vm654, %v1450, %v1458
    %v1463 = vsel %vm654, %v1436, %v1444
    %v1464 = vsel %vm654, %v1438, %v1446
    %v1465 = vsel %vm654, %v1440, %v1448
    %v1466 = vsel %vm654, %v1442, %v1450
    %v1467 = vsel %vm654, %v1428, %v1436
    %v1468 = vsel %vm654, %v1430, %v1438
    %v1469 = vsel %vm654, %v1432, %v1440
    %v1470 = vsel %vm654, %v1434, %v1442
    %v1471 = vsel %vm654, %v1452, %v1428
    %v1472 = vsel %vm654, %v1454, %v1430
    %v1473 = vsel %vm654, %v1456, %v1432
    %v1474 = vsel %vm654, %v1458, %v1434
    %v1475 = vmax.f32 %v1283, %v1467
    %v1476 = vmax.f32 %v1284, %v1463
    %v1477 = vmax.f32 %v1285, %v1459
    %v1478 = vmax.f32 %v1286, %v1471
    %v1479 = vmax.f32 %v1287, %v1468
    %v1480 = vmax.f32 %v1288, %v1464
    %v1481 = vmax.f32 %v1289, %v1460
    %v1482 = vmax.f32 %v1290, %v1472
    %v1483 = vmax.f32 %v1291, %v1469
    %v1484 = vmax.f32 %v1292, %v1465
    %v1485 = vmax.f32 %v1293, %v1461
    %v1486 = vmax.f32 %v1294, %v1473
    %v1487 = vmax.f32 %v1295, %v1470
    %v1488 = vmax.f32 %v1296, %v1466
    %v1489 = vmax.f32 %v1297, %v1462
    %v1490 = vmax.f32 %v1298, %v1474
    %1491 = vmatprep.subr.mxu0 %v1330
    %1492 = vmatpush1.msra.mxu0 %v1329
    %1493 = vmatprep.subr.mxu0 %v1328
    %1494 = vmatpush1.msra.mxu0 %v1327
    %1495 = vmatprep.subr.mxu0 %v1326
    %1496 = vmatpush1.msra.mxu0 %v1325
    %1497 = vmatprep.subr.mxu0 %v1324
    %1498 = vmatpush1.msra.mxu0 %v1323
    %1499 = vmatprep.subr.mxu0 %v1322
    %1500 = vmatpush1.msra.mxu0 %v1321
    %1501 = vmatprep.subr.mxu0 %v1320
    %1502 = vmatpush1.msra.mxu0 %v1319
    %1503 = vmatprep.subr.mxu0 %v1318
    %1504 = vmatpush1.msra.mxu0 %v1317
    %1505 = vmatprep.subr.mxu0 %v1316
    %1506 = vmatpush1.msra.mxu0 %v1315
    %1507 = vmatprep.subr.mxu0 %v1314
    %1508 = vmatpush1.msra.mxu0 %v1313
    %1509 = vmatprep.subr.mxu0 %v1312
    %1510 = vmatpush1.msra.mxu0 %v1311
    %1511 = vmatprep.subr.mxu0 %v1310
    %1512 = vmatpush1.msra.mxu0 %v1309
    %1513 = vmatprep.subr.mxu0 %v1308
    %1514 = vmatpush1.msra.mxu0 %v1307
    %1515 = vmatprep.subr.mxu0 %v1306
    %1516 = vmatpush1.msra.mxu0 %v1305
    %1517 = vmatprep.subr.mxu0 %v1304
    %1518 = vmatpush1.msra.mxu0 %v1303
    %1519 = vmatprep.subr.mxu0 %v1302
    %1520 = vmatpush1.msra.mxu0 %v1301
    %1521 = vmatprep.subr.mxu0 %v1300
    %1522 = vmatpush1.msra.mxu0 %v1299
    %1523 = vmatprep.subr.mxu0 %v1362
    %1524 = vmatpush2.msra.mxu0 %v1361
    %1525 = vmatprep.subr.mxu0 %v1360
    %1526 = vmatpush2.msra.mxu0 %v1359
    %1527 = vmatprep.subr.mxu0 %v1358
    %1528 = vmatpush2.msra.mxu0 %v1357
    %1529 = vmatprep.subr.mxu0 %v1356
    %1530 = vmatpush2.msra.mxu0 %v1355
    %1531 = vmatprep.subr.mxu0 %v1354
    %1532 = vmatpush2.msra.mxu0 %v1353
    %1533 = vmatprep.subr.mxu0 %v1352
    %1534 = vmatpush2.msra.mxu0 %v1351
    %1535 = vmatprep.subr.mxu0 %v1350
    %1536 = vmatpush2.msra.mxu0 %v1349
    %1537 = vmatprep.subr.mxu0 %v1348
    %1538 = vmatpush2.msra.mxu0 %v1347
    %1539 = vmatprep.subr.mxu0 %v1346
    %1540 = vmatpush2.msra.mxu0 %v1345
    %1541 = vmatprep.subr.mxu0 %v1344
    %1542 = vmatpush2.msra.mxu0 %v1343
    %1543 = vmatprep.subr.mxu0 %v1342
    %1544 = vmatpush2.msra.mxu0 %v1341
    %1545 = vmatprep.subr.mxu0 %v1340
    %1546 = vmatpush2.msra.mxu0 %v1339
    %1547 = vmatprep.subr.mxu0 %v1338
    %1548 = vmatpush2.msra.mxu0 %v1337
    %1549 = vmatprep.subr.mxu0 %v1336
    %1550 = vmatpush2.msra.mxu0 %v1335
    %1551 = vmatprep.subr.mxu0 %v1334
    %1552 = vmatpush2.msra.mxu0 %v1333
    %1553 = vmatprep.subr.mxu0 %v1332
    %1554 = vmatpush2.msra.mxu0 %v1331
    %1555 = vmatprep.mubr.f32.mxu0 %v1476
    %1556 = vmatmul.mubr.f32.gmra.mxu0 %v1475
    %v1557 = vpop.f32.mrf.mxu0
    %v1558 = vadd.f32 0.0, %v1557
    %v1559 = vpop.f32.mrf.mxu0
    %v1560 = vadd.f32 0.0, %v1559
    %1561 = vmatprep.mubr.f32.mxu0 %v1480
    %1562 = vmatmul.mubr.f32.gmra.mxu0 %v1479
    %v1563 = vpop.f32.mrf.mxu0
    %v1564 = vadd.f32 0.0, %v1563
    %v1565 = vpop.f32.mrf.mxu0
    %v1566 = vadd.f32 0.0, %v1565
    %1567 = vmatprep.mubr.f32.mxu0 %v1484
    %1568 = vmatmul.mubr.f32.gmra.mxu0 %v1483
    %v1569 = vpop.f32.mrf.mxu0
    %v1570 = vadd.f32 0.0, %v1569
    %v1571 = vpop.f32.mrf.mxu0
    %v1572 = vadd.f32 0.0, %v1571
    %1573 = vmatprep.mubr.f32.mxu0 %v1488
    %1574 = vmatmul.mubr.f32.gmra.mxu0 %v1487
    %v1575 = vpop.f32.mrf.mxu0
    %v1576 = vadd.f32 0.0, %v1575
    %v1577 = vpop.f32.mrf.mxu0
    %v1578 = vadd.f32 0.0, %v1577
    %1579 = vdwg.mxu0
    %1580 = vmatprep.subr.mxu0 %v1394
    %1581 = vmatpush1.msra.mxu0 %v1393
    %1582 = vmatprep.subr.mxu0 %v1392
    %1583 = vmatpush1.msra.mxu0 %v1391
    %1584 = vmatprep.subr.mxu0 %v1390
    %1585 = vmatpush1.msra.mxu0 %v1389
    %1586 = vmatprep.subr.mxu0 %v1388
    %1587 = vmatpush1.msra.mxu0 %v1387
    %1588 = vmatprep.subr.mxu0 %v1386
    %1589 = vmatpush1.msra.mxu0 %v1385
    %1590 = vmatprep.subr.mxu0 %v1384
    %1591 = vmatpush1.msra.mxu0 %v1383
    %1592 = vmatprep.subr.mxu0 %v1382
    %1593 = vmatpush1.msra.mxu0 %v1381
    %1594 = vmatprep.subr.mxu0 %v1380
    %1595 = vmatpush1.msra.mxu0 %v1379
    %1596 = vmatprep.subr.mxu0 %v1378
    %1597 = vmatpush1.msra.mxu0 %v1377
    %1598 = vmatprep.subr.mxu0 %v1376
    %1599 = vmatpush1.msra.mxu0 %v1375
    %1600 = vmatprep.subr.mxu0 %v1374
    %1601 = vmatpush1.msra.mxu0 %v1373
    %1602 = vmatprep.subr.mxu0 %v1372
    %1603 = vmatpush1.msra.mxu0 %v1371
    %1604 = vmatprep.subr.mxu0 %v1370
    %1605 = vmatpush1.msra.mxu0 %v1369
    %1606 = vmatprep.subr.mxu0 %v1368
    %1607 = vmatpush1.msra.mxu0 %v1367
    %1608 = vmatprep.subr.mxu0 %v1366
    %1609 = vmatpush1.msra.mxu0 %v1365
    %1610 = vmatprep.subr.mxu0 %v1364
    %1611 = vmatpush1.msra.mxu0 %v1363
    %1612 = vmatprep.subr.mxu0 %v1426
    %1613 = vmatpush2.msra.mxu0 %v1425
    %1614 = vmatprep.subr.mxu0 %v1424
    %1615 = vmatpush2.msra.mxu0 %v1423
    %1616 = vmatprep.subr.mxu0 %v1422
    %1617 = vmatpush2.msra.mxu0 %v1421
    %1618 = vmatprep.subr.mxu0 %v1420
    %1619 = vmatpush2.msra.mxu0 %v1419
    %1620 = vmatprep.subr.mxu0 %v1418
    %1621 = vmatpush2.msra.mxu0 %v1417
    %1622 = vmatprep.subr.mxu0 %v1416
    %1623 = vmatpush2.msra.mxu0 %v1415
    %1624 = vmatprep.subr.mxu0 %v1414
    %1625 = vmatpush2.msra.mxu0 %v1413
    %1626 = vmatprep.subr.mxu0 %v1412
    %1627 = vmatpush2.msra.mxu0 %v1411
    %1628 = vmatprep.subr.mxu0 %v1410
    %1629 = vmatpush2.msra.mxu0 %v1409
    %1630 = vmatprep.subr.mxu0 %v1408
    %1631 = vmatpush2.msra.mxu0 %v1407
    %1632 = vmatprep.subr.mxu0 %v1406
    %1633 = vmatpush2.msra.mxu0 %v1405
    %1634 = vmatprep.subr.mxu0 %v1404
    %1635 = vmatpush2.msra.mxu0 %v1403
    %1636 = vmatprep.subr.mxu0 %v1402
    %1637 = vmatpush2.msra.mxu0 %v1401
    %1638 = vmatprep.subr.mxu0 %v1400
    %1639 = vmatpush2.msra.mxu0 %v1399
    %1640 = vmatprep.subr.mxu0 %v1398
    %1641 = vmatpush2.msra.mxu0 %v1397
    %1642 = vmatprep.subr.mxu0 %v1396
    %1643 = vmatpush2.msra.mxu0 %v1395
    %1644 = vmatprep.mubr.f32.mxu0 %v1478
    %1645 = vmatmul.mubr.f32.gmra.mxu0 %v1477
    %v1646 = vpop.f32.mrf.mxu0
    %v1647 = vadd.f32 %v1558, %v1646
    %v1648 = vpop.f32.mrf.mxu0
    %v1649 = vadd.f32 %v1560, %v1648
    %1650 = vmatprep.mubr.f32.mxu0 %v1482
    %1651 = vmatmul.mubr.f32.gmra.mxu0 %v1481
    %v1652 = vpop.f32.mrf.mxu0
    %v1653 = vadd.f32 %v1564, %v1652
    %v1654 = vpop.f32.mrf.mxu0
    %v1655 = vadd.f32 %v1566, %v1654
    %1656 = vmatprep.mubr.f32.mxu0 %v1486
    %1657 = vmatmul.mubr.f32.gmra.mxu0 %v1485
    %v1658 = vpop.f32.mrf.mxu0
    %v1659 = vadd.f32 %v1570, %v1658
    %v1660 = vpop.f32.mrf.mxu0
    %v1661 = vadd.f32 %v1572, %v1660
    %1662 = vmatprep.mubr.f32.mxu0 %v1490
    %1663 = vmatmul.mubr.f32.gmra.mxu0 %v1489
    %v1664 = vpop.f32.mrf.mxu0
    %v1665 = vadd.f32 %v1576, %v1664
    %v1666 = vpop.f32.mrf.mxu0
    %v1667 = vadd.f32 %v1578, %v1666
    %1668 = vdwg.mxu0
    %v1669 = vld [vmem:[%s2] sm:$0x3]
    %1670 = vrot.lane.b32.xlu0 %v1647, 2
    %v1671 = vpop.permute.xlu0 %1670
    %1672 = vrot.lane.b32.xlu0 %v1653, 2
    %v1673 = vpop.permute.xlu0 %1672
    %1674 = vrot.lane.b32.xlu0 %v1659, 2
    %v1675 = vpop.permute.xlu0 %1674
    %1676 = vrot.lane.b32.xlu0 %v1665, 2
    %v1677 = vpop.permute.xlu0 %1676
    %1678 = vrot.lane.b32.xlu0 %v1649, 2
    %v1679 = vpop.permute.xlu0 %1678
    %1680 = vrot.lane.b32.xlu0 %v1655, 2
    %v1681 = vpop.permute.xlu0 %1680
    %1682 = vrot.lane.b32.xlu0 %v1661, 2
    %v1683 = vpop.permute.xlu0 %1682
    %1684 = vrot.lane.b32.xlu0 %v1667, 2
    %v1685 = vpop.permute.xlu0 %1684
    %v1686 = vsel %vm349, %v1671, %v1679
    %v1687 = vsel %vm349, %v1673, %v1681
    %v1688 = vsel %vm349, %v1675, %v1683
    %v1689 = vsel %vm349, %v1677, %v1685
    %v1690 = vsel %vm349, %v1679, %v1671
    %v1691 = vsel %vm349, %v1681, %v1673
    %v1692 = vsel %vm349, %v1683, %v1675
    %v1693 = vsel %vm349, %v1685, %v1677
    %v1694 = vadd.s32 %v1669, 4294967294
    %vm1695 = vcmp.ge.s32.totalorder %v1694, 0
    %vm1696 = vcmp.lt.s32.totalorder %v1694, 64
    %vm1697 = vmand %vm1695, %vm1696
    %v1698 = vsel %vm1697, 1, 0
    %v1699 = vlaneseq
    %v1700 = vshrl.u32 %v1699, 7
    %v1701 = vsub.s32 0, %v1700
    %v1702 = vrot.slane %v1698, %v1701
    %v1703 = vlaneseq
    %v1704 = vshrl.u32 %v1703, 7
    %v1705 = vsub.s32 1, %v1704
    %v1706 = vrot.slane %v1698, %v1705
    %vm1707 = vcmp.eq.s32.totalorder %v1702, 1
    %vm1708 = vcmp.eq.s32.totalorder %v1706, 1
    %v1709 = vsel %vm1707, %v1690, 0.0
    %v1710 = vsel %vm1708, %v1686, 0.0
    %v1711 = vsel %vm1707, %v1691, 0.0
    %v1712 = vsel %vm1708, %v1687, 0.0
    %v1713 = vsel %vm1707, %v1692, 0.0
    %v1714 = vsel %vm1708, %v1688, 0.0
    %v1715 = vsel %vm1707, %v1693, 0.0
    %v1716 = vsel %vm1708, %v1689, 0.0
    %1717 = vrot.lane.b32.xlu0 %v1647, 1
    %v1718 = vpop.permute.xlu0 %1717
    %1719 = vrot.lane.b32.xlu0 %v1653, 1
    %v1720 = vpop.permute.xlu0 %1719
    %1721 = vrot.lane.b32.xlu0 %v1659, 1
    %v1722 = vpop.permute.xlu0 %1721
    %1723 = vrot.lane.b32.xlu0 %v1665, 1
    %v1724 = vpop.permute.xlu0 %1723
    %1725 = vrot.lane.b32.xlu0 %v1649, 1
    %v1726 = vpop.permute.xlu0 %1725
    %1727 = vrot.lane.b32.xlu0 %v1655, 1
    %v1728 = vpop.permute.xlu0 %1727
    %1729 = vrot.lane.b32.xlu0 %v1661, 1
    %v1730 = vpop.permute.xlu0 %1729
    %1731 = vrot.lane.b32.xlu0 %v1667, 1
    %v1732 = vpop.permute.xlu0 %1731
    %v1733 = vsel %vm465, %v1718, %v1726
    %v1734 = vsel %vm465, %v1720, %v1728
    %v1735 = vsel %vm465, %v1722, %v1730
    %v1736 = vsel %vm465, %v1724, %v1732
    %v1737 = vsel %vm465, %v1726, %v1718
    %v1738 = vsel %vm465, %v1728, %v1720
    %v1739 = vsel %vm465, %v1730, %v1722
    %v1740 = vsel %vm465, %v1732, %v1724
    %v1741 = vadd.s32 %v1669, 4294967295
    %vm1742 = vcmp.ge.s32.totalorder %v1741, 0
    %vm1743 = vcmp.lt.s32.totalorder %v1741, 64
    %vm1744 = vmand %vm1742, %vm1743
    %v1745 = vsel %vm1744, 1, 0
    %v1746 = vlaneseq
    %v1747 = vshrl.u32 %v1746, 7
    %v1748 = vsub.s32 0, %v1747
    %v1749 = vrot.slane %v1745, %v1748
    %v1750 = vlaneseq
    %v1751 = vshrl.u32 %v1750, 7
    %v1752 = vsub.s32 1, %v1751
    %v1753 = vrot.slane %v1745, %v1752
    %vm1754 = vcmp.eq.s32.totalorder %v1749, 1
    %vm1755 = vcmp.eq.s32.totalorder %v1753, 1
    %v1756 = vsel %vm1754, %v1737, 0.0
    %v1757 = vsel %vm1755, %v1733, 0.0
    %v1758 = vsel %vm1754, %v1738, 0.0
    %v1759 = vsel %vm1755, %v1734, 0.0
    %v1760 = vsel %vm1754, %v1739, 0.0
    %v1761 = vsel %vm1755, %v1735, 0.0
    %v1762 = vsel %vm1754, %v1740, 0.0
    %v1763 = vsel %vm1755, %v1736, 0.0
    %vm1764 = vcmp.ge.s32.totalorder %v1669, 0
    %vm1765 = vcmp.lt.s32.totalorder %v1669, 64
    %vm1766 = vmand %vm1764, %vm1765
    %v1767 = vsel %vm1766, 1, 0
    %v1768 = vlaneseq
    %v1769 = vshrl.u32 %v1768, 7
    %v1770 = vsub.s32 0, %v1769
    %v1771 = vrot.slane %v1767, %v1770
    %v1772 = vlaneseq
    %v1773 = vshrl.u32 %v1772, 7
    %v1774 = vsub.s32 1, %v1773
    %v1775 = vrot.slane %v1767, %v1774
    %vm1776 = vcmp.eq.s32.totalorder %v1771, 1
    %vm1777 = vcmp.eq.s32.totalorder %v1775, 1
    %v1778 = vsel %vm1776, %v1647, 0.0
    %v1779 = vsel %vm1777, %v1649, 0.0
    %v1780 = vsel %vm1776, %v1653, 0.0
    %v1781 = vsel %vm1777, %v1655, 0.0
    %v1782 = vsel %vm1776, %v1659, 0.0
    %v1783 = vsel %vm1777, %v1661, 0.0
    %v1784 = vsel %vm1776, %v1665, 0.0
    %v1785 = vsel %vm1777, %v1667, 0.0
    %1786 = vrot.lane.b32.xlu0 %v1647, 127
    %v1787 = vpop.permute.xlu0 %1786
    %1788 = vrot.lane.b32.xlu0 %v1653, 127
    %v1789 = vpop.permute.xlu0 %1788
    %1790 = vrot.lane.b32.xlu0 %v1659, 127
    %v1791 = vpop.permute.xlu0 %1790
    %1792 = vrot.lane.b32.xlu0 %v1665, 127
    %v1793 = vpop.permute.xlu0 %1792
    %1794 = vrot.lane.b32.xlu0 %v1649, 127
    %v1795 = vpop.permute.xlu0 %1794
    %1796 = vrot.lane.b32.xlu0 %v1655, 127
    %v1797 = vpop.permute.xlu0 %1796
    %1798 = vrot.lane.b32.xlu0 %v1661, 127
    %v1799 = vpop.permute.xlu0 %1798
    %1800 = vrot.lane.b32.xlu0 %v1667, 127
    %v1801 = vpop.permute.xlu0 %1800
    %v1802 = vsel %vm654, %v1787, %v1795
    %v1803 = vsel %vm654, %v1789, %v1797
    %v1804 = vsel %vm654, %v1791, %v1799
    %v1805 = vsel %vm654, %v1793, %v1801
    %v1806 = vsel %vm654, %v1795, %v1787
    %v1807 = vsel %vm654, %v1797, %v1789
    %v1808 = vsel %vm654, %v1799, %v1791
    %v1809 = vsel %vm654, %v1801, %v1793
    %v1810 = vadd.s32 %v1669, 1
    %vm1811 = vcmp.ge.s32.totalorder %v1810, 0
    %vm1812 = vcmp.lt.s32.totalorder %v1810, 64
    %vm1813 = vmand %vm1811, %vm1812
    %v1814 = vsel %vm1813, 1, 0
    %v1815 = vlaneseq
    %v1816 = vshrl.u32 %v1815, 7
    %v1817 = vsub.s32 0, %v1816
    %v1818 = vrot.slane %v1814, %v1817
    %v1819 = vlaneseq
    %v1820 = vshrl.u32 %v1819, 7
    %v1821 = vsub.s32 1, %v1820
    %v1822 = vrot.slane %v1814, %v1821
    %vm1823 = vcmp.eq.s32.totalorder %v1818, 1
    %vm1824 = vcmp.eq.s32.totalorder %v1822, 1
    %v1825 = vsel %vm1823, %v1802, 0.0
    %v1826 = vsel %vm1824, %v1806, 0.0
    %v1827 = vsel %vm1823, %v1803, 0.0
    %v1828 = vsel %vm1824, %v1807, 0.0
    %v1829 = vsel %vm1823, %v1804, 0.0
    %v1830 = vsel %vm1824, %v1808, 0.0
    %v1831 = vsel %vm1823, %v1805, 0.0
    %v1832 = vsel %vm1824, %v1809, 0.0
    %1833 = vrot.lane.b32.xlu0 %v1647, 126
    %v1834 = vpop.permute.xlu0 %1833
    %1835 = vrot.lane.b32.xlu0 %v1653, 126
    %v1836 = vpop.permute.xlu0 %1835
    %1837 = vrot.lane.b32.xlu0 %v1659, 126
    %v1838 = vpop.permute.xlu0 %1837
    %1839 = vrot.lane.b32.xlu0 %v1665, 126
    %v1840 = vpop.permute.xlu0 %1839
    %1841 = vrot.lane.b32.xlu0 %v1649, 126
    %v1842 = vpop.permute.xlu0 %1841
    %1843 = vrot.lane.b32.xlu0 %v1655, 126
    %v1844 = vpop.permute.xlu0 %1843
    %1845 = vrot.lane.b32.xlu0 %v1661, 126
    %v1846 = vpop.permute.xlu0 %1845
    %1847 = vrot.lane.b32.xlu0 %v1667, 126
    %v1848 = vpop.permute.xlu0 %1847
    %v1849 = vsel %vm770, %v1834, %v1842
    %v1850 = vsel %vm770, %v1836, %v1844
    %v1851 = vsel %vm770, %v1838, %v1846
    %v1852 = vsel %vm770, %v1840, %v1848
    %v1853 = vsel %vm770, %v1842, %v1834
    %v1854 = vsel %vm770, %v1844, %v1836
    %v1855 = vsel %vm770, %v1846, %v1838
    %v1856 = vsel %vm770, %v1848, %v1840
    %v1857 = vadd.s32 %v1669, 2
    %vm1858 = vcmp.ge.s32.totalorder %v1857, 0
    %vm1859 = vcmp.lt.s32.totalorder %v1857, 64
    %vm1860 = vmand %vm1858, %vm1859
    %v1861 = vsel %vm1860, 1, 0
    %v1862 = vlaneseq
    %v1863 = vshrl.u32 %v1862, 7
    %v1864 = vsub.s32 0, %v1863
    %v1865 = vrot.slane %v1861, %v1864
    %v1866 = vlaneseq
    %v1867 = vshrl.u32 %v1866, 7
    %v1868 = vsub.s32 1, %v1867
    %v1869 = vrot.slane %v1861, %v1868
    %vm1870 = vcmp.eq.s32.totalorder %v1865, 1
    %vm1871 = vcmp.eq.s32.totalorder %v1869, 1
    %v1872 = vsel %vm1870, %v1849, 0.0
    %v1873 = vsel %vm1871, %v1853, 0.0
    %v1874 = vsel %vm1870, %v1850, 0.0
    %v1875 = vsel %vm1871, %v1854, 0.0
    %v1876 = vsel %vm1870, %v1851, 0.0
    %v1877 = vsel %vm1871, %v1855, 0.0
    %v1878 = vsel %vm1870, %v1852, 0.0
    %v1879 = vsel %vm1871, %v1856, 0.0
    %v1880 = vld [vmem:[%s9] sm:$0xff]
    %v1881 = vld [vmem:[%s9 + $0x8] sm:$0xff]
    %v1882 = vld [vmem:[%s9 + $0x10] sm:$0xff]
    %v1883 = vld [vmem:[%s9 + $0x18] sm:$0xff]
    %v1884 = vld [vmem:[%s9 + $0x20] sm:$0xff]
    %v1885 = vld [vmem:[%s9 + $0x28] sm:$0xff]
    %v1886 = vld [vmem:[%s9 + $0x30] sm:$0xff]
    %v1887 = vld [vmem:[%s9 + $0x38] sm:$0xff]
    %vm1888 = vcmask 261120
    %v1890 = vsel %vm1888, %v1881, 0
    %v1893 = vsel %vm1888, %v1883, 0
    %v1896 = vsel %vm1888, %v1885, 0
    %v1899 = vsel %vm1888, %v1887, 0
    %1901 = vmatprep.subr.mxu0 %v1832
    %1902 = vmatpush1.msra.mxu0 %v1831
    %1903 = vmatprep.subr.mxu0 %v1830
    %1904 = vmatpush1.msra.mxu0 %v1829
    %1905 = vmatprep.subr.mxu0 %v1828
    %1906 = vmatpush1.msra.mxu0 %v1827
    %1907 = vmatprep.subr.mxu0 %v1826
    %1908 = vmatpush1.msra.mxu0 %v1825
    %1909 = vmatprep.subr.mxu0 %v1785
    %1910 = vmatpush1.msra.mxu0 %v1784
    %1911 = vmatprep.subr.mxu0 %v1783
    %1912 = vmatpush1.msra.mxu0 %v1782
    %1913 = vmatprep.subr.mxu0 %v1781
    %1914 = vmatpush1.msra.mxu0 %v1780
    %1915 = vmatprep.subr.mxu0 %v1779
    %1916 = vmatpush1.msra.mxu0 %v1778
    %1917 = vmatprep.subr.mxu0 %v1763
    %1918 = vmatpush1.msra.mxu0 %v1762
    %1919 = vmatprep.subr.mxu0 %v1761
    %1920 = vmatpush1.msra.mxu0 %v1760
    %1921 = vmatprep.subr.mxu0 %v1759
    %1922 = vmatpush1.msra.mxu0 %v1758
    %1923 = vmatprep.subr.mxu0 %v1757
    %1924 = vmatpush1.msra.mxu0 %v1756
    %1925 = vmatprep.subr.mxu0 %v1716
    %1926 = vmatpush1.msra.mxu0 %v1715
    %1927 = vmatprep.subr.mxu0 %v1714
    %1928 = vmatpush1.msra.mxu0 %v1713
    %1929 = vmatprep.subr.mxu0 %v1712
    %1930 = vmatpush1.msra.mxu0 %v1711
    %1931 = vmatprep.subr.mxu0 %v1710
    %1932 = vmatpush1.msra.mxu0 %v1709
    %1933 = vmatprep.subr.mxu0 0.0
    %1934 = vmatpush2.msra.mxu0 0.0
    %1935 = vmatprep.subr.mxu0 0.0
    %1936 = vmatpush2.msra.mxu0 0.0
    %1937 = vmatprep.subr.mxu0 0.0
    %1938 = vmatpush2.msra.mxu0 0.0
    %1939 = vmatprep.subr.mxu0 0.0
    %1940 = vmatpush2.msra.mxu0 0.0
    %1941 = vmatprep.subr.mxu0 0.0
    %1942 = vmatpush2.msra.mxu0 0.0
    %1943 = vmatprep.subr.mxu0 0.0
    %1944 = vmatpush2.msra.mxu0 0.0
    %1945 = vmatprep.subr.mxu0 0.0
    %1946 = vmatpush2.msra.mxu0 0.0
    %1947 = vmatprep.subr.mxu0 0.0
    %1948 = vmatpush2.msra.mxu0 0.0
    %1949 = vmatprep.subr.mxu0 0.0
    %1950 = vmatpush2.msra.mxu0 0.0
    %1951 = vmatprep.subr.mxu0 0.0
    %1952 = vmatpush2.msra.mxu0 0.0
    %1953 = vmatprep.subr.mxu0 0.0
    %1954 = vmatpush2.msra.mxu0 0.0
    %1955 = vmatprep.subr.mxu0 0.0
    %1956 = vmatpush2.msra.mxu0 0.0
    %1957 = vmatprep.subr.mxu0 %v1879
    %1958 = vmatpush2.msra.mxu0 %v1878
    %1959 = vmatprep.subr.mxu0 %v1877
    %1960 = vmatpush2.msra.mxu0 %v1876
    %1961 = vmatprep.subr.mxu0 %v1875
    %1962 = vmatpush2.msra.mxu0 %v1874
    %1963 = vmatprep.subr.mxu0 %v1873
    %1964 = vmatpush2.msra.mxu0 %v1872
    %1965 = vmatprep.mubr.f32.mxu0 %v1890
    %1966 = vmatmul.mubr.f32.gmra.mxu0 %v1880
    %v1967 = vpop.f32.mrf.mxu0
    %v1968 = vadd.f32 0.0, %v1967
    %v1969 = vpop.f32.mrf.mxu0
    %v1970 = vadd.f32 0.0, %v1969
    %1971 = vmatprep.mubr.f32.mxu0 %v1893
    %1972 = vmatmul.mubr.f32.gmra.mxu0 %v1882
    %v1973 = vpop.f32.mrf.mxu0
    %v1974 = vadd.f32 0.0, %v1973
    %v1975 = vpop.f32.mrf.mxu0
    %v1976 = vadd.f32 0.0, %v1975
    %1977 = vmatprep.mubr.f32.mxu0 %v1896
    %1978 = vmatmul.mubr.f32.gmra.mxu0 %v1884
    %v1979 = vpop.f32.mrf.mxu0
    %v1980 = vadd.f32 0.0, %v1979
    %v1981 = vpop.f32.mrf.mxu0
    %v1982 = vadd.f32 0.0, %v1981
    %1983 = vmatprep.mubr.f32.mxu0 %v1899
    %1984 = vmatmul.mubr.f32.gmra.mxu0 %v1886
    %v1985 = vpop.f32.mrf.mxu0
    %v1986 = vadd.f32 0.0, %v1985
    %v1987 = vpop.f32.mrf.mxu0
    %v1988 = vadd.f32 0.0, %v1987
    %1989 = vdwg.mxu0
    %v1990 = vld [vmem:[%s10] sm:$0xff]
    %v1991 = vld [vmem:[%s10 + $0x8] sm:$0xff]
    %v1992 = vld [vmem:[%s10 + $0x10] sm:$0xff]
    %v1993 = vld [vmem:[%s10 + $0x18] sm:$0xff]
    %v1994 = vld [vmem:[%s11] sm:$0xff]
    %v1995 = vld [vmem:[%s11 + $0x8] sm:$0xff]
    %v1996 = vld [vmem:[%s11 + $0x10] sm:$0xff]
    %v1997 = vld [vmem:[%s11 + $0x18] sm:$0xff]
    %v1998 = vadd.f32 %v1968, %v1970
    %1999 = vadd.xlane.f32.xlu0 %v1998
    %v2000 = vpop.xlane.xlu0 %1999
    %v2001 = vadd.f32 %v1974, %v1976
    %2002 = vadd.xlane.f32.xlu0 %v2001
    %v2003 = vpop.xlane.xlu0 %2002
    %v2004 = vadd.f32 %v1980, %v1982
    %2005 = vadd.xlane.f32.xlu0 %v2004
    %v2006 = vpop.xlane.xlu0 %2005
    %v2007 = vadd.f32 %v1986, %v1988
    %2008 = vadd.xlane.f32.xlu0 %v2007
    %v2009 = vpop.xlane.xlu0 %2008
    %v2010 = vrcp.pop 256.0
    %v2011 = vmul.f32 %v2000, %v2010
    %v2012 = vmul.f32 %v2003, %v2010
    %v2013 = vmul.f32 %v2006, %v2010
    %v2014 = vmul.f32 %v2009, %v2010
    %v2015 = vsub.f32 %v1968, %v2011
    %v2016 = vsub.f32 %v1970, %v2011
    %v2017 = vsub.f32 %v1974, %v2012
    %v2018 = vsub.f32 %v1976, %v2012
    %v2019 = vsub.f32 %v1980, %v2013
    %v2020 = vsub.f32 %v1982, %v2013
    %v2021 = vsub.f32 %v1986, %v2014
    %v2022 = vsub.f32 %v1988, %v2014
    %v2023 = vmul.f32 %v2015, %v2015
    %v2024 = vmul.f32 %v2016, %v2016
    %v2025 = vmul.f32 %v2017, %v2017
    %v2026 = vmul.f32 %v2018, %v2018
    %v2027 = vmul.f32 %v2019, %v2019
    %v2028 = vmul.f32 %v2020, %v2020
    %v2029 = vmul.f32 %v2021, %v2021
    %v2030 = vmul.f32 %v2022, %v2022
    %v2031 = vadd.f32 %v2023, %v2024
    %2032 = vadd.xlane.f32.xlu0 %v2031
    %v2033 = vpop.xlane.xlu0 %2032
    %v2034 = vadd.f32 %v2025, %v2026
    %2035 = vadd.xlane.f32.xlu0 %v2034
    %v2036 = vpop.xlane.xlu0 %2035
    %v2037 = vadd.f32 %v2027, %v2028
    %2038 = vadd.xlane.f32.xlu0 %v2037
    %v2039 = vpop.xlane.xlu0 %2038
    %v2040 = vadd.f32 %v2029, %v2030
    %2041 = vadd.xlane.f32.xlu0 %v2040
    %v2042 = vpop.xlane.xlu0 %2041
    %v2043 = vmul.f32 %v2033, %v2010
    %v2044 = vmul.f32 %v2036, %v2010
    %v2045 = vmul.f32 %v2039, %v2010
    %v2046 = vmul.f32 %v2042, %v2010
    %v2047 = vadd.f32 %v2043, 1e-05
    %v2048 = vadd.f32 %v2044, 1e-05
    %v2049 = vadd.f32 %v2045, 1e-05
    %v2050 = vadd.f32 %v2046, 1e-05
    %v2051 = vrsqrt.pop %v2047
    %v2052 = vrsqrt.pop %v2048
    %v2053 = vrsqrt.pop %v2049
    %v2054 = vrsqrt.pop %v2050
    %v2055 = vmul.f32 %v1990, %v2051
    %v2056 = vmul.f32 %v1991, %v2052
    %v2057 = vmul.f32 %v1992, %v2053
    %v2058 = vmul.f32 %v1993, %v2054
    %2060 = vset.pattern.permute.xlu0 0
    %2061 = vperm.xlu0 %2060, %v2055
    %v2062 = vpop.permute.xlu0 %2061
    %2065 = vset.pattern.permute.xlu0 0
    %2066 = vperm.xlu0 %2065, %v2056
    %v2067 = vpop.permute.xlu0 %2066
    %2070 = vset.pattern.permute.xlu0 0
    %2071 = vperm.xlu0 %2070, %v2057
    %v2072 = vpop.permute.xlu0 %2071
    %2075 = vset.pattern.permute.xlu0 0
    %2076 = vperm.xlu0 %2075, %v2058
    %v2077 = vpop.permute.xlu0 %2076
    %v2079 = vmul.f32 %v2015, %v2062
    %v2080 = vmul.f32 %v2016, %v2062
    %v2081 = vmul.f32 %v2017, %v2067
    %v2082 = vmul.f32 %v2018, %v2067
    %v2083 = vmul.f32 %v2019, %v2072
    %v2084 = vmul.f32 %v2020, %v2072
    %v2085 = vmul.f32 %v2021, %v2077
    %v2086 = vmul.f32 %v2022, %v2077
    %2088 = vset.pattern.permute.xlu0 0
    %2089 = vperm.xlu0 %2088, %v1994
    %v2090 = vpop.permute.xlu0 %2089
    %2093 = vset.pattern.permute.xlu0 0
    %2094 = vperm.xlu0 %2093, %v1995
    %v2095 = vpop.permute.xlu0 %2094
    %2098 = vset.pattern.permute.xlu0 0
    %2099 = vperm.xlu0 %2098, %v1996
    %v2100 = vpop.permute.xlu0 %2099
    %2103 = vset.pattern.permute.xlu0 0
    %2104 = vperm.xlu0 %2103, %v1997
    %v2105 = vpop.permute.xlu0 %2104
    %v2107 = vadd.f32 %v2079, %v2090
    %v2108 = vadd.f32 %v2080, %v2090
    %v2109 = vadd.f32 %v2081, %v2095
    %v2110 = vadd.f32 %v2082, %v2095
    %v2111 = vadd.f32 %v2083, %v2100
    %v2112 = vadd.f32 %v2084, %v2100
    %v2113 = vadd.f32 %v2085, %v2105
    %v2114 = vadd.f32 %v2086, %v2105
    %v2115 = vmax.f32 %v2107, 0.0
    %v2116 = vmax.f32 %v2108, 0.0
    %v2117 = vmax.f32 %v2109, 0.0
    %v2118 = vmax.f32 %v2110, 0.0
    %v2119 = vmax.f32 %v2111, 0.0
    %v2120 = vmax.f32 %v2112, 0.0
    %v2121 = vmax.f32 %v2113, 0.0
    %v2122 = vmax.f32 %v2114, 0.0
    %v2123 = vld [vmem:[#allocation7] sm:$0xff]
    %v2124 = vld [vmem:[#allocation7 + $0x8] sm:$0xff]
    %v2125 = vld [vmem:[#allocation7 + $0x10] sm:$0xff]
    %v2126 = vld [vmem:[#allocation7 + $0x18] sm:$0xff]
    %v2127 = vld [vmem:[#allocation7 + $0x20] sm:$0xff]
    %v2128 = vld [vmem:[#allocation7 + $0x28] sm:$0xff]
    %v2129 = vld [vmem:[#allocation7 + $0x30] sm:$0xff]
    %v2130 = vld [vmem:[#allocation7 + $0x38] sm:$0xff]
    %v2131 = vld [vmem:[#allocation7 + $0x40] sm:$0xff]
    %v2132 = vld [vmem:[#allocation7 + $0x48] sm:$0xff]
    %v2133 = vld [vmem:[#allocation7 + $0x50] sm:$0xff]
    %v2134 = vld [vmem:[#allocation7 + $0x58] sm:$0xff]
    %v2135 = vld [vmem:[#allocation7 + $0x60] sm:$0xff]
    %v2136 = vld [vmem:[#allocation7 + $0x68] sm:$0xff]
    %v2137 = vld [vmem:[#allocation7 + $0x70] sm:$0xff]
    %v2138 = vld [vmem:[#allocation7 + $0x78] sm:$0xff]
    %v2139 = vld [vmem:[#allocation7 + $0x80] sm:$0xff]
    %v2140 = vld [vmem:[#allocation7 + $0x88] sm:$0xff]
    %v2141 = vld [vmem:[#allocation7 + $0x90] sm:$0xff]
    %v2142 = vld [vmem:[#allocation7 + $0x98] sm:$0xff]
    %v2143 = vld [vmem:[#allocation7 + $0xa0] sm:$0xff]
    %v2144 = vld [vmem:[#allocation7 + $0xa8] sm:$0xff]
    %v2145 = vld [vmem:[#allocation7 + $0xb0] sm:$0xff]
    %v2146 = vld [vmem:[#allocation7 + $0xb8] sm:$0xff]
    %v2147 = vld [vmem:[#allocation7 + $0xc0] sm:$0xff]
    %v2148 = vld [vmem:[#allocation7 + $0xc8] sm:$0xff]
    %v2149 = vld [vmem:[#allocation7 + $0xd0] sm:$0xff]
    %v2150 = vld [vmem:[#allocation7 + $0xd8] sm:$0xff]
    %v2151 = vld [vmem:[#allocation7 + $0xe0] sm:$0xff]
    %v2152 = vld [vmem:[#allocation7 + $0xe8] sm:$0xff]
    %v2153 = vld [vmem:[#allocation7 + $0xf0] sm:$0xff]
    %v2154 = vld [vmem:[#allocation7 + $0xf8] sm:$0xff]
    %2155 = vrot.lane.b32.xlu0 %v2115, 127
    %v2156 = vpop.permute.xlu0 %2155
    %2157 = vrot.lane.b32.xlu0 %v2117, 127
    %v2158 = vpop.permute.xlu0 %2157
    %2159 = vrot.lane.b32.xlu0 %v2119, 127
    %v2160 = vpop.permute.xlu0 %2159
    %2161 = vrot.lane.b32.xlu0 %v2121, 127
    %v2162 = vpop.permute.xlu0 %2161
    %2163 = vrot.lane.b32.xlu0 %v2116, 127
    %v2164 = vpop.permute.xlu0 %2163
    %2165 = vrot.lane.b32.xlu0 %v2118, 127
    %v2166 = vpop.permute.xlu0 %2165
    %2167 = vrot.lane.b32.xlu0 %v2120, 127
    %v2168 = vpop.permute.xlu0 %2167
    %2169 = vrot.lane.b32.xlu0 %v2122, 127
    %v2170 = vpop.permute.xlu0 %2169
    %v2171 = vsel %vm654, %v2156, %v2164
    %v2172 = vsel %vm654, %v2158, %v2166
    %v2173 = vsel %vm654, %v2160, %v2168
    %v2174 = vsel %vm654, %v2162, %v2170
    %v2175 = vsel %vm654, %v2164, %v2156
    %v2176 = vsel %vm654, %v2166, %v2158
    %v2177 = vsel %vm654, %v2168, %v2160
    %v2178 = vsel %vm654, %v2170, %v2162
    %v2179 = vmax.f32 %v2115, %v2171
    %v2180 = vmax.f32 %v2116, %v2175
    %v2181 = vmax.f32 %v2117, %v2172
    %v2182 = vmax.f32 %v2118, %v2176
    %v2183 = vmax.f32 %v2119, %v2173
    %v2184 = vmax.f32 %v2120, %v2177
    %v2185 = vmax.f32 %v2121, %v2174
    %v2186 = vmax.f32 %v2122, %v2178
    %2187 = vmatprep.subr.mxu0 0.0
    %2188 = vmatpush1.msra.mxu0 %v2138
    %2189 = vmatprep.subr.mxu0 0.0
    %2190 = vmatpush1.msra.mxu0 %v2137
    %2191 = vmatprep.subr.mxu0 0.0
    %2192 = vmatpush1.msra.mxu0 %v2136
    %2193 = vmatprep.subr.mxu0 0.0
    %2194 = vmatpush1.msra.mxu0 %v2135
    %2195 = vmatprep.subr.mxu0 0.0
    %2196 = vmatpush1.msra.mxu0 %v2134
    %2197 = vmatprep.subr.mxu0 0.0
    %2198 = vmatpush1.msra.mxu0 %v2133
    %2199 = vmatprep.subr.mxu0 0.0
    %2200 = vmatpush1.msra.mxu0 %v2132
    %2201 = vmatprep.subr.mxu0 0.0
    %2202 = vmatpush1.msra.mxu0 %v2131
    %2203 = vmatprep.subr.mxu0 0.0
    %2204 = vmatpush1.msra.mxu0 %v2130
    %2205 = vmatprep.subr.mxu0 0.0
    %2206 = vmatpush1.msra.mxu0 %v2129
    %2207 = vmatprep.subr.mxu0 0.0
    %2208 = vmatpush1.msra.mxu0 %v2128
    %2209 = vmatprep.subr.mxu0 0.0
    %2210 = vmatpush1.msra.mxu0 %v2127
    %2211 = vmatprep.subr.mxu0 0.0
    %2212 = vmatpush1.msra.mxu0 %v2126
    %2213 = vmatprep.subr.mxu0 0.0
    %2214 = vmatpush1.msra.mxu0 %v2125
    %2215 = vmatprep.subr.mxu0 0.0
    %2216 = vmatpush1.msra.mxu0 %v2124
    %2217 = vmatprep.subr.mxu0 0.0
    %2218 = vmatpush1.msra.mxu0 %v2123
    %2219 = vmatprep.subr.mxu0 0.0
    %2220 = vmatpush2.msra.mxu0 %v2154
    %2221 = vmatprep.subr.mxu0 0.0
    %2222 = vmatpush2.msra.mxu0 %v2153
    %2223 = vmatprep.subr.mxu0 0.0
    %2224 = vmatpush2.msra.mxu0 %v2152
    %2225 = vmatprep.subr.mxu0 0.0
    %2226 = vmatpush2.msra.mxu0 %v2151
    %2227 = vmatprep.subr.mxu0 0.0
    %2228 = vmatpush2.msra.mxu0 %v2150
    %2229 = vmatprep.subr.mxu0 0.0
    %2230 = vmatpush2.msra.mxu0 %v2149
    %2231 = vmatprep.subr.mxu0 0.0
    %2232 = vmatpush2.msra.mxu0 %v2148
    %2233 = vmatprep.subr.mxu0 0.0
    %2234 = vmatpush2.msra.mxu0 %v2147
    %2235 = vmatprep.subr.mxu0 0.0
    %2236 = vmatpush2.msra.mxu0 %v2146
    %2237 = vmatprep.subr.mxu0 0.0
    %2238 = vmatpush2.msra.mxu0 %v2145
    %2239 = vmatprep.subr.mxu0 0.0
    %2240 = vmatpush2.msra.mxu0 %v2144
    %2241 = vmatprep.subr.mxu0 0.0
    %2242 = vmatpush2.msra.mxu0 %v2143
    %2243 = vmatprep.subr.mxu0 0.0
    %2244 = vmatpush2.msra.mxu0 %v2142
    %2245 = vmatprep.subr.mxu0 0.0
    %2246 = vmatpush2.msra.mxu0 %v2141
    %2247 = vmatprep.subr.mxu0 0.0
    %2248 = vmatpush2.msra.mxu0 %v2140
    %2249 = vmatprep.subr.mxu0 0.0
    %2250 = vmatpush2.msra.mxu0 %v2139
    %2251 = vmatprep.mubr.f32.mxu0 %v2180
    %2252 = vmatmul.mubr.f32.gmra.mxu0 %v2179
    %v2253 = vpop.f32.mrf.mxu0
    %v2254 = vadd.f32 0.0, %v2253
    %v2255 = vpop.f32.mrf.mxu0
    %2256 = vmatprep.mubr.f32.mxu0 %v2182
    %2257 = vmatmul.mubr.f32.gmra.mxu0 %v2181
    %v2258 = vpop.f32.mrf.mxu0
    %v2259 = vadd.f32 0.0, %v2258
    %v2260 = vpop.f32.mrf.mxu0
    %2261 = vmatprep.mubr.f32.mxu0 %v2184
    %2262 = vmatmul.mubr.f32.gmra.mxu0 %v2183
    %v2263 = vpop.f32.mrf.mxu0
    %v2264 = vadd.f32 0.0, %v2263
    %v2265 = vpop.f32.mrf.mxu0
    %2266 = vmatprep.mubr.f32.mxu0 %v2186
    %2267 = vmatmul.mubr.f32.gmra.mxu0 %v2185
    %v2268 = vpop.f32.mrf.mxu0
    %v2269 = vadd.f32 0.0, %v2268
    %v2270 = vpop.f32.mrf.mxu0
    %2271 = vdwg.mxu0
    %v2272 = vld [vmem:[%s3] sm:$0x1]
    %2273 = vrot.lane.b32.xlu0 %v2254, 1
    %v2274 = vpop.permute.xlu0 %2273
    %2275 = vrot.lane.b32.xlu0 %v2259, 1
    %v2276 = vpop.permute.xlu0 %2275
    %2277 = vrot.lane.b32.xlu0 %v2264, 1
    %v2278 = vpop.permute.xlu0 %2277
    %2279 = vrot.lane.b32.xlu0 %v2269, 1
    %v2280 = vpop.permute.xlu0 %2279
    %v2281 = vadd.s32 %v2272, 4294967295
    %vm2282 = vcmp.ge.s32.totalorder %v2281, 0
    %vm2283 = vcmp.lt.s32.totalorder %v2281, 32
    %vm2284 = vmand %vm2282, %vm2283
    %v2285 = vsel %vm2284, 1, 0
    %v2286 = vlaneseq
    %v2287 = vshrl.u32 %v2286, 7
    %v2288 = vsub.s32 0, %v2287
    %v2289 = vrot.slane %v2285, %v2288
    %vm2290 = vcmp.eq.s32.totalorder %v2289, 1
    %v2291 = vsel %vm2290, %v2274, 0.0
    %v2292 = vsel %vm2290, %v2276, 0.0
    %v2293 = vsel %vm2290, %v2278, 0.0
    %v2294 = vsel %vm2290, %v2280, 0.0
    %vm2295 = vcmp.ge.s32.totalorder %v2272, 0
    %vm2296 = vcmp.lt.s32.totalorder %v2272, 32
    %vm2297 = vmand %vm2295, %vm2296
    %v2298 = vsel %vm2297, 1, 0
    %v2299 = vlaneseq
    %v2300 = vshrl.u32 %v2299, 7
    %v2301 = vsub.s32 0, %v2300
    %v2302 = vrot.slane %v2298, %v2301
    %vm2303 = vcmp.eq.s32.totalorder %v2302, 1
    %v2304 = vsel %vm2303, %v2254, 0.0
    %v2305 = vsel %vm2303, %v2259, 0.0
    %v2306 = vsel %vm2303, %v2264, 0.0
    %v2307 = vsel %vm2303, %v2269, 0.0
    %2308 = vrot.lane.b32.xlu0 %v2254, 127
    %v2309 = vpop.permute.xlu0 %2308
    %2310 = vrot.lane.b32.xlu0 %v2259, 127
    %v2311 = vpop.permute.xlu0 %2310
    %2312 = vrot.lane.b32.xlu0 %v2264, 127
    %v2313 = vpop.permute.xlu0 %2312
    %2314 = vrot.lane.b32.xlu0 %v2269, 127
    %v2315 = vpop.permute.xlu0 %2314
    %v2316 = vadd.s32 %v2272, 1
    %vm2317 = vcmp.ge.s32.totalorder %v2316, 0
    %vm2318 = vcmp.lt.s32.totalorder %v2316, 32
    %vm2319 = vmand %vm2317, %vm2318
    %v2320 = vsel %vm2319, 1, 0
    %v2321 = vlaneseq
    %v2322 = vshrl.u32 %v2321, 7
    %v2323 = vsub.s32 0, %v2322
    %v2324 = vrot.slane %v2320, %v2323
    %vm2325 = vcmp.eq.s32.totalorder %v2324, 1
    %v2326 = vsel %vm2325, %v2309, 0.0
    %v2327 = vsel %vm2325, %v2311, 0.0
    %v2328 = vsel %vm2325, %v2313, 0.0
    %v2329 = vsel %vm2325, %v2315, 0.0
    %v2330 = vld [vmem:[%s12] sm:$0xff]
    %v2331 = vld [vmem:[%s12 + $0x8] sm:$0xff]
    %vm2332 = vcmask 785408
    %v2334 = vsel %vm2332, %v2330, 0
    %v2337 = vsel %vm2332, %v2331, 0
    %2339 = vmatprep.subr.mxu0 0.0
    %2340 = vmatpush1.msra.mxu0 0.0
    %2341 = vmatprep.subr.mxu0 0.0
    %2342 = vmatpush1.msra.mxu0 0.0
    %2343 = vmatprep.subr.mxu0 0.0
    %2344 = vmatpush1.msra.mxu0 0.0
    %2345 = vmatprep.subr.mxu0 0.0
    %2346 = vmatpush1.msra.mxu0 0.0
    %2347 = vmatprep.subr.mxu0 0.0
    %2348 = vmatpush1.msra.mxu0 %v2329
    %2349 = vmatprep.subr.mxu0 0.0
    %2350 = vmatpush1.msra.mxu0 %v2328
    %2351 = vmatprep.subr.mxu0 0.0
    %2352 = vmatpush1.msra.mxu0 %v2327
    %2353 = vmatprep.subr.mxu0 0.0
    %2354 = vmatpush1.msra.mxu0 %v2326
    %2355 = vmatprep.subr.mxu0 0.0
    %2356 = vmatpush1.msra.mxu0 %v2307
    %2357 = vmatprep.subr.mxu0 0.0
    %2358 = vmatpush1.msra.mxu0 %v2306
    %2359 = vmatprep.subr.mxu0 0.0
    %2360 = vmatpush1.msra.mxu0 %v2305
    %2361 = vmatprep.subr.mxu0 0.0
    %2362 = vmatpush1.msra.mxu0 %v2304
    %2363 = vmatprep.subr.mxu0 0.0
    %2364 = vmatpush1.msra.mxu0 %v2294
    %2365 = vmatprep.subr.mxu0 0.0
    %2366 = vmatpush1.msra.mxu0 %v2293
    %2367 = vmatprep.subr.mxu0 0.0
    %2368 = vmatpush1.msra.mxu0 %v2292
    %2369 = vmatprep.subr.mxu0 0.0
    %2370 = vmatpush1.msra.mxu0 %v2291
    %2371 = vmatprep.subr.mxu0 0.0
    %2372 = vmatpush2.msra.mxu0 0.0
    %2373 = vmatprep.subr.mxu0 0.0
    %2374 = vmatpush2.msra.mxu0 0.0
    %2375 = vmatprep.subr.mxu0 0.0
    %2376 = vmatpush2.msra.mxu0 0.0
    %2377 = vmatprep.subr.mxu0 0.0
    %2378 = vmatpush2.msra.mxu0 0.0
    %2379 = vmatprep.subr.mxu0 0.0
    %2380 = vmatpush2.msra.mxu0 0.0
    %2381 = vmatprep.subr.mxu0 0.0
    %2382 = vmatpush2.msra.mxu0 0.0
    %2383 = vmatprep.subr.mxu0 0.0
    %2384 = vmatpush2.msra.mxu0 0.0
    %2385 = vmatprep.subr.mxu0 0.0
    %2386 = vmatpush2.msra.mxu0 0.0
    %2387 = vmatprep.subr.mxu0 0.0
    %2388 = vmatpush2.msra.mxu0 0.0
    %2389 = vmatprep.subr.mxu0 0.0
    %2390 = vmatpush2.msra.mxu0 0.0
    %2391 = vmatprep.subr.mxu0 0.0
    %2392 = vmatpush2.msra.mxu0 0.0
    %2393 = vmatprep.subr.mxu0 0.0
    %2394 = vmatpush2.msra.mxu0 0.0
    %2395 = vmatprep.subr.mxu0 0.0
    %2396 = vmatpush2.msra.mxu0 0.0
    %2397 = vmatprep.subr.mxu0 0.0
    %2398 = vmatpush2.msra.mxu0 0.0
    %2399 = vmatprep.subr.mxu0 0.0
    %2400 = vmatpush2.msra.mxu0 0.0
    %2401 = vmatprep.subr.mxu0 0.0
    %2402 = vmatpush2.msra.mxu0 0.0
    %2403 = vmatprep.mubr.f32.mxu0 0.0
    %2404 = vmatmul.mubr.f32.gmra.mxu0 %v2334
    %v2405 = vpop.f32.mrf.mxu0
    %v2406 = vadd.f32 0.0, %v2405
    %v2407 = vpop.f32.mrf.mxu0
    %2408 = vmatprep.mubr.f32.mxu0 0.0
    %2409 = vmatmul.mubr.f32.gmra.mxu0 %v2337
    %v2410 = vpop.f32.mrf.mxu0
    %v2411 = vadd.f32 0.0, %v2410
    %v2412 = vpop.f32.mrf.mxu0
    %2413 = vdwg.mxu0
    %v2414 = vld [vmem:[%s13] sm:$0xff]
    %v2415 = vld [vmem:[%s13 + $0x8] sm:$0xff]
    %v2416 = vld [vmem:[%s14] sm:$0xff]
    %v2417 = vld [vmem:[%s14 + $0x8] sm:$0xff]
    %2418 = vadd.xlane.f32.xlu0 %v2406
    %v2419 = vpop.xlane.xlu0 %2418
    %2420 = vadd.xlane.f32.xlu0 %v2411
    %v2421 = vpop.xlane.xlu0 %2420
    %v2422 = vrcp.pop 128.0
    %v2423 = vmul.f32 %v2419, %v2422
    %v2424 = vmul.f32 %v2421, %v2422
    %v2425 = vsub.f32 %v2406, %v2423
    %v2426 = vsub.f32 %v2411, %v2424
    %v2427 = vmul.f32 %v2425, %v2425
    %v2428 = vmul.f32 %v2426, %v2426
    %2429 = vadd.xlane.f32.xlu0 %v2427
    %v2430 = vpop.xlane.xlu0 %2429
    %2431 = vadd.xlane.f32.xlu0 %v2428
    %v2432 = vpop.xlane.xlu0 %2431
    %v2433 = vmul.f32 %v2430, %v2422
    %v2434 = vmul.f32 %v2432, %v2422
    %v2435 = vadd.f32 %v2433, 1e-05
    %v2436 = vadd.f32 %v2434, 1e-05
    %v2437 = vrsqrt.pop %v2435
    %v2438 = vrsqrt.pop %v2436
    %v2439 = vmul.f32 %v2414, %v2437
    %v2440 = vmul.f32 %v2415, %v2438
    %2442 = vset.pattern.permute.xlu0 0
    %2443 = vperm.xlu0 %2442, %v2439
    %v2444 = vpop.permute.xlu0 %2443
    %2447 = vset.pattern.permute.xlu0 0
    %2448 = vperm.xlu0 %2447, %v2440
    %v2449 = vpop.permute.xlu0 %2448
    %v2451 = vmul.f32 %v2425, %v2444
    %v2452 = vmul.f32 %v2426, %v2449
    %2454 = vset.pattern.permute.xlu0 0
    %2455 = vperm.xlu0 %2454, %v2416
    %v2456 = vpop.permute.xlu0 %2455
    %2459 = vset.pattern.permute.xlu0 0
    %2460 = vperm.xlu0 %2459, %v2417
    %v2461 = vpop.permute.xlu0 %2460
    %v2463 = vadd.f32 %v2451, %v2456
    %v2464 = vadd.f32 %v2452, %v2461
    %vm2465 = vcmp.gt.f32.partialorder %v2463, 0.0
    %vm2466 = vcmp.gt.f32.partialorder %v2464, 0.0
    %v2467 = vmul.f32 %v2463, 0.01
    %v2468 = vmul.f32 %v2464, 0.01
    %v2469 = vsel %vm2465, %v2463, %v2467
    %v2470 = vsel %vm2466, %v2464, %v2468
    %v2471 = vld [vmem:[%s15] sm:$0xff]
    %v2472 = vld [vmem:[%s15 + $0x8] sm:$0xff]
    %2473 = vrot.lane.b32.xlu0 %v2469, 1
    %v2474 = vpop.permute.xlu0 %2473
    %2475 = vrot.lane.b32.xlu0 %v2470, 1
    %v2476 = vpop.permute.xlu0 %2475
    %v2477 = vsel %vm2290, %v2474, 0.0
    %v2478 = vsel %vm2290, %v2476, 0.0
    %2480 = vset.pattern.permute.xlu0 0
    %2481 = vperm.xlu0 %2480, %v2471
    %v2482 = vpop.permute.xlu0 %2481
    %2485 = vset.pattern.permute.xlu0 0
    %2486 = vperm.xlu0 %2485, %v2472
    %v2487 = vpop.permute.xlu0 %2486
    %v2489 = vmul.f32 %v2482, %v2477
    %v2490 = vmul.f32 %v2487, %v2478
    %v2491 = vsel %vm2303, %v2469, 0.0
    %v2492 = vsel %vm2303, %v2470, 0.0
    %2493 = vset.pattern.permute.xlu0 1
    %2494 = vperm.xlu0 %2493, %v2471
    %v2495 = vpop.permute.xlu0 %2494
    %2497 = vset.pattern.permute.xlu0 1
    %2498 = vperm.xlu0 %2497, %v2472
    %v2499 = vpop.permute.xlu0 %2498
    %v2501 = vmul.f32 %v2495, %v2491
    %v2502 = vmul.f32 %v2499, %v2492
    %v2503 = vadd.f32 %v2489, %v2501
    %v2504 = vadd.f32 %v2490, %v2502
    %2505 = vrot.lane.b32.xlu0 %v2469, 127
    %v2506 = vpop.permute.xlu0 %2505
    %2507 = vrot.lane.b32.xlu0 %v2470, 127
    %v2508 = vpop.permute.xlu0 %2507
    %v2509 = vsel %vm2325, %v2506, 0.0
    %v2510 = vsel %vm2325, %v2508, 0.0
    %2511 = vset.pattern.permute.xlu0 2
    %2512 = vperm.xlu0 %2511, %v2471
    %v2513 = vpop.permute.xlu0 %2512
    %2515 = vset.pattern.permute.xlu0 2
    %2516 = vperm.xlu0 %2515, %v2472
    %v2517 = vpop.permute.xlu0 %2516
    %v2519 = vmul.f32 %v2513, %v2509
    %v2520 = vmul.f32 %v2517, %v2510
    %v2521 = vadd.f32 %v2503, %v2519
    %v2522 = vadd.f32 %v2504, %v2520
    %v2523 = vadd.f32 %v2521, %v2522
    %v2524 = vrot.slane %v2523, 4
    %v2525 = vadd.f32 %v2523, %v2524
    %v2526 = vrot.slane %v2525, 2
    %v2527 = vadd.f32 %v2525, %v2526
    %v2528 = vrot.slane %v2527, 1
    %v2529 = vadd.f32 %v2527, %v2528
    %v2530 = vld [vmem:[#allocation2] sm:$0x1]
    %v2531 = vld [vmem:[#allocation3] sm:$0x1]
    %2532 = vadd.xlane.f32.xlu0 %v2529
    %v2533 = vpop.xlane.xlu0 %2532
    %v2534 = vmul.f32 %v2533, %v2422
    %v2535 = vsub.f32 %v2529, %v2534
    %v2536 = vmul.f32 %v2535, %v2535
    %2537 = vadd.xlane.f32.xlu0 %v2536
    %v2538 = vpop.xlane.xlu0 %2537
    %v2539 = vmul.f32 %v2538, %v2422
    %v2540 = vadd.f32 %v2539, 1e-05
    %v2541 = vrsqrt.pop %v2540
    %v2542 = vmul.f32 %v2530, %v2541
    %2544 = vset.pattern.permute.xlu0 0
    %2545 = vperm.xlu0 %2544, %v2542
    %v2546 = vpop.permute.xlu0 %2545
    %v2548 = vlaneseq
    %v2549 = vshrl.u32 %v2548, 7
    %v2550 = vsub.s32 0, %v2549
    %v2551 = vrot.slane %v2546, %v2550
    %v2552 = vmul.f32 %v2535, %v2551
    %2554 = vset.pattern.permute.xlu0 0
    %2555 = vperm.xlu0 %2554, %v2531
    %v2556 = vpop.permute.xlu0 %2555
    %v2558 = vlaneseq
    %v2559 = vshrl.u32 %v2558, 7
    %v2560 = vsub.s32 0, %v2559
    %v2561 = vrot.slane %v2556, %v2560
    %v2562 = vadd.f32 %v2552, %v2561
    %vm2563 = vcmp.gt.f32.partialorder %v2562, 0.0
    %v2564 = vmul.f32 %v2562, 0.01
    %v2565 = vsel %vm2563, %v2562, %v2564
    %2566 = vst [vmem:[#allocation9] sm:$0x1] %v2565
    // Predicated region
    $region82: #{tpu_custom_call.1} parent=1 // pred_check
      _
    $region83: #{tpu_custom_call.1} parent=1 // pred_check_branch
      %2568 = sbr.rel (0) target = $region85
    $region84: #{tpu_custom_call.1} parent=1 // pred_region
      %s2570 = ssub.s32 16, 16
      %2571 = vsyncadd [#allocation6], %s2570
      %s2573 = sshll.u32 [#allocation9], 4
      %s2574 = int_to_ptr.vmem [resolvable:$true] %s2573
      %2576 = dma.vmem_to_hbm [thread:$0]  %s2574, 16, %s18, [#allocation6]
    $region85: #{tpu_custom_call.1} parent=1 // pred_fallthru
      _
    // Predicated region
    $region86: #{tpu_custom_call.1} parent=1 // pred_check
      _
    $region87: #{tpu_custom_call.1} parent=1 // pred_check_branch
      %2578 = sbr.rel (0) target = $region89
    $region88: #{tpu_custom_call.1} parent=1 // pred_region
      %2579 = dma.done [#allocation6], 16
    $region89: #{tpu_custom_call.1} parent=1 // pred_fallthru
      _
    %2580 = vsyncpa [#allocation5], 1
    %2581 = vsyncpa [#allocation8], 1
    %2582 = vsyncpa [#allocation6], 1

</llo_original>
